<compile_context>
chip_gen: v5e
topology: v5e:2x2
jax: 0.10.0
libtpu: 0.0.40
codegen_flags: <defaults>
</compile_context>

<pallas_src>
import jax
import jax.numpy as jnp
from jax import lax
from jax.experimental import pallas as pl
from jax.experimental.pallas import tpu as pltpu

BN_EPS = 1e-5
TM = 1024         # point-row tile per grid step (clamped for small N)
INST_BLOCK = 8    # instances per dynamic-filter grid step (16 on v6e/v7x 256-wide MXU)


def _round_up(x, m):
    return ((x + m - 1) // m) * m


def _block_diag(blocks):
    rows = sum(b.shape[0] for b in blocks)
    cols = sum(b.shape[1] for b in blocks)
    out = jnp.zeros((rows, cols), jnp.float32)
    r = c = 0
    for b in blocks:
        out = out.at[r:r + b.shape[0], c:c + b.shape[1]].set(b)
        r += b.shape[0]
        c += b.shape[1]
    return out


# ----------------------------------------------------------------------------
# Generic fused point-wise MLP:  h = relu(h @ W' + b') chained, optional final
# sigmoid.  BN/bias pre-folded.  bf16 MXU inputs, f32 accumulation & stores.
# Used for the aggregation and weight-generator branches.
# ----------------------------------------------------------------------------
def fused_mlp(x, layers, *, final_sigmoid=False, tm=TM, pad_out_to=None):
    x = x.astype(jnp.float32)
    n, cin = x.shape
    tm_eff = tm if n >= tm else max(8, _round_up(n, 8))
    n_pad = _round_up(n, tm_eff)
    x_p = jnp.pad(x, ((0, n_pad - n), (0, 0)))

    cout = layers[-1][0].shape[1]
    out_w = max(cout, pad_out_to) if pad_out_to else cout   # lane-dense output
    flat, relus = [], []
    for li, (w, b, r) in enumerate(layers):
        if li == len(layers) - 1 and out_w != cout:
            w = jnp.pad(w, ((0, 0), (0, out_w - cout)))
            b = jnp.pad(b, ((0, out_w - cout),))
        flat += [w.astype(jnp.bfloat16), b.reshape(1, -1)]
        relus.append(bool(r))
    relus = tuple(relus)
    num_layers = len(layers)

    def kernel(*refs):
        x_ref, o_ref = refs[0], refs[-1]
        h = x_ref[...]
        for li in range(num_layers):
            w = refs[1 + 2 * li][...]
            b = refs[2 + 2 * li][...]
            h = jnp.dot(h.astype(jnp.bfloat16), w,
                        preferred_element_type=jnp.float32) + b
            if relus[li]:
                h = jnp.maximum(h, 0.0)
        if final_sigmoid:
            h = jax.nn.sigmoid(h)
        o_ref[...] = h

    in_specs = [pl.BlockSpec((tm_eff, cin), lambda i: (i, 0))]
    in_specs += [pl.BlockSpec(a.shape, lambda i: (0, 0)) for a in flat]

    out = pl.pallas_call(
        kernel,
        out_shape=jax.ShapeDtypeStruct((n_pad, out_w), jnp.float32),
        grid=(n_pad // tm_eff,),
        in_specs=in_specs,
        out_specs=pl.BlockSpec((tm_eff, out_w), lambda i: (i, 0)),
        compiler_params=pltpu.CompilerParams(dimension_semantics=("parallel",)),
    )(x_p, *flat)
    return out[:n, :cout]


# ----------------------------------------------------------------------------
# Fused semantic / offset / kernel / mask / heatmap branches over f_3d:
#   layer 1 : stacked (dim -> 5*dim) matmul  [sem | off | kern | mask | heat_x]
#   layers 2/3 : depth-stacked block-diagonal (160 -> 160) matmuls, uniform
#                ReLU; identity blocks carry early-terminating branches (safe:
#                slot values are already post-ReLU non-negative)
#   final   : stacked block layer mapping the 5 slots straight to packed output
#             lanes [sem 20 | off 3 | kern 16 | mask 16 | heat 1 | 0-pad] ->
#             one lane-dense 128-wide slab, no in-kernel concat of outputs.
# The heatmap branch's (dim+3) input is split into an f_3d part (stacked into
# layer 1) and an offset part added after the offset head output is produced.
# ----------------------------------------------------------------------------
def fused_point_branches(x_pad, sem, off, kern, mask, heat, *, tm):
    n_pad, dim = x_pad.shape
    SLOT = dim
    bf16 = jnp.bfloat16

    eye = jnp.eye(dim, dtype=jnp.float32)
    zb = jnp.zeros((dim,), jnp.float32)

    heat_w1 = heat[0][0]                       # (dim+3, dim)
    heat_w1x, heat_w1o = heat_w1[:dim], heat_w1[dim:]

    # depth 1 (all ReLU)
    w1 = jnp.concatenate([sem[0][0], off[0][0], kern[0][0], mask[0][0], heat_w1x], axis=1)
    b1 = jnp.concatenate([sem[0][1], off[0][1], kern[0][1], mask[0][1], heat[0][1]]).reshape(1, -1)

    # offset head final layer (also feeds the heatmap position term)
    w_off2 = off[1][0]
    b_off2 = off[1][1].reshape(1, -1)

    # depth 2 / depth 3 block-diagonal intermediates (uniform ReLU)
    w2 = _block_diag([sem[1][0], eye, kern[1][0], mask[1][0], heat[1][0]])
    b2 = jnp.concatenate([sem[1][1], zb, kern[1][1], mask[1][1], heat[1][1]]).reshape(1, -1)
    w3 = _block_diag([eye, eye, kern[2][0], mask[2][0], eye])
    b3 = jnp.concatenate([zb, zb, kern[2][1], mask[2][1], zb]).reshape(1, -1)

    # final (no-ReLU) stacked layer -> packed output lanes
    w_fin = _block_diag([sem[2][0], off[1][0], kern[3][0], mask[3][0], heat[2][0]])
    b_fin = jnp.concatenate([sem[2][1], off[1][1], kern[3][1], mask[3][1], heat[2][1]]).reshape(1, -1)
    widths = (sem[2][0].shape[1], off[1][0].shape[1], kern[3][0].shape[1],
              mask[3][0].shape[1], heat[2][0].shape[1])
    total = sum(widths)
    out_w = _round_up(total, 128)              # lane-dense output (unmasked vst)
    w_fin = jnp.pad(w_fin, ((0, 0), (0, out_w - total)))
    b_fin = jnp.pad(b_fin, ((0, 0), (0, out_w - total)))

    # bf16 at the MXU inputs; biases stay f32.
    w1b, w2b, w3b, wfb = (a.astype(bf16) for a in (w1, w2, w3, w_fin))
    w_off2b = w_off2.astype(bf16)
    w_h1ob = heat_w1o.astype(bf16)

    consts = [w1b, b1, w_off2b, b_off2, w_h1ob, w2b, b2, w3b, b3, wfb, b_fin]

    def kernel(x_ref, w1_ref, b1_ref, woff2_ref, boff2_ref, who_ref,
               w2_ref, b2_ref, w3_ref, b3_ref, wf_ref, bfin_ref, o_ref):
        x = x_ref[...].astype(bf16)
        h1p = jnp.dot(x, w1_ref[...], preferred_element_type=jnp.float32) + b1_ref[...]
        # offset head (shared with the heatmap positional input)
        off_h = jnp.maximum(h1p[:, SLOT:2 * SLOT], 0.0)
        off_out = jnp.dot(off_h.astype(bf16), woff2_ref[...],
                          preferred_element_type=jnp.float32) + boff2_ref[...]
        heat_add = jnp.dot(off_out.astype(bf16), who_ref[...],
                           preferred_element_type=jnp.float32)
        h_main = jnp.maximum(h1p[:, :4 * SLOT], 0.0)
        h_heat = jnp.maximum(h1p[:, 4 * SLOT:] + heat_add, 0.0)
        h = jnp.concatenate([h_main, h_heat], axis=1)                     # (tm, 160)
        h = jnp.maximum(jnp.dot(h.astype(bf16), w2_ref[...],
                                preferred_element_type=jnp.float32) + b2_ref[...], 0.0)
        h = jnp.maximum(jnp.dot(h.astype(bf16), w3_ref[...],
                                preferred_element_type=jnp.float32) + b3_ref[...], 0.0)
        o_ref[...] = jnp.dot(h.astype(bf16), wf_ref[...],
                             preferred_element_type=jnp.float32) + bfin_ref[...]

    in_specs = [pl.BlockSpec((tm, dim), lambda i: (i, 0))]
    in_specs += [pl.BlockSpec(a.shape, lambda i: (0, 0)) for a in consts]

    slab = pl.pallas_call(
        kernel,
        out_shape=jax.ShapeDtypeStruct((n_pad, out_w), jnp.float32),
        grid=(n_pad // tm,),
        in_specs=in_specs,
        out_specs=pl.BlockSpec((tm, out_w), lambda i: (i, 0)),
        compiler_params=pltpu.CompilerParams(dimension_semantics=("parallel",)),
    )(x_pad, *consts)
    return slab, widths


# ----------------------------------------------------------------------------
# DynamicFilterLayer (conv_shape=[16,1]): per instance k and point p,
#   feat = [f_masks_p, xyz_p - center_k]   (19)
#   h    = relu(feat @ W1_k + b1_k)         (16)
#   out  = sigmoid(h . w2_k + b2_k)         (1)
# Rewritten as feat = [f_masks, xyz] (instance-independent) with the center
# folded into b1_k, INST_BLOCK instances batched per grid step.  Per-instance
# weights are grid-resident (constant index_map) and sliced in-kernel; the
# point block stays VMEM-resident across all instance groups (outer point axis).
# ----------------------------------------------------------------------------
def dynamic_filter_pallas(fmxz_pad, n_valid, centers, w1_full, b1, w2, b2,
                          *, tm=TM, kb=INST_BLOCK):
    n_pad, c_in = fmxz_pad.shape          # c_in = 19
    k = centers.shape[0]
    k_pad = _round_up(k, kb)
    h_dim = w1_full.shape[2]              # 16
    bw = kb * h_dim                       # 128 lanes per instance group (kb=8)

    # Fold the per-instance center into the first-layer bias.
    w1b = w1_full[:, c_in - 3:, :]                                    # (K, 3, 16)
    b1_eff = b1 - jnp.einsum('kc,kcd->kd', centers, w1b)              # (K, 16)

    w1p = jnp.pad(w1_full, ((0, k_pad - k), (0, 0), (0, 0)))
    b1p = jnp.pad(b1_eff, ((0, k_pad - k), (0, 0)))
    w2p = jnp.pad(w2, ((0, k_pad - k), (0, 0)))
    b2p = jnp.pad(b2, ((0, k_pad - k), (0, 0)))

    w1s = jnp.transpose(w1p, (1, 0, 2)).reshape(c_in, k_pad * h_dim).astype(jnp.bfloat16)
    b1s = b1p.reshape(1, k_pad * h_dim)
    # Block-diagonal selector: row k holds w2_k at lanes (k % kb)*h_dim .. +h_dim.
    sel = jnp.eye(kb, dtype=jnp.float32)[jnp.arange(k_pad) % kb]       # (K_pad, kb)
    w2s = (sel[:, :, None] * w2p[:, None, :]).reshape(k_pad, bw)       # (K_pad, bw) f32
    b2s = b2p                                                          # (K_pad, 1)

    n_groups = k_pad // kb

    def kernel(f_ref, w1_ref, b1_ref, w2_ref, b2_ref, o_ref):
        g = pl.program_id(1)
        col = pl.multiple_of(g * bw, bw)
        row = pl.multiple_of(g * kb, kb)
        w1g = w1_ref[:, pl.ds(col, bw)]                 # (19, bw)  bf16
        b1g = b1_ref[:, pl.ds(col, bw)]                 # (1, bw)   f32
        w2g = w2_ref[pl.ds(row, kb), :].astype(jnp.bfloat16)   # (kb, bw)
        b2g = b2_ref[pl.ds(row, kb), :]                 # (kb, 1)

        f = f_ref[...].astype(jnp.bfloat16)
        h = jnp.dot(f, w1g, preferred_element_type=jnp.float32) + b1g
        h = jnp.maximum(h, 0.0)                                        # (tm, bw)
        out = lax.dot_general(w2g, h.astype(jnp.bfloat16),
                              (((1,), (1,)), ((), ())),
                              preferred_element_type=jnp.float32)       # (kb, tm)
        out = out + b2g
        # TODO(synk): final activation of DynamicFilterLayer assumed sigmoid
        # (CondInst-style dynamic mask head); original DKNet source not shown.
        o_ref[...] = jax.nn.sigmoid(out)

    out = pl.pallas_call(
        kernel,
        out_shape=jax.ShapeDtypeStruct((k_pad, n_pad), jnp.float32),
        grid=(n_pad // tm, n_groups),     # point tiles OUTER, instance groups INNER
        in_specs=[
            pl.BlockSpec((tm, c_in), lambda i, g: (i, 0)),     # resident across g
            pl.BlockSpec(w1s.shape, lambda i, g: (0, 0)),      # grid-resident weights
            pl.BlockSpec(b1s.shape, lambda i, g: (0, 0)),
            pl.BlockSpec(w2s.shape, lambda i, g: (0, 0)),
            pl.BlockSpec(b2s.shape, lambda i, g: (0, 0)),
        ],
        out_specs=pl.BlockSpec((kb, tm), lambda i, g: (g, i)),
        compiler_params=pltpu.CompilerParams(
            dimension_semantics=("parallel", "arbitrary")),
    )(fmxz_pad, w1s, b1s, w2s, b2s)
    return out[:k, :n_valid]


# ----------------------------------------------------------------------------
# Deterministic parameter construction (shapes from DKNet.__init__), BN folded
# into (W, b).  Eval mode with set_bn_init (gamma=1, beta=0) and default
# running stats (mean=0, var=1) -> scale = 1/sqrt(1+eps), shift = 0.
# ----------------------------------------------------------------------------
def make_layer(key, cin, cout, bias, bn, relu):
    k1, k2 = jax.random.split(key)
    w = jax.random.normal(k1, (cin, cout), jnp.float32) / (cin ** 0.5)
    b = (jax.random.normal(k2, (cout,), jnp.float32) * 0.01
         if bias else jnp.zeros((cout,), jnp.float32))
    if bn:
        s = 1.0 / ((1.0 + BN_EPS) ** 0.5)
        w = w * s
        b = b * s
    return (w, b, bool(relu))


def make_branch(key, spec):
    keys = jax.random.split(key, len(spec))
    return [make_layer(k, *s) for k, s in zip(keys, spec)]


def batch_softmax(score, batch_idx, valid_mask, batch_size):
    """utils.batch_softmax: softmax of score over valid (object) points, per batch."""
    out = jnp.zeros_like(score)
    for b in range(batch_size):
        m = (batch_idx == b) & valid_mask
        s = jnp.where(m, score, -1e30)     # large-negative (not -inf) avoids NaN
        e = jax.nn.softmax(s)
        out = jnp.where(m, e, out)
    return out


if __name__ == "__main__":
    # ------------------------- small deterministic inputs -------------------
    N, dim, output_dim, num_classes, batch_size = 384, 32, 16, 20, 2
    invalid_classes = 2
    key = jax.random.PRNGKey(0)
    k_xyz, k_rgb, k_f3d, k_par = jax.random.split(key, 4)

    xyz = jax.random.normal(k_xyz, (N, 3), jnp.float32)
    rgb = jax.random.normal(k_rgb, (N, 3), jnp.float32)
    batch_idx = jnp.concatenate(
        [jnp.zeros((N // 2,), jnp.int32), jnp.ones((N - N // 2,), jnp.int32)])

    # TODO(synk): dknet_ops.voxelization + spconv.SubMConv3d + UBlock + bnrelu
    # (sparse 3D conv backbone over cat(rgb, xyz)) have no Pallas equivalent;
    # f_3d stands in for the per-point backbone features.
    f_3d = jax.random.normal(k_f3d, (N, dim), jnp.float32)

    # ------------------------------- parameters -----------------------------
    ks = jax.random.split(k_par, 7)
    sem_layers = make_branch(ks[0], [(dim, dim, True, True, True),
                                     (dim, dim, True, True, True),
                                     (dim, num_classes, True, False, False)])
    off_layers = make_branch(ks[1], [(dim, dim, True, True, True),
                                     (dim, 3, True, False, False)])
    heat_layers = make_branch(ks[2], [(dim + 3, dim, True, True, True),
                                      (dim, dim, True, True, True),
                                      (dim, 1, True, False, False)])
    kern_layers = make_branch(ks[3], [(dim, dim, False, True, True)] * 3 +
                                     [(dim, output_dim, True, False, False)])
    mask_layers = make_branch(ks[4], [(dim, dim, False, True, True)] * 3 +
                                     [(dim, output_dim, True, False, False)])
    agg_c = 2 * output_dim + 3
    agg_layers = make_branch(ks[5], [(agg_c, agg_c, False, True, True)] * 3 +
                                    [(agg_c, 1, True, False, False)])
    kernel_dim = (output_dim + 3) * 16 + 16 + 16 * 1 + 1   # 337
    wgen_layers = make_branch(ks[6], [(output_dim, output_dim, False, True, True),
                                      (output_dim, kernel_dim, True, False, False)])

    # ---------- pad point arrays once and reuse for every point kernel ------
    tm_pts = min(TM, _round_up(N, 8))      # at production N this stays 1024 (>=2 steps)
    n_pad = _round_up(N, tm_pts)
    f3d_pad = jnp.pad(f_3d, ((0, n_pad - N), (0, 0)))
    xyz_pad = jnp.pad(xyz, ((0, n_pad - N), (0, 0)))

    # -------- fused semantic / offset / kernel / mask / heatmap branches ----
    slab, widths = fused_point_branches(f3d_pad, sem_layers, off_layers,
                                        kern_layers, mask_layers, heat_layers,
                                        tm=tm_pts)
    c_sem, c_off, c_kern, c_mask, c_heat = widths          # (20, 3, 16, 16, 1)
    o0 = 0
    sem_output = slab[:N, o0:o0 + c_sem]; o0 += c_sem                  # (N, 20)
    point_offset = slab[:N, o0:o0 + c_off]; o0 += c_off                # (N, 3)
    f_kernel_all = slab[:N, o0:o0 + c_kern]; o0 += c_kern              # (N, 16)
    f_masks_pad = slab[:, o0:o0 + c_mask]; o0 += c_mask                # (n_pad, 16)
    heat_score = slab[:N, o0]                                          # (N,)

    sem_pred = jnp.argmax(sem_output, axis=1)
    obj_mask = sem_pred >= invalid_classes                             # on-device

    candidate_score = batch_softmax(heat_score, batch_idx, obj_mask, batch_size)

    # TODO(synk): utils.topk_nms (custom CUDA candidate NMS) — stand-in picks
    # the top-3 scoring object points per batch, fully on-device (no host sync).
    TOPK = 3
    cand = []
    for b in range(batch_size):
        s = jnp.where((batch_idx == b) & obj_mask, candidate_score, -1.0)
        _, idx = lax.top_k(s, TOPK)
        cand.append(idx)
    candidate_points = jnp.concatenate(cand).astype(jnp.int32)         # (K,)
    candidate_batch = batch_idx[candidate_points]
    K = batch_size * TOPK

    # TODO(synk): utils.neighbor_pooling foreground/background aggregation
    # (depends on NMS neighborhoods) — stand-in uses the candidate's own feature.
    f_foreground = f_kernel_all[candidate_points]
    f_background = f_kernel_all[candidate_points]

    f_candidate = jnp.concatenate(
        [f_foreground, f_background, (xyz + point_offset)[candidate_points]], axis=1)
    d_candidate = jnp.maximum(
        jnp.abs(f_candidate[:, None, :] - f_candidate[None, :, :]), 1e-6)   # (K,K,35)
    merge_score = fused_mlp(d_candidate.reshape(K * K, agg_c), agg_layers,
                            final_sigmoid=True, pad_out_to=128).reshape(K, K, 1)
    batch_mask = candidate_batch[:, None] - candidate_batch[None, :]
    merge_score = jnp.where(batch_mask[..., None] != 0,
                            jnp.zeros_like(merge_score), merge_score)

    # TODO(synk): greedy while-loop candidate merging (data-dependent sequential
    # clustering) and utils.weighted_mean over merged groups — no merges applied.
    candidate_points_ = candidate_points
    f_kernel = f_foreground

    # Weight generator: pad 337 -> 384 output lanes inside the kernel (sliced off).
    weights = fused_mlp(f_kernel, wgen_layers, pad_out_to=384)          # (K, 337)

    # Split dynamic-filter weights (CondInst-style: weight stored (out, in)).
    o1 = (output_dim + 3) * 16
    w1 = weights[:, :o1].reshape(K, 16, output_dim + 3)
    w1 = jnp.transpose(w1, (0, 2, 1))                                   # (K, 19, 16)
    b1 = weights[:, o1:o1 + 16]                                         # (K, 16)
    w2 = weights[:, o1 + 16:o1 + 32]                                    # (K, 16)
    b2 = weights[:, o1 + 32:o1 + 33]                                    # (K, 1)

    candidate_centers = xyz[candidate_points_]                          # (K, 3)
    fmxz_pad = jnp.concatenate([f_masks_pad, xyz_pad], axis=1)          # (n_pad, 19)
    mask_output = dynamic_filter_pallas(fmxz_pad, N, candidate_centers,
                                        w1, b1, w2, b2, tm=tm_pts)      # (K, N)

    # TODO(synk): dknet_ops.otsu thresholding, instance assignment and
    # utils.get_semantic_output (custom ops) are not reimplemented.

    outs = (sem_output, point_offset, candidate_score, merge_score,
            f_kernel, weights, mask_output)
    jax.block_until_ready(outs)
    assert sem_output.shape == (N, num_classes)
    assert point_offset.shape == (N, 3)
    assert candidate_score.shape == (N,)
    assert merge_score.shape == (K, K, 1)
    assert weights.shape == (K, kernel_dim)
    assert mask_output.shape == (K, N)
    print("KERNEL_OK")
</pallas_src>

<mosaic_0001>
module attributes {stable_mosaic.version = 11 : i64} {
  func.func @kernel(%arg0: i32, %arg1: memref<384x32xf32, #tpu.memory_space<vmem>>, %arg2: memref<32x160xbf16, #tpu.memory_space<vmem>>, %arg3: memref<1x160xf32, #tpu.memory_space<vmem>>, %arg4: memref<32x3xbf16, #tpu.memory_space<vmem>>, %arg5: memref<1x3xf32, #tpu.memory_space<vmem>>, %arg6: memref<3x32xbf16, #tpu.memory_space<vmem>>, %arg7: memref<160x160xbf16, #tpu.memory_space<vmem>>, %arg8: memref<1x160xf32, #tpu.memory_space<vmem>>, %arg9: memref<160x160xbf16, #tpu.memory_space<vmem>>, %arg10: memref<1x160xf32, #tpu.memory_space<vmem>>, %arg11: memref<160x128xbf16, #tpu.memory_space<vmem>>, %arg12: memref<1x128xf32, #tpu.memory_space<vmem>>, %arg13: memref<384x128xf32, #tpu.memory_space<vmem>>) attributes {dimension_semantics = [#tpu.dimension_semantics<parallel>], iteration_bounds = array<i64: 1>, scalar_prefetch = 0 : i64, scratch_operands = 0 : i64, tpu.core_type = #tpu.core_type<tc>, window_params = [{transform_indices = @transform_0, window_bounds = array<i64: 384, 32>}, {pipeline_mode = #tpu.pipeline_mode<synchronous>, transform_indices = @transform_1, window_bounds = array<i64: 32, 160>}, {pipeline_mode = #tpu.pipeline_mode<synchronous>, transform_indices = @transform_2, window_bounds = array<i64: 1, 160>}, {pipeline_mode = #tpu.pipeline_mode<synchronous>, transform_indices = @transform_3, window_bounds = array<i64: 32, 3>}, {pipeline_mode = #tpu.pipeline_mode<synchronous>, transform_indices = @transform_4, window_bounds = array<i64: 1, 3>}, {pipeline_mode = #tpu.pipeline_mode<synchronous>, transform_indices = @transform_5, window_bounds = array<i64: 3, 32>}, {pipeline_mode = #tpu.pipeline_mode<synchronous>, transform_indices = @transform_6, window_bounds = array<i64: 160, 160>}, {pipeline_mode = #tpu.pipeline_mode<synchronous>, transform_indices = @transform_7, window_bounds = array<i64: 1, 160>}, {pipeline_mode = #tpu.pipeline_mode<synchronous>, transform_indices = @transform_8, window_bounds = array<i64: 160, 160>}, {pipeline_mode = #tpu.pipeline_mode<synchronous>, transform_indices = @transform_9, window_bounds = array<i64: 1, 160>}, {pipeline_mode = #tpu.pipeline_mode<synchronous>, transform_indices = @transform_10, window_bounds = array<i64: 160, 128>}, {pipeline_mode = #tpu.pipeline_mode<synchronous>, transform_indices = @transform_11, window_bounds = array<i64: 1, 128>}, {transform_indices = @transform_12, window_bounds = array<i64: 384, 128>}]} {
    %c0 = arith.constant 0 : index
    %c0_0 = arith.constant 0 : index
    %0 = vector.load %arg1[%c0, %c0_0] : memref<384x32xf32, #tpu.memory_space<vmem>>, vector<384x32xf32>
    %1 = arith.truncf %0 : vector<384x32xf32> to vector<384x32xbf16>
    %c0_1 = arith.constant 0 : index
    %c0_2 = arith.constant 0 : index
    %2 = vector.load %arg2[%c0_1, %c0_2] : memref<32x160xbf16, #tpu.memory_space<vmem>>, vector<32x160xbf16>
    %cst = arith.constant dense<0.000000e+00> : vector<384x160xf32>
    %3 = tpu.matmul %1, %2, %cst {dimension_numbers = #tpu.dot_dimension_numbers<[1], [0], [0], [1], [0, 0, 1, 1], [], []>} : vector<384x32xbf16>, vector<32x160xbf16>, vector<384x160xf32> -> vector<384x160xf32>
    %c0_3 = arith.constant 0 : index
    %c0_4 = arith.constant 0 : index
    %4 = vector.load %arg3[%c0_3, %c0_4] : memref<1x160xf32, #tpu.memory_space<vmem>>, vector<1x160xf32>
    %5 = vector.broadcast %4 : vector<1x160xf32> to vector<384x160xf32>
    %6 = arith.addf %3, %5 : vector<384x160xf32>
    %7 = vector.extract_strided_slice %6 {offsets = [0, 32], sizes = [384, 32], strides = [1, 1]} : vector<384x160xf32> to vector<384x32xf32>
    %cst_5 = arith.constant 0.000000e+00 : f32
    %8 = vector.broadcast %cst_5 : f32 to vector<384x32xf32>
    %9 = arith.maximumf %7, %8 : vector<384x32xf32>
    %10 = arith.truncf %9 : vector<384x32xf32> to vector<384x32xbf16>
    %c0_6 = arith.constant 0 : index
    %c0_7 = arith.constant 0 : index
    %11 = vector.load %arg4[%c0_6, %c0_7] : memref<32x3xbf16, #tpu.memory_space<vmem>>, vector<32x3xbf16>
    %cst_8 = arith.constant dense<0.000000e+00> : vector<384x3xf32>
    %12 = tpu.matmul %10, %11, %cst_8 {dimension_numbers = #tpu.dot_dimension_numbers<[1], [0], [0], [1], [0, 0, 1, 1], [], []>} : vector<384x32xbf16>, vector<32x3xbf16>, vector<384x3xf32> -> vector<384x3xf32>
    %c0_9 = arith.constant 0 : index
    %c0_10 = arith.constant 0 : index
    %13 = vector.load %arg5[%c0_9, %c0_10] : memref<1x3xf32, #tpu.memory_space<vmem>>, vector<1x3xf32>
    %14 = vector.broadcast %13 : vector<1x3xf32> to vector<384x3xf32>
    %15 = arith.addf %12, %14 : vector<384x3xf32>
    %16 = arith.truncf %15 : vector<384x3xf32> to vector<384x3xbf16>
    %c0_11 = arith.constant 0 : index
    %c0_12 = arith.constant 0 : index
    %17 = vector.load %arg6[%c0_11, %c0_12] : memref<3x32xbf16, #tpu.memory_space<vmem>>, vector<3x32xbf16>
    %cst_13 = arith.constant dense<0.000000e+00> : vector<384x32xf32>
    %18 = tpu.matmul %16, %17, %cst_13 {dimension_numbers = #tpu.dot_dimension_numbers<[1], [0], [0], [1], [0, 0, 1, 1], [], []>} : vector<384x3xbf16>, vector<3x32xbf16>, vector<384x32xf32> -> vector<384x32xf32>
    %19 = vector.extract_strided_slice %6 {offsets = [0, 0], sizes = [384, 128], strides = [1, 1]} : vector<384x160xf32> to vector<384x128xf32>
    %cst_14 = arith.constant 0.000000e+00 : f32
    %20 = vector.broadcast %cst_14 : f32 to vector<384x128xf32>
    %21 = arith.maximumf %19, %20 : vector<384x128xf32>
    %22 = vector.extract_strided_slice %6 {offsets = [0, 128], sizes = [384, 32], strides = [1, 1]} : vector<384x160xf32> to vector<384x32xf32>
    %23 = arith.addf %22, %18 : vector<384x32xf32>
    %cst_15 = arith.constant 0.000000e+00 : f32
    %24 = vector.broadcast %cst_15 : f32 to vector<384x32xf32>
    %25 = arith.maximumf %23, %24 : vector<384x32xf32>
    %26 = tpu.concatenate %21, %25 in 1 : vector<384x128xf32>, vector<384x32xf32> -> vector<384x160xf32>
    %27 = arith.truncf %26 : vector<384x160xf32> to vector<384x160xbf16>
    %c0_16 = arith.constant 0 : index
    %c0_17 = arith.constant 0 : index
    %28 = vector.load %arg7[%c0_16, %c0_17] : memref<160x160xbf16, #tpu.memory_space<vmem>>, vector<160x160xbf16>
    %cst_18 = arith.constant dense<0.000000e+00> : vector<384x160xf32>
    %29 = tpu.matmul %27, %28, %cst_18 {dimension_numbers = #tpu.dot_dimension_numbers<[1], [0], [0], [1], [0, 0, 1, 1], [], []>} : vector<384x160xbf16>, vector<160x160xbf16>, vector<384x160xf32> -> vector<384x160xf32>
    %c0_19 = arith.constant 0 : index
    %c0_20 = arith.constant 0 : index
    %30 = vector.load %arg8[%c0_19, %c0_20] : memref<1x160xf32, #tpu.memory_space<vmem>>, vector<1x160xf32>
    %31 = vector.broadcast %30 : vector<1x160xf32> to vector<384x160xf32>
    %32 = arith.addf %29, %31 : vector<384x160xf32>
    %cst_21 = arith.constant 0.000000e+00 : f32
    %33 = vector.broadcast %cst_21 : f32 to vector<384x160xf32>
    %34 = arith.maximumf %32, %33 : vector<384x160xf32>
    %35 = arith.truncf %34 : vector<384x160xf32> to vector<384x160xbf16>
    %c0_22 = arith.constant 0 : index
    %c0_23 = arith.constant 0 : index
    %36 = vector.load %arg9[%c0_22, %c0_23] : memref<160x160xbf16, #tpu.memory_space<vmem>>, vector<160x160xbf16>
    %cst_24 = arith.constant dense<0.000000e+00> : vector<384x160xf32>
    %37 = tpu.matmul %35, %36, %cst_24 {dimension_numbers = #tpu.dot_dimension_numbers<[1], [0], [0], [1], [0, 0, 1, 1], [], []>} : vector<384x160xbf16>, vector<160x160xbf16>, vector<384x160xf32> -> vector<384x160xf32>
    %c0_25 = arith.constant 0 : index
    %c0_26 = arith.constant 0 : index
    %38 = vector.load %arg10[%c0_25, %c0_26] : memref<1x160xf32, #tpu.memory_space<vmem>>, vector<1x160xf32>
    %39 = vector.broadcast %38 : vector<1x160xf32> to vector<384x160xf32>
    %40 = arith.addf %37, %39 : vector<384x160xf32>
    %cst_27 = arith.constant 0.000000e+00 : f32
    %41 = vector.broadcast %cst_27 : f32 to vector<384x160xf32>
    %42 = arith.maximumf %40, %41 : vector<384x160xf32>
    %43 = arith.truncf %42 : vector<384x160xf32> to vector<384x160xbf16>
    %c0_28 = arith.constant 0 : index
    %c0_29 = arith.constant 0 : index
    %44 = vector.load %arg11[%c0_28, %c0_29] : memref<160x128xbf16, #tpu.memory_space<vmem>>, vector<160x128xbf16>
    %cst_30 = arith.constant dense<0.000000e+00> : vector<384x128xf32>
    %45 = tpu.matmul %43, %44, %cst_30 {dimension_numbers = #tpu.dot_dimension_numbers<[1], [0], [0], [1], [0, 0, 1, 1], [], []>} : vector<384x160xbf16>, vector<160x128xbf16>, vector<384x128xf32> -> vector<384x128xf32>
    %c0_31 = arith.constant 0 : index
    %c0_32 = arith.constant 0 : index
    %46 = vector.load %arg12[%c0_31, %c0_32] : memref<1x128xf32, #tpu.memory_space<vmem>>, vector<1x128xf32>
    %47 = vector.broadcast %46 : vector<1x128xf32> to vector<384x128xf32>
    %48 = arith.addf %45, %47 : vector<384x128xf32>
    %c0_33 = arith.constant 0 : index
    %c0_34 = arith.constant 0 : index
    %49 = vector.load %arg13[%c0_33, %c0_34] : memref<384x128xf32, #tpu.memory_space<vmem>>, vector<384x128xf32>
    tpu.vector_store %arg13[%c0_33, %c0_34], %48 {strides = array<i32>} : memref<384x128xf32, #tpu.memory_space<vmem>>, vector<384x128xf32>,
    return
  }
  func.func @transform_0(%arg0: i32) -> (i32, i32) {
    %c0_i32 = arith.constant 0 : i32
    %c0_i32_0 = arith.constant 0 : i32
    return %arg0, %c0_i32 : i32, i32
  }
  func.func @transform_1(%arg0: i32) -> (i32, i32) {
    %c0_i32 = arith.constant 0 : i32
    %c0_i32_0 = arith.constant 0 : i32
    %c0_i32_1 = arith.constant 0 : i32
    return %c0_i32, %c0_i32_0 : i32, i32
  }
  func.func @transform_2(%arg0: i32) -> (i32, i32) {
    %c0_i32 = arith.constant 0 : i32
    %c0_i32_0 = arith.constant 0 : i32
    %c0_i32_1 = arith.constant 0 : i32
    return %c0_i32, %c0_i32_0 : i32, i32
  }
  func.func @transform_3(%arg0: i32) -> (i32, i32) {
    %c0_i32 = arith.constant 0 : i32
    %c0_i32_0 = arith.constant 0 : i32
    %c0_i32_1 = arith.constant 0 : i32
    return %c0_i32, %c0_i32_0 : i32, i32
  }
  func.func @transform_4(%arg0: i32) -> (i32, i32) {
    %c0_i32 = arith.constant 0 : i32
    %c0_i32_0 = arith.constant 0 : i32
    %c0_i32_1 = arith.constant 0 : i32
    return %c0_i32, %c0_i32_0 : i32, i32
  }
  func.func @transform_5(%arg0: i32) -> (i32, i32) {
    %c0_i32 = arith.constant 0 : i32
    %c0_i32_0 = arith.constant 0 : i32
    %c0_i32_1 = arith.constant 0 : i32
    return %c0_i32, %c0_i32_0 : i32, i32
  }
  func.func @transform_6(%arg0: i32) -> (i32, i32) {
    %c0_i32 = arith.constant 0 : i32
    %c0_i32_0 = arith.constant 0 : i32
    %c0_i32_1 = arith.constant 0 : i32
    return %c0_i32, %c0_i32_0 : i32, i32
  }
  func.func @transform_7(%arg0: i32) -> (i32, i32) {
    %c0_i32 = arith.constant 0 : i32
    %c0_i32_0 = arith.constant 0 : i32
    %c0_i32_1 = arith.constant 0 : i32
    return %c0_i32, %c0_i32_0 : i32, i32
  }
  func.func @transform_8(%arg0: i32) -> (i32, i32) {
    %c0_i32 = arith.constant 0 : i32
    %c0_i32_0 = arith.constant 0 : i32
    %c0_i32_1 = arith.constant 0 : i32
    return %c0_i32, %c0_i32_0 : i32, i32
  }
  func.func @transform_9(%arg0: i32) -> (i32, i32) {
    %c0_i32 = arith.constant 0 : i32
    %c0_i32_0 = arith.constant 0 : i32
    %c0_i32_1 = arith.constant 0 : i32
    return %c0_i32, %c0_i32_0 : i32, i32
  }
  func.func @transform_10(%arg0: i32) -> (i32, i32) {
    %c0_i32 = arith.constant 0 : i32
    %c0_i32_0 = arith.constant 0 : i32
    %c0_i32_1 = arith.constant 0 : i32
    return %c0_i32, %c0_i32_0 : i32, i32
  }
  func.func @transform_11(%arg0: i32) -> (i32, i32) {
    %c0_i32 = arith.constant 0 : i32
    %c0_i32_0 = arith.constant 0 : i32
    %c0_i32_1 = arith.constant 0 : i32
    return %c0_i32, %c0_i32_0 : i32, i32
  }
  func.func @transform_12(%arg0: i32) -> (i32, i32) {
    %c0_i32 = arith.constant 0 : i32
    %c0_i32_0 = arith.constant 0 : i32
    return %arg0, %c0_i32 : i32, i32
  }
}

</mosaic_0001>

<llo_original>
// kernel: tpu_custom_call.1
$region0: #{tpu_custom_call.1}
  #allocation0 [shape = 'u32[]', space=smem, size = 0x4, offset = 0x4, fixed_abs, tag = 'smem constant byte address 0x4 - core index']
  #allocation1 [shape = 'u32[72,128]{1,0:T(1,128)}', space=vmem, size = 0x9000, scoped, tag = 'internal scratch']
  %s0 = inlined_call_operand.vmem [shape: f32[384,32], index: 0, kind: input, shape index: {}]
  %s1 = inlined_call_operand.vmem [shape: bf16[32,160], index: 1, kind: input, shape index: {}]
  %s2 = inlined_call_operand.vmem [shape: f32[1,160], index: 2, kind: input, shape index: {}]
  %s3 = inlined_call_operand.vmem [shape: bf16[32,3], index: 3, kind: input, shape index: {}]
  %s4 = inlined_call_operand.vmem [shape: f32[1,3], index: 4, kind: input, shape index: {}]
  %s5 = inlined_call_operand.vmem [shape: bf16[3,32], index: 5, kind: input, shape index: {}]
  %s6 = inlined_call_operand.vmem [shape: bf16[160,160], index: 6, kind: input, shape index: {}]
  %s7 = inlined_call_operand.vmem [shape: f32[1,160], index: 7, kind: input, shape index: {}]
  %s8 = inlined_call_operand.vmem [shape: bf16[160,160], index: 8, kind: input, shape index: {}]
  %s9 = inlined_call_operand.vmem [shape: f32[1,160], index: 9, kind: input, shape index: {}]
  %s10 = inlined_call_operand.vmem [shape: bf16[160,128], index: 10, kind: input, shape index: {}]
  %s11 = inlined_call_operand.vmem [shape: f32[1,128], index: 11, kind: input, shape index: {}]
  %s12 = inlined_call_operand.hbm [shape: f32[384,128], index: 12, kind: output, shape index: {}]
  %s13 = sld [smem:[#allocation0]]
  $region58: #{tpu_custom_call.1} parent=0
    _
  %s15 = ssub.s32 1, %s13
  %s16 = scalar_select 0, %s15, %s13
  $region1: #{tpu_custom_call.1} parent=0
    #allocation2 [shape = 'u8[196608]{0}', space=vmem, size = 0x30000, scoped, tag = 'output window, operand 0, single buffered']
    #allocation3 [shape = 's32[1]{0}', space=sflag, size = 0x4, scoped, tag = 'scoped memory for tpu_custom_call.1']
    %17 = vsyncpa [#allocation3], 0
    // Predicated region
    $region2: #{tpu_custom_call.1} parent=1 // pred_check
      _
    $region3: #{tpu_custom_call.1} parent=1 // pred_check_branch
      %19 = sbr.rel (0) target = $region5
    $region4: #{tpu_custom_call.1} parent=1 // pred_region
      _
    $region5: #{tpu_custom_call.1} parent=1 // pred_fallthru
      _
    // Predicated region
    $region6: #{tpu_custom_call.1} parent=1 // pred_check
      _
    $region7: #{tpu_custom_call.1} parent=1 // pred_check_branch
      %21 = sbr.rel (0) target = $region9
    $region8: #{tpu_custom_call.1} parent=1 // pred_region
      _
    $region9: #{tpu_custom_call.1} parent=1 // pred_fallthru
      _
    // Predicated region
    $region10: #{tpu_custom_call.1} parent=1 // pred_check
      _
    $region11: #{tpu_custom_call.1} parent=1 // pred_check_branch
      %23 = sbr.rel (0) target = $region13
    $region12: #{tpu_custom_call.1} parent=1 // pred_region
      _
    $region13: #{tpu_custom_call.1} parent=1 // pred_fallthru
      _
    // Predicated region
    $region14: #{tpu_custom_call.1} parent=1 // pred_check
      _
    $region15: #{tpu_custom_call.1} parent=1 // pred_check_branch
      %25 = sbr.rel (0) target = $region17
    $region16: #{tpu_custom_call.1} parent=1 // pred_region
      _
    $region17: #{tpu_custom_call.1} parent=1 // pred_fallthru
      _
    // Predicated region
    $region18: #{tpu_custom_call.1} parent=1 // pred_check
      _
    $region19: #{tpu_custom_call.1} parent=1 // pred_check_branch
      %27 = sbr.rel (0) target = $region21
    $region20: #{tpu_custom_call.1} parent=1 // pred_region
      _
    $region21: #{tpu_custom_call.1} parent=1 // pred_fallthru
      _
    // Predicated region
    $region22: #{tpu_custom_call.1} parent=1 // pred_check
      _
    $region23: #{tpu_custom_call.1} parent=1 // pred_check_branch
      %29 = sbr.rel (0) target = $region25
    $region24: #{tpu_custom_call.1} parent=1 // pred_region
      _
    $region25: #{tpu_custom_call.1} parent=1 // pred_fallthru
      _
    // Predicated region
    $region26: #{tpu_custom_call.1} parent=1 // pred_check
      _
    $region27: #{tpu_custom_call.1} parent=1 // pred_check_branch
      %31 = sbr.rel (0) target = $region29
    $region28: #{tpu_custom_call.1} parent=1 // pred_region
      _
    $region29: #{tpu_custom_call.1} parent=1 // pred_fallthru
      _
    // Predicated region
    $region30: #{tpu_custom_call.1} parent=1 // pred_check
      _
    $region31: #{tpu_custom_call.1} parent=1 // pred_check_branch
      %33 = sbr.rel (0) target = $region33
    $region32: #{tpu_custom_call.1} parent=1 // pred_region
      _
    $region33: #{tpu_custom_call.1} parent=1 // pred_fallthru
      _
    // Predicated region
    $region34: #{tpu_custom_call.1} parent=1 // pred_check
      _
    $region35: #{tpu_custom_call.1} parent=1 // pred_check_branch
      %35 = sbr.rel (0) target = $region37
    $region36: #{tpu_custom_call.1} parent=1 // pred_region
      _
    $region37: #{tpu_custom_call.1} parent=1 // pred_fallthru
      _
    // Predicated region
    $region38: #{tpu_custom_call.1} parent=1 // pred_check
      _
    $region39: #{tpu_custom_call.1} parent=1 // pred_check_branch
      %37 = sbr.rel (0) target = $region41
    $region40: #{tpu_custom_call.1} parent=1 // pred_region
      _
    $region41: #{tpu_custom_call.1} parent=1 // pred_fallthru
      _
    // Predicated region
    $region42: #{tpu_custom_call.1} parent=1 // pred_check
      _
    $region43: #{tpu_custom_call.1} parent=1 // pred_check_branch
      %39 = sbr.rel (0) target = $region45
    $region44: #{tpu_custom_call.1} parent=1 // pred_region
      _
    $region45: #{tpu_custom_call.1} parent=1 // pred_fallthru
      _
    // Predicated region
    $region46: #{tpu_custom_call.1} parent=1 // pred_check
      _
    $region47: #{tpu_custom_call.1} parent=1 // pred_check_branch
      %41 = sbr.rel (0) target = $region49
    $region48: #{tpu_custom_call.1} parent=1 // pred_region
      _
    $region49: #{tpu_custom_call.1} parent=1 // pred_fallthru
      _
    %v43 = vld [vmem:[%s0] sm:$0xff]
    %v44 = vld [vmem:[%s0 + $0x8] sm:$0xff]
    %v45 = vld [vmem:[%s0 + $0x10] sm:$0xff]
    %v46 = vld [vmem:[%s0 + $0x18] sm:$0xff]
    %v47 = vld [vmem:[%s0 + $0x20] sm:$0xff]
    %v48 = vld [vmem:[%s0 + $0x28] sm:$0xff]
    %v49 = vld [vmem:[%s0 + $0x30] sm:$0xff]
    %v50 = vld [vmem:[%s0 + $0x38] sm:$0xff]
    %v51 = vld [vmem:[%s0 + $0x40] sm:$0xff]
    %v52 = vld [vmem:[%s0 + $0x48] sm:$0xff]
    %v53 = vld [vmem:[%s0 + $0x50] sm:$0xff]
    %v54 = vld [vmem:[%s0 + $0x58] sm:$0xff]
    %v55 = vld [vmem:[%s0 + $0x60] sm:$0xff]
    %v56 = vld [vmem:[%s0 + $0x68] sm:$0xff]
    %v57 = vld [vmem:[%s0 + $0x70] sm:$0xff]
    %v58 = vld [vmem:[%s0 + $0x78] sm:$0xff]
    %v59 = vld [vmem:[%s0 + $0x80] sm:$0xff]
    %v60 = vld [vmem:[%s0 + $0x88] sm:$0xff]
    %v61 = vld [vmem:[%s0 + $0x90] sm:$0xff]
    %v62 = vld [vmem:[%s0 + $0x98] sm:$0xff]
    %v63 = vld [vmem:[%s0 + $0xa0] sm:$0xff]
    %v64 = vld [vmem:[%s0 + $0xa8] sm:$0xff]
    %v65 = vld [vmem:[%s0 + $0xb0] sm:$0xff]
    %v66 = vld [vmem:[%s0 + $0xb8] sm:$0xff]
    %v67 = vld [vmem:[%s0 + $0xc0] sm:$0xff]
    %v68 = vld [vmem:[%s0 + $0xc8] sm:$0xff]
    %v69 = vld [vmem:[%s0 + $0xd0] sm:$0xff]
    %v70 = vld [vmem:[%s0 + $0xd8] sm:$0xff]
    %v71 = vld [vmem:[%s0 + $0xe0] sm:$0xff]
    %v72 = vld [vmem:[%s0 + $0xe8] sm:$0xff]
    %v73 = vld [vmem:[%s0 + $0xf0] sm:$0xff]
    %v74 = vld [vmem:[%s0 + $0xf8] sm:$0xff]
    %v75 = vld [vmem:[%s0 + $0x100] sm:$0xff]
    %v76 = vld [vmem:[%s0 + $0x108] sm:$0xff]
    %v77 = vld [vmem:[%s0 + $0x110] sm:$0xff]
    %v78 = vld [vmem:[%s0 + $0x118] sm:$0xff]
    %v79 = vld [vmem:[%s0 + $0x120] sm:$0xff]
    %v80 = vld [vmem:[%s0 + $0x128] sm:$0xff]
    %v81 = vld [vmem:[%s0 + $0x130] sm:$0xff]
    %v82 = vld [vmem:[%s0 + $0x138] sm:$0xff]
    %v83 = vld [vmem:[%s0 + $0x140] sm:$0xff]
    %v84 = vld [vmem:[%s0 + $0x148] sm:$0xff]
    %v85 = vld [vmem:[%s0 + $0x150] sm:$0xff]
    %v86 = vld [vmem:[%s0 + $0x158] sm:$0xff]
    %v87 = vld [vmem:[%s0 + $0x160] sm:$0xff]
    %v88 = vld [vmem:[%s0 + $0x168] sm:$0xff]
    %v89 = vld [vmem:[%s0 + $0x170] sm:$0xff]
    %v90 = vld [vmem:[%s0 + $0x178] sm:$0xff]
    %v91 = vpack.c.bf16 %v44, %v43
    %v92 = vpack.c.bf16 %v46, %v45
    %v93 = vpack.c.bf16 %v48, %v47
    %v94 = vpack.c.bf16 %v50, %v49
    %v95 = vpack.c.bf16 %v52, %v51
    %v96 = vpack.c.bf16 %v54, %v53
    %v97 = vpack.c.bf16 %v56, %v55
    %v98 = vpack.c.bf16 %v58, %v57
    %v99 = vpack.c.bf16 %v60, %v59
    %v100 = vpack.c.bf16 %v62, %v61
    %v101 = vpack.c.bf16 %v64, %v63
    %v102 = vpack.c.bf16 %v66, %v65
    %v103 = vpack.c.bf16 %v68, %v67
    %v104 = vpack.c.bf16 %v70, %v69
    %v105 = vpack.c.bf16 %v72, %v71
    %v106 = vpack.c.bf16 %v74, %v73
    %v107 = vpack.c.bf16 %v76, %v75
    %v108 = vpack.c.bf16 %v78, %v77
    %v109 = vpack.c.bf16 %v80, %v79
    %v110 = vpack.c.bf16 %v82, %v81
    %v111 = vpack.c.bf16 %v84, %v83
    %v112 = vpack.c.bf16 %v86, %v85
    %v113 = vpack.c.bf16 %v88, %v87
    %v114 = vpack.c.bf16 %v90, %v89
    %v115 = vld [vmem:[%s1] sm:$0xff]
    %v116 = vld [vmem:[%s1 + $0x8] sm:$0xff]
    %v117 = vld [vmem:[%s1 + $0x10] sm:$0xff]
    %v118 = vld [vmem:[%s1 + $0x18] sm:$0xff]
    %v119 = vld [vmem:[%s2] sm:$0x3]
    %v121 = vperm.slane %v119, 0
    %v122 = vperm.slane %v119, 1
    %v129 = vunpack.c.l.b16 %v115
    %v130 = vunpack.c.h.b16 %v115
    %v131 = vunpack.c.l.b16 %v116
    %v132 = vunpack.c.h.b16 %v116
    %v133 = vunpack.c.l.b16 %v117
    %v134 = vunpack.c.h.b16 %v117
    %v135 = vunpack.c.l.b16 %v118
    %v136 = vunpack.c.h.b16 %v118
    %v137 = vpack.c.b16 %v131, %v129
    %v138 = vpack.c.b16 %v132, %v130
    %v139 = vpack.c.b16 %v135, %v133
    %v140 = vpack.c.b16 %v136, %v134
    %vm145 = vcmask 261120
    %v147 = vsel %vm145, %v91, 0
    %v150 = vsel %vm145, %v92, 0
    %v153 = vsel %vm145, %v93, 0
    %v156 = vsel %vm145, %v94, 0
    %v159 = vsel %vm145, %v95, 0
    %v162 = vsel %vm145, %v96, 0
    %v165 = vsel %vm145, %v97, 0
    %v168 = vsel %vm145, %v98, 0
    %v171 = vsel %vm145, %v99, 0
    %v174 = vsel %vm145, %v100, 0
    %v177 = vsel %vm145, %v101, 0
    %v180 = vsel %vm145, %v102, 0
    %v183 = vsel %vm145, %v103, 0
    %v186 = vsel %vm145, %v104, 0
    %v189 = vsel %vm145, %v105, 0
    %v192 = vsel %vm145, %v106, 0
    %v195 = vsel %vm145, %v107, 0
    %v198 = vsel %vm145, %v108, 0
    %v201 = vsel %vm145, %v109, 0
    %v204 = vsel %vm145, %v110, 0
    %v207 = vsel %vm145, %v111, 0
    %v210 = vsel %vm145, %v112, 0
    %v213 = vsel %vm145, %v113, 0
    %v216 = vsel %vm145, %v114, 0
    %218 = vmatpush.bf16.msra.mxu0 0
    %219 = vmatpush.bf16.msra.mxu0 0
    %220 = vmatpush.bf16.msra.mxu0 0
    %221 = vmatpush.bf16.msra.mxu0 0
    %222 = vmatpush.bf16.msra.mxu0 0
    %223 = vmatpush.bf16.msra.mxu0 0
    %224 = vmatpush.bf16.msra.mxu0 %v139
    %225 = vmatpush.bf16.msra.mxu0 %v137
    %226 = vmatmul.bf16.gmra.mxu0 %v147
    %v227 = vpop.f32.mrf.mxu0
    %v228 = vadd.f32 %v121, %v227
    %v229 = vpop.f32.mrf.mxu0
    %v230 = vadd.f32 %v121, %v229
    %231 = vmatmul.bf16.gmra.mxu0 %v150
    %v232 = vpop.f32.mrf.mxu0
    %v233 = vadd.f32 %v121, %v232
    %v234 = vpop.f32.mrf.mxu0
    %v235 = vadd.f32 %v121, %v234
    %236 = vmatmul.bf16.gmra.mxu0 %v153
    %v237 = vpop.f32.mrf.mxu0
    %v238 = vadd.f32 %v121, %v237
    %v239 = vpop.f32.mrf.mxu0
    %v240 = vadd.f32 %v121, %v239
    %241 = vmatmul.bf16.gmra.mxu0 %v156
    %v242 = vpop.f32.mrf.mxu0
    %v243 = vadd.f32 %v121, %v242
    %v244 = vpop.f32.mrf.mxu0
    %v245 = vadd.f32 %v121, %v244
    %246 = vmatmul.bf16.gmra.mxu0 %v159
    %v247 = vpop.f32.mrf.mxu0
    %v248 = vadd.f32 %v121, %v247
    %v249 = vpop.f32.mrf.mxu0
    %v250 = vadd.f32 %v121, %v249
    %251 = vmatmul.bf16.gmra.mxu0 %v162
    %v252 = vpop.f32.mrf.mxu0
    %v253 = vadd.f32 %v121, %v252
    %v254 = vpop.f32.mrf.mxu0
    %v255 = vadd.f32 %v121, %v254
    %256 = vmatmul.bf16.gmra.mxu0 %v165
    %v257 = vpop.f32.mrf.mxu0
    %v258 = vadd.f32 %v121, %v257
    %v259 = vpop.f32.mrf.mxu0
    %v260 = vadd.f32 %v121, %v259
    %261 = vmatmul.bf16.gmra.mxu0 %v168
    %v262 = vpop.f32.mrf.mxu0
    %v263 = vadd.f32 %v121, %v262
    %v264 = vpop.f32.mrf.mxu0
    %v265 = vadd.f32 %v121, %v264
    %266 = vmatmul.bf16.gmra.mxu0 %v171
    %v267 = vpop.f32.mrf.mxu0
    %v268 = vadd.f32 %v121, %v267
    %v269 = vpop.f32.mrf.mxu0
    %v270 = vadd.f32 %v121, %v269
    %271 = vmatmul.bf16.gmra.mxu0 %v174
    %v272 = vpop.f32.mrf.mxu0
    %v273 = vadd.f32 %v121, %v272
    %v274 = vpop.f32.mrf.mxu0
    %v275 = vadd.f32 %v121, %v274
    %276 = vmatmul.bf16.gmra.mxu0 %v177
    %v277 = vpop.f32.mrf.mxu0
    %v278 = vadd.f32 %v121, %v277
    %v279 = vpop.f32.mrf.mxu0
    %v280 = vadd.f32 %v121, %v279
    %281 = vmatmul.bf16.gmra.mxu0 %v180
    %v282 = vpop.f32.mrf.mxu0
    %v283 = vadd.f32 %v121, %v282
    %v284 = vpop.f32.mrf.mxu0
    %v285 = vadd.f32 %v121, %v284
    %286 = vmatmul.bf16.gmra.mxu0 %v183
    %v287 = vpop.f32.mrf.mxu0
    %v288 = vadd.f32 %v121, %v287
    %v289 = vpop.f32.mrf.mxu0
    %v290 = vadd.f32 %v121, %v289
    %291 = vmatmul.bf16.gmra.mxu0 %v186
    %v292 = vpop.f32.mrf.mxu0
    %v293 = vadd.f32 %v121, %v292
    %v294 = vpop.f32.mrf.mxu0
    %v295 = vadd.f32 %v121, %v294
    %296 = vmatmul.bf16.gmra.mxu0 %v189
    %v297 = vpop.f32.mrf.mxu0
    %v298 = vadd.f32 %v121, %v297
    %v299 = vpop.f32.mrf.mxu0
    %v300 = vadd.f32 %v121, %v299
    %301 = vmatmul.bf16.gmra.mxu0 %v192
    %v302 = vpop.f32.mrf.mxu0
    %v303 = vadd.f32 %v121, %v302
    %v304 = vpop.f32.mrf.mxu0
    %v305 = vadd.f32 %v121, %v304
    %306 = vmatmul.bf16.gmra.mxu0 %v195
    %v307 = vpop.f32.mrf.mxu0
    %v308 = vadd.f32 %v121, %v307
    %v309 = vpop.f32.mrf.mxu0
    %v310 = vadd.f32 %v121, %v309
    %311 = vmatmul.bf16.gmra.mxu0 %v198
    %v312 = vpop.f32.mrf.mxu0
    %v313 = vadd.f32 %v121, %v312
    %v314 = vpop.f32.mrf.mxu0
    %v315 = vadd.f32 %v121, %v314
    %316 = vmatmul.bf16.gmra.mxu0 %v201
    %v317 = vpop.f32.mrf.mxu0
    %v318 = vadd.f32 %v121, %v317
    %v319 = vpop.f32.mrf.mxu0
    %v320 = vadd.f32 %v121, %v319
    %321 = vmatmul.bf16.gmra.mxu0 %v204
    %v322 = vpop.f32.mrf.mxu0
    %v323 = vadd.f32 %v121, %v322
    %v324 = vpop.f32.mrf.mxu0
    %v325 = vadd.f32 %v121, %v324
    %326 = vmatmul.bf16.gmra.mxu0 %v207
    %v327 = vpop.f32.mrf.mxu0
    %v328 = vadd.f32 %v121, %v327
    %v329 = vpop.f32.mrf.mxu0
    %v330 = vadd.f32 %v121, %v329
    %331 = vmatmul.bf16.gmra.mxu0 %v210
    %v332 = vpop.f32.mrf.mxu0
    %v333 = vadd.f32 %v121, %v332
    %v334 = vpop.f32.mrf.mxu0
    %v335 = vadd.f32 %v121, %v334
    %336 = vmatmul.bf16.gmra.mxu0 %v213
    %v337 = vpop.f32.mrf.mxu0
    %v338 = vadd.f32 %v121, %v337
    %v339 = vpop.f32.mrf.mxu0
    %v340 = vadd.f32 %v121, %v339
    %341 = vmatmul.bf16.gmra.mxu0 %v216
    %v342 = vpop.f32.mrf.mxu0
    %v343 = vadd.f32 %v121, %v342
    %v344 = vpop.f32.mrf.mxu0
    %v345 = vadd.f32 %v121, %v344
    %346 = vdwg.mxu0
    %347 = vmatpush.bf16.msra.mxu0 0
    %348 = vmatpush.bf16.msra.mxu0 0
    %349 = vmatpush.bf16.msra.mxu0 0
    %350 = vmatpush.bf16.msra.mxu0 0
    %351 = vmatpush.bf16.msra.mxu0 0
    %352 = vmatpush.bf16.msra.mxu0 0
    %353 = vmatpush.bf16.msra.mxu0 %v140
    %354 = vmatpush.bf16.msra.mxu0 %v138
    %355 = vmatmul.bf16.gmra.mxu0 %v147
    %v356 = vpop.f32.mrf.mxu0
    %v357 = vadd.f32 %v122, %v356
    %v358 = vpop.f32.mrf.mxu0
    %v359 = vadd.f32 %v122, %v358
    %360 = vmatmul.bf16.gmra.mxu0 %v150
    %v361 = vpop.f32.mrf.mxu0
    %v362 = vadd.f32 %v122, %v361
    %v363 = vpop.f32.mrf.mxu0
    %v364 = vadd.f32 %v122, %v363
    %365 = vmatmul.bf16.gmra.mxu0 %v153
    %v366 = vpop.f32.mrf.mxu0
    %v367 = vadd.f32 %v122, %v366
    %v368 = vpop.f32.mrf.mxu0
    %v369 = vadd.f32 %v122, %v368
    %370 = vmatmul.bf16.gmra.mxu0 %v156
    %v371 = vpop.f32.mrf.mxu0
    %v372 = vadd.f32 %v122, %v371
    %v373 = vpop.f32.mrf.mxu0
    %v374 = vadd.f32 %v122, %v373
    %375 = vmatmul.bf16.gmra.mxu0 %v159
    %v376 = vpop.f32.mrf.mxu0
    %v377 = vadd.f32 %v122, %v376
    %v378 = vpop.f32.mrf.mxu0
    %v379 = vadd.f32 %v122, %v378
    %380 = vmatmul.bf16.gmra.mxu0 %v162
    %v381 = vpop.f32.mrf.mxu0
    %v382 = vadd.f32 %v122, %v381
    %v383 = vpop.f32.mrf.mxu0
    %v384 = vadd.f32 %v122, %v383
    %385 = vmatmul.bf16.gmra.mxu0 %v165
    %v386 = vpop.f32.mrf.mxu0
    %v387 = vadd.f32 %v122, %v386
    %v388 = vpop.f32.mrf.mxu0
    %v389 = vadd.f32 %v122, %v388
    %390 = vmatmul.bf16.gmra.mxu0 %v168
    %v391 = vpop.f32.mrf.mxu0
    %v392 = vadd.f32 %v122, %v391
    %v393 = vpop.f32.mrf.mxu0
    %v394 = vadd.f32 %v122, %v393
    %395 = vmatmul.bf16.gmra.mxu0 %v171
    %v396 = vpop.f32.mrf.mxu0
    %v397 = vadd.f32 %v122, %v396
    %v398 = vpop.f32.mrf.mxu0
    %v399 = vadd.f32 %v122, %v398
    %400 = vmatmul.bf16.gmra.mxu0 %v174
    %v401 = vpop.f32.mrf.mxu0
    %v402 = vadd.f32 %v122, %v401
    %v403 = vpop.f32.mrf.mxu0
    %v404 = vadd.f32 %v122, %v403
    %405 = vmatmul.bf16.gmra.mxu0 %v177
    %v406 = vpop.f32.mrf.mxu0
    %v407 = vadd.f32 %v122, %v406
    %v408 = vpop.f32.mrf.mxu0
    %v409 = vadd.f32 %v122, %v408
    %410 = vmatmul.bf16.gmra.mxu0 %v180
    %v411 = vpop.f32.mrf.mxu0
    %v412 = vadd.f32 %v122, %v411
    %v413 = vpop.f32.mrf.mxu0
    %v414 = vadd.f32 %v122, %v413
    %415 = vmatmul.bf16.gmra.mxu0 %v183
    %v416 = vpop.f32.mrf.mxu0
    %v417 = vadd.f32 %v122, %v416
    %v418 = vpop.f32.mrf.mxu0
    %v419 = vadd.f32 %v122, %v418
    %420 = vmatmul.bf16.gmra.mxu0 %v186
    %v421 = vpop.f32.mrf.mxu0
    %v422 = vadd.f32 %v122, %v421
    %v423 = vpop.f32.mrf.mxu0
    %v424 = vadd.f32 %v122, %v423
    %425 = vmatmul.bf16.gmra.mxu0 %v189
    %v426 = vpop.f32.mrf.mxu0
    %v427 = vadd.f32 %v122, %v426
    %v428 = vpop.f32.mrf.mxu0
    %v429 = vadd.f32 %v122, %v428
    %430 = vmatmul.bf16.gmra.mxu0 %v192
    %v431 = vpop.f32.mrf.mxu0
    %v432 = vadd.f32 %v122, %v431
    %v433 = vpop.f32.mrf.mxu0
    %v434 = vadd.f32 %v122, %v433
    %435 = vmatmul.bf16.gmra.mxu0 %v195
    %v436 = vpop.f32.mrf.mxu0
    %v437 = vadd.f32 %v122, %v436
    %v438 = vpop.f32.mrf.mxu0
    %v439 = vadd.f32 %v122, %v438
    %440 = vmatmul.bf16.gmra.mxu0 %v198
    %v441 = vpop.f32.mrf.mxu0
    %v442 = vadd.f32 %v122, %v441
    %v443 = vpop.f32.mrf.mxu0
    %v444 = vadd.f32 %v122, %v443
    %445 = vmatmul.bf16.gmra.mxu0 %v201
    %v446 = vpop.f32.mrf.mxu0
    %v447 = vadd.f32 %v122, %v446
    %v448 = vpop.f32.mrf.mxu0
    %v449 = vadd.f32 %v122, %v448
    %450 = vmatmul.bf16.gmra.mxu0 %v204
    %v451 = vpop.f32.mrf.mxu0
    %v452 = vadd.f32 %v122, %v451
    %v453 = vpop.f32.mrf.mxu0
    %v454 = vadd.f32 %v122, %v453
    %455 = vmatmul.bf16.gmra.mxu0 %v207
    %v456 = vpop.f32.mrf.mxu0
    %v457 = vadd.f32 %v122, %v456
    %v458 = vpop.f32.mrf.mxu0
    %v459 = vadd.f32 %v122, %v458
    %460 = vmatmul.bf16.gmra.mxu0 %v210
    %v461 = vpop.f32.mrf.mxu0
    %v462 = vadd.f32 %v122, %v461
    %v463 = vpop.f32.mrf.mxu0
    %v464 = vadd.f32 %v122, %v463
    %465 = vmatmul.bf16.gmra.mxu0 %v213
    %v466 = vpop.f32.mrf.mxu0
    %v467 = vadd.f32 %v122, %v466
    %v468 = vpop.f32.mrf.mxu0
    %v469 = vadd.f32 %v122, %v468
    %470 = vmatmul.bf16.gmra.mxu0 %v216
    %v471 = vpop.f32.mrf.mxu0
    %v472 = vadd.f32 %v122, %v471
    %v473 = vpop.f32.mrf.mxu0
    %v474 = vadd.f32 %v122, %v473
    %475 = vdwg.mxu0
    %v476 = vmax.f32 %v228, 0.0
    %v477 = vmax.f32 %v230, 0.0
    %v478 = vmax.f32 %v233, 0.0
    %v479 = vmax.f32 %v235, 0.0
    %v480 = vmax.f32 %v238, 0.0
    %v481 = vmax.f32 %v240, 0.0
    %v482 = vmax.f32 %v243, 0.0
    %v483 = vmax.f32 %v245, 0.0
    %v484 = vmax.f32 %v248, 0.0
    %v485 = vmax.f32 %v250, 0.0
    %v486 = vmax.f32 %v253, 0.0
    %v487 = vmax.f32 %v255, 0.0
    %v488 = vmax.f32 %v258, 0.0
    %v489 = vmax.f32 %v260, 0.0
    %v490 = vmax.f32 %v263, 0.0
    %v491 = vmax.f32 %v265, 0.0
    %v492 = vmax.f32 %v268, 0.0
    %v493 = vmax.f32 %v270, 0.0
    %v494 = vmax.f32 %v273, 0.0
    %v495 = vmax.f32 %v275, 0.0
    %v496 = vmax.f32 %v278, 0.0
    %v497 = vmax.f32 %v280, 0.0
    %v498 = vmax.f32 %v283, 0.0
    %v499 = vmax.f32 %v285, 0.0
    %v500 = vmax.f32 %v288, 0.0
    %v501 = vmax.f32 %v290, 0.0
    %v502 = vmax.f32 %v293, 0.0
    %v503 = vmax.f32 %v295, 0.0
    %v504 = vmax.f32 %v298, 0.0
    %v505 = vmax.f32 %v300, 0.0
    %v506 = vmax.f32 %v303, 0.0
    %v507 = vmax.f32 %v305, 0.0
    %v508 = vmax.f32 %v308, 0.0
    %v509 = vmax.f32 %v310, 0.0
    %v510 = vmax.f32 %v313, 0.0
    %v511 = vmax.f32 %v315, 0.0
    %v512 = vmax.f32 %v318, 0.0
    %v513 = vmax.f32 %v320, 0.0
    %v514 = vmax.f32 %v323, 0.0
    %v515 = vmax.f32 %v325, 0.0
    %v516 = vmax.f32 %v328, 0.0
    %v517 = vmax.f32 %v330, 0.0
    %v518 = vmax.f32 %v333, 0.0
    %v519 = vmax.f32 %v335, 0.0
    %v520 = vmax.f32 %v338, 0.0
    %v521 = vmax.f32 %v340, 0.0
    %v522 = vmax.f32 %v343, 0.0
    %v523 = vmax.f32 %v345, 0.0
    %v524 = vpack.c.bf16 %v477, %v476
    %v525 = vpack.c.bf16 %v479, %v478
    %v526 = vpack.c.bf16 %v481, %v480
    %v527 = vpack.c.bf16 %v483, %v482
    %v528 = vpack.c.bf16 %v485, %v484
    %v529 = vpack.c.bf16 %v487, %v486
    %v530 = vpack.c.bf16 %v489, %v488
    %v531 = vpack.c.bf16 %v491, %v490
    %v532 = vpack.c.bf16 %v493, %v492
    %v533 = vpack.c.bf16 %v495, %v494
    %v534 = vpack.c.bf16 %v497, %v496
    %v535 = vpack.c.bf16 %v499, %v498
    %v536 = vpack.c.bf16 %v501, %v500
    %v537 = vpack.c.bf16 %v503, %v502
    %v538 = vpack.c.bf16 %v505, %v504
    %v539 = vpack.c.bf16 %v507, %v506
    %v540 = vpack.c.bf16 %v509, %v508
    %v541 = vpack.c.bf16 %v511, %v510
    %v542 = vpack.c.bf16 %v513, %v512
    %v543 = vpack.c.bf16 %v515, %v514
    %v544 = vpack.c.bf16 %v517, %v516
    %v545 = vpack.c.bf16 %v519, %v518
    %v546 = vpack.c.bf16 %v521, %v520
    %v547 = vpack.c.bf16 %v523, %v522
    %v548 = vld [vmem:[%s3] sm:$0xf]
    %v549 = vld [vmem:[%s3 + $0x4] sm:$0xf]
    %v550 = vld [vmem:[%s3 + $0x8] sm:$0xf]
    %v551 = vld [vmem:[%s3 + $0xc] sm:$0xf]
    %v552 = vld [vmem:[%s4] sm:$0x1]
    %v554 = vperm.slane %v552, 0
    %580 = vrot.lane.b32.xlu0 %v524, 96
    %v581 = vpop.permute.xlu0 %580
    %582 = vrot.lane.b32.xlu0 %v525, 96
    %v583 = vpop.permute.xlu0 %582
    %584 = vrot.lane.b32.xlu0 %v526, 96
    %v585 = vpop.permute.xlu0 %584
    %586 = vrot.lane.b32.xlu0 %v527, 96
    %v587 = vpop.permute.xlu0 %586
    %588 = vrot.lane.b32.xlu0 %v528, 96
    %v589 = vpop.permute.xlu0 %588
    %590 = vrot.lane.b32.xlu0 %v529, 96
    %v591 = vpop.permute.xlu0 %590
    %592 = vrot.lane.b32.xlu0 %v530, 96
    %v593 = vpop.permute.xlu0 %592
    %594 = vrot.lane.b32.xlu0 %v531, 96
    %v595 = vpop.permute.xlu0 %594
    %596 = vrot.lane.b32.xlu0 %v532, 96
    %v597 = vpop.permute.xlu0 %596
    %598 = vrot.lane.b32.xlu0 %v533, 96
    %v599 = vpop.permute.xlu0 %598
    %600 = vrot.lane.b32.xlu0 %v534, 96
    %v601 = vpop.permute.xlu0 %600
    %602 = vrot.lane.b32.xlu0 %v535, 96
    %v603 = vpop.permute.xlu0 %602
    %604 = vrot.lane.b32.xlu0 %v536, 96
    %v605 = vpop.permute.xlu0 %604
    %606 = vrot.lane.b32.xlu0 %v537, 96
    %v607 = vpop.permute.xlu0 %606
    %608 = vrot.lane.b32.xlu0 %v538, 96
    %v609 = vpop.permute.xlu0 %608
    %610 = vrot.lane.b32.xlu0 %v539, 96
    %v611 = vpop.permute.xlu0 %610
    %612 = vrot.lane.b32.xlu0 %v540, 96
    %v613 = vpop.permute.xlu0 %612
    %614 = vrot.lane.b32.xlu0 %v541, 96
    %v615 = vpop.permute.xlu0 %614
    %616 = vrot.lane.b32.xlu0 %v542, 96
    %v617 = vpop.permute.xlu0 %616
    %618 = vrot.lane.b32.xlu0 %v543, 96
    %v619 = vpop.permute.xlu0 %618
    %620 = vrot.lane.b32.xlu0 %v544, 96
    %v621 = vpop.permute.xlu0 %620
    %622 = vrot.lane.b32.xlu0 %v545, 96
    %v623 = vpop.permute.xlu0 %622
    %624 = vrot.lane.b32.xlu0 %v546, 96
    %v625 = vpop.permute.xlu0 %624
    %626 = vrot.lane.b32.xlu0 %v547, 96
    %v627 = vpop.permute.xlu0 %626
    %v632 = vunpack.c.l.b16 %v548
    %v633 = vunpack.c.l.b16 %v549
    %v634 = vunpack.c.l.b16 %v550
    %v635 = vunpack.c.l.b16 %v551
    %v636 = vpack.c.b16 %v633, %v632
    %v637 = vpack.c.b16 %v635, %v634
    %v641 = vsel %vm145, %v581, 0
    %v644 = vsel %vm145, %v583, 0
    %v647 = vsel %vm145, %v585, 0
    %v650 = vsel %vm145, %v587, 0
    %v653 = vsel %vm145, %v589, 0
    %v656 = vsel %vm145, %v591, 0
    %v659 = vsel %vm145, %v593, 0
    %v662 = vsel %vm145, %v595, 0
    %v665 = vsel %vm145, %v597, 0
    %v668 = vsel %vm145, %v599, 0
    %v671 = vsel %vm145, %v601, 0
    %v674 = vsel %vm145, %v603, 0
    %v677 = vsel %vm145, %v605, 0
    %v680 = vsel %vm145, %v607, 0
    %v683 = vsel %vm145, %v609, 0
    %v686 = vsel %vm145, %v611, 0
    %v689 = vsel %vm145, %v613, 0
    %v692 = vsel %vm145, %v615, 0
    %v695 = vsel %vm145, %v617, 0
    %v698 = vsel %vm145, %v619, 0
    %v701 = vsel %vm145, %v621, 0
    %v704 = vsel %vm145, %v623, 0
    %v707 = vsel %vm145, %v625, 0
    %v710 = vsel %vm145, %v627, 0
    %712 = vmatpush.bf16.msra.mxu0 0
    %713 = vmatpush.bf16.msra.mxu0 0
    %714 = vmatpush.bf16.msra.mxu0 0
    %715 = vmatpush.bf16.msra.mxu0 0
    %716 = vmatpush.bf16.msra.mxu0 0
    %717 = vmatpush.bf16.msra.mxu0 0
    %718 = vmatpush.bf16.msra.mxu0 %v637
    %719 = vmatpush.bf16.msra.mxu0 %v636
    %720 = vmatmul.bf16.gmra.mxu0 %v641
    %v721 = vpop.f32.mrf.mxu0
    %v722 = vadd.f32 %v554, %v721
    %v723 = vpop.f32.mrf.mxu0
    %v724 = vadd.f32 %v554, %v723
    %725 = vmatmul.bf16.gmra.mxu0 %v644
    %v726 = vpop.f32.mrf.mxu0
    %v727 = vadd.f32 %v554, %v726
    %v728 = vpop.f32.mrf.mxu0
    %v729 = vadd.f32 %v554, %v728
    %730 = vmatmul.bf16.gmra.mxu0 %v647
    %v731 = vpop.f32.mrf.mxu0
    %v732 = vadd.f32 %v554, %v731
    %v733 = vpop.f32.mrf.mxu0
    %v734 = vadd.f32 %v554, %v733
    %735 = vmatmul.bf16.gmra.mxu0 %v650
    %v736 = vpop.f32.mrf.mxu0
    %v737 = vadd.f32 %v554, %v736
    %v738 = vpop.f32.mrf.mxu0
    %v739 = vadd.f32 %v554, %v738
    %740 = vmatmul.bf16.gmra.mxu0 %v653
    %v741 = vpop.f32.mrf.mxu0
    %v742 = vadd.f32 %v554, %v741
    %v743 = vpop.f32.mrf.mxu0
    %v744 = vadd.f32 %v554, %v743
    %745 = vmatmul.bf16.gmra.mxu0 %v656
    %v746 = vpop.f32.mrf.mxu0
    %v747 = vadd.f32 %v554, %v746
    %v748 = vpop.f32.mrf.mxu0
    %v749 = vadd.f32 %v554, %v748
    %750 = vmatmul.bf16.gmra.mxu0 %v659
    %v751 = vpop.f32.mrf.mxu0
    %v752 = vadd.f32 %v554, %v751
    %v753 = vpop.f32.mrf.mxu0
    %v754 = vadd.f32 %v554, %v753
    %755 = vmatmul.bf16.gmra.mxu0 %v662
    %v756 = vpop.f32.mrf.mxu0
    %v757 = vadd.f32 %v554, %v756
    %v758 = vpop.f32.mrf.mxu0
    %v759 = vadd.f32 %v554, %v758
    %760 = vmatmul.bf16.gmra.mxu0 %v665
    %v761 = vpop.f32.mrf.mxu0
    %v762 = vadd.f32 %v554, %v761
    %v763 = vpop.f32.mrf.mxu0
    %v764 = vadd.f32 %v554, %v763
    %765 = vmatmul.bf16.gmra.mxu0 %v668
    %v766 = vpop.f32.mrf.mxu0
    %v767 = vadd.f32 %v554, %v766
    %v768 = vpop.f32.mrf.mxu0
    %v769 = vadd.f32 %v554, %v768
    %770 = vmatmul.bf16.gmra.mxu0 %v671
    %v771 = vpop.f32.mrf.mxu0
    %v772 = vadd.f32 %v554, %v771
    %v773 = vpop.f32.mrf.mxu0
    %v774 = vadd.f32 %v554, %v773
    %775 = vmatmul.bf16.gmra.mxu0 %v674
    %v776 = vpop.f32.mrf.mxu0
    %v777 = vadd.f32 %v554, %v776
    %v778 = vpop.f32.mrf.mxu0
    %v779 = vadd.f32 %v554, %v778
    %780 = vmatmul.bf16.gmra.mxu0 %v677
    %v781 = vpop.f32.mrf.mxu0
    %v782 = vadd.f32 %v554, %v781
    %v783 = vpop.f32.mrf.mxu0
    %v784 = vadd.f32 %v554, %v783
    %785 = vmatmul.bf16.gmra.mxu0 %v680
    %v786 = vpop.f32.mrf.mxu0
    %v787 = vadd.f32 %v554, %v786
    %v788 = vpop.f32.mrf.mxu0
    %v789 = vadd.f32 %v554, %v788
    %790 = vmatmul.bf16.gmra.mxu0 %v683
    %v791 = vpop.f32.mrf.mxu0
    %v792 = vadd.f32 %v554, %v791
    %v793 = vpop.f32.mrf.mxu0
    %v794 = vadd.f32 %v554, %v793
    %795 = vmatmul.bf16.gmra.mxu0 %v686
    %v796 = vpop.f32.mrf.mxu0
    %v797 = vadd.f32 %v554, %v796
    %v798 = vpop.f32.mrf.mxu0
    %v799 = vadd.f32 %v554, %v798
    %800 = vmatmul.bf16.gmra.mxu0 %v689
    %v801 = vpop.f32.mrf.mxu0
    %v802 = vadd.f32 %v554, %v801
    %v803 = vpop.f32.mrf.mxu0
    %v804 = vadd.f32 %v554, %v803
    %805 = vmatmul.bf16.gmra.mxu0 %v692
    %v806 = vpop.f32.mrf.mxu0
    %v807 = vadd.f32 %v554, %v806
    %v808 = vpop.f32.mrf.mxu0
    %v809 = vadd.f32 %v554, %v808
    %810 = vmatmul.bf16.gmra.mxu0 %v695
    %v811 = vpop.f32.mrf.mxu0
    %v812 = vadd.f32 %v554, %v811
    %v813 = vpop.f32.mrf.mxu0
    %v814 = vadd.f32 %v554, %v813
    %815 = vmatmul.bf16.gmra.mxu0 %v698
    %v816 = vpop.f32.mrf.mxu0
    %v817 = vadd.f32 %v554, %v816
    %v818 = vpop.f32.mrf.mxu0
    %v819 = vadd.f32 %v554, %v818
    %820 = vmatmul.bf16.gmra.mxu0 %v701
    %v821 = vpop.f32.mrf.mxu0
    %v822 = vadd.f32 %v554, %v821
    %v823 = vpop.f32.mrf.mxu0
    %v824 = vadd.f32 %v554, %v823
    %825 = vmatmul.bf16.gmra.mxu0 %v704
    %v826 = vpop.f32.mrf.mxu0
    %v827 = vadd.f32 %v554, %v826
    %v828 = vpop.f32.mrf.mxu0
    %v829 = vadd.f32 %v554, %v828
    %830 = vmatmul.bf16.gmra.mxu0 %v707
    %v831 = vpop.f32.mrf.mxu0
    %v832 = vadd.f32 %v554, %v831
    %v833 = vpop.f32.mrf.mxu0
    %v834 = vadd.f32 %v554, %v833
    %835 = vmatmul.bf16.gmra.mxu0 %v710
    %v836 = vpop.f32.mrf.mxu0
    %v837 = vadd.f32 %v554, %v836
    %v838 = vpop.f32.mrf.mxu0
    %v839 = vadd.f32 %v554, %v838
    %840 = vdwg.mxu0
    %v841 = vpack.c.bf16 %v724, %v722
    %v842 = vpack.c.bf16 %v729, %v727
    %v843 = vpack.c.bf16 %v734, %v732
    %v844 = vpack.c.bf16 %v739, %v737
    %v845 = vpack.c.bf16 %v744, %v742
    %v846 = vpack.c.bf16 %v749, %v747
    %v847 = vpack.c.bf16 %v754, %v752
    %v848 = vpack.c.bf16 %v759, %v757
    %v849 = vpack.c.bf16 %v764, %v762
    %v850 = vpack.c.bf16 %v769, %v767
    %v851 = vpack.c.bf16 %v774, %v772
    %v852 = vpack.c.bf16 %v779, %v777
    %v853 = vpack.c.bf16 %v784, %v782
    %v854 = vpack.c.bf16 %v789, %v787
    %v855 = vpack.c.bf16 %v794, %v792
    %v856 = vpack.c.bf16 %v799, %v797
    %v857 = vpack.c.bf16 %v804, %v802
    %v858 = vpack.c.bf16 %v809, %v807
    %v859 = vpack.c.bf16 %v814, %v812
    %v860 = vpack.c.bf16 %v819, %v817
    %v861 = vpack.c.bf16 %v824, %v822
    %v862 = vpack.c.bf16 %v829, %v827
    %v863 = vpack.c.bf16 %v834, %v832
    %v864 = vpack.c.bf16 %v839, %v837
    %v865 = vld [vmem:[%s5] sm:$0x3]
    %vm866 = vcmask 23552
    %v868 = vsel %vm866, %v841, 0
    %v871 = vsel %vm866, %v842, 0
    %v874 = vsel %vm866, %v843, 0
    %v877 = vsel %vm866, %v844, 0
    %v880 = vsel %vm866, %v845, 0
    %v883 = vsel %vm866, %v846, 0
    %v886 = vsel %vm866, %v847, 0
    %v889 = vsel %vm866, %v848, 0
    %v892 = vsel %vm866, %v849, 0
    %v895 = vsel %vm866, %v850, 0
    %v898 = vsel %vm866, %v851, 0
    %v901 = vsel %vm866, %v852, 0
    %v904 = vsel %vm866, %v853, 0
    %v907 = vsel %vm866, %v854, 0
    %v910 = vsel %vm866, %v855, 0
    %v913 = vsel %vm866, %v856, 0
    %v916 = vsel %vm866, %v857, 0
    %v919 = vsel %vm866, %v858, 0
    %v922 = vsel %vm866, %v859, 0
    %v925 = vsel %vm866, %v860, 0
    %v928 = vsel %vm866, %v861, 0
    %v931 = vsel %vm866, %v862, 0
    %v934 = vsel %vm866, %v863, 0
    %v937 = vsel %vm866, %v864, 0
    %vm939 = vcmask 1040384
    %vm940 = vcmask 1041408
    %v941 = vsel %vm939, 4294967295, 65535
    %v942 = vsel %vm940, %v941, 0
    %v944 = vand.u32 %v865, %v942
    %946 = vmatpush.bf16.msra.mxu0 0
    %947 = vmatpush.bf16.msra.mxu0 0
    %948 = vmatpush.bf16.msra.mxu0 0
    %949 = vmatpush.bf16.msra.mxu0 0
    %950 = vmatpush.bf16.msra.mxu0 0
    %951 = vmatpush.bf16.msra.mxu0 0
    %952 = vmatpush.bf16.msra.mxu0 0
    %953 = vmatpush.bf16.msra.mxu0 %v944
    %954 = vmatmul.bf16.gmra.mxu0 %v868
    %v955 = vpop.f32.mrf.mxu0
    %v956 = vadd.f32 0.0, %v955
    %v957 = vpop.f32.mrf.mxu0
    %v958 = vadd.f32 0.0, %v957
    %959 = vmatmul.bf16.gmra.mxu0 %v871
    %v960 = vpop.f32.mrf.mxu0
    %v961 = vadd.f32 0.0, %v960
    %v962 = vpop.f32.mrf.mxu0
    %v963 = vadd.f32 0.0, %v962
    %964 = vmatmul.bf16.gmra.mxu0 %v874
    %v965 = vpop.f32.mrf.mxu0
    %v966 = vadd.f32 0.0, %v965
    %v967 = vpop.f32.mrf.mxu0
    %v968 = vadd.f32 0.0, %v967
    %969 = vmatmul.bf16.gmra.mxu0 %v877
    %v970 = vpop.f32.mrf.mxu0
    %v971 = vadd.f32 0.0, %v970
    %v972 = vpop.f32.mrf.mxu0
    %v973 = vadd.f32 0.0, %v972
    %974 = vmatmul.bf16.gmra.mxu0 %v880
    %v975 = vpop.f32.mrf.mxu0
    %v976 = vadd.f32 0.0, %v975
    %v977 = vpop.f32.mrf.mxu0
    %v978 = vadd.f32 0.0, %v977
    %979 = vmatmul.bf16.gmra.mxu0 %v883
    %v980 = vpop.f32.mrf.mxu0
    %v981 = vadd.f32 0.0, %v980
    %v982 = vpop.f32.mrf.mxu0
    %v983 = vadd.f32 0.0, %v982
    %984 = vmatmul.bf16.gmra.mxu0 %v886
    %v985 = vpop.f32.mrf.mxu0
    %v986 = vadd.f32 0.0, %v985
    %v987 = vpop.f32.mrf.mxu0
    %v988 = vadd.f32 0.0, %v987
    %989 = vmatmul.bf16.gmra.mxu0 %v889
    %v990 = vpop.f32.mrf.mxu0
    %v991 = vadd.f32 0.0, %v990
    %v992 = vpop.f32.mrf.mxu0
    %v993 = vadd.f32 0.0, %v992
    %994 = vmatmul.bf16.gmra.mxu0 %v892
    %v995 = vpop.f32.mrf.mxu0
    %v996 = vadd.f32 0.0, %v995
    %v997 = vpop.f32.mrf.mxu0
    %v998 = vadd.f32 0.0, %v997
    %999 = vmatmul.bf16.gmra.mxu0 %v895
    %v1000 = vpop.f32.mrf.mxu0
    %v1001 = vadd.f32 0.0, %v1000
    %v1002 = vpop.f32.mrf.mxu0
    %v1003 = vadd.f32 0.0, %v1002
    %1004 = vmatmul.bf16.gmra.mxu0 %v898
    %v1005 = vpop.f32.mrf.mxu0
    %v1006 = vadd.f32 0.0, %v1005
    %v1007 = vpop.f32.mrf.mxu0
    %v1008 = vadd.f32 0.0, %v1007
    %1009 = vmatmul.bf16.gmra.mxu0 %v901
    %v1010 = vpop.f32.mrf.mxu0
    %v1011 = vadd.f32 0.0, %v1010
    %v1012 = vpop.f32.mrf.mxu0
    %v1013 = vadd.f32 0.0, %v1012
    %1014 = vmatmul.bf16.gmra.mxu0 %v904
    %v1015 = vpop.f32.mrf.mxu0
    %v1016 = vadd.f32 0.0, %v1015
    %v1017 = vpop.f32.mrf.mxu0
    %v1018 = vadd.f32 0.0, %v1017
    %1019 = vmatmul.bf16.gmra.mxu0 %v907
    %v1020 = vpop.f32.mrf.mxu0
    %v1021 = vadd.f32 0.0, %v1020
    %v1022 = vpop.f32.mrf.mxu0
    %v1023 = vadd.f32 0.0, %v1022
    %1024 = vmatmul.bf16.gmra.mxu0 %v910
    %v1025 = vpop.f32.mrf.mxu0
    %v1026 = vadd.f32 0.0, %v1025
    %v1027 = vpop.f32.mrf.mxu0
    %v1028 = vadd.f32 0.0, %v1027
    %1029 = vmatmul.bf16.gmra.mxu0 %v913
    %v1030 = vpop.f32.mrf.mxu0
    %v1031 = vadd.f32 0.0, %v1030
    %v1032 = vpop.f32.mrf.mxu0
    %v1033 = vadd.f32 0.0, %v1032
    %1034 = vmatmul.bf16.gmra.mxu0 %v916
    %v1035 = vpop.f32.mrf.mxu0
    %v1036 = vadd.f32 0.0, %v1035
    %v1037 = vpop.f32.mrf.mxu0
    %v1038 = vadd.f32 0.0, %v1037
    %1039 = vmatmul.bf16.gmra.mxu0 %v919
    %v1040 = vpop.f32.mrf.mxu0
    %v1041 = vadd.f32 0.0, %v1040
    %v1042 = vpop.f32.mrf.mxu0
    %v1043 = vadd.f32 0.0, %v1042
    %1044 = vmatmul.bf16.gmra.mxu0 %v922
    %v1045 = vpop.f32.mrf.mxu0
    %v1046 = vadd.f32 0.0, %v1045
    %v1047 = vpop.f32.mrf.mxu0
    %v1048 = vadd.f32 0.0, %v1047
    %1049 = vmatmul.bf16.gmra.mxu0 %v925
    %v1050 = vpop.f32.mrf.mxu0
    %v1051 = vadd.f32 0.0, %v1050
    %v1052 = vpop.f32.mrf.mxu0
    %v1053 = vadd.f32 0.0, %v1052
    %1054 = vmatmul.bf16.gmra.mxu0 %v928
    %v1055 = vpop.f32.mrf.mxu0
    %v1056 = vadd.f32 0.0, %v1055
    %v1057 = vpop.f32.mrf.mxu0
    %v1058 = vadd.f32 0.0, %v1057
    %1059 = vmatmul.bf16.gmra.mxu0 %v931
    %v1060 = vpop.f32.mrf.mxu0
    %v1061 = vadd.f32 0.0, %v1060
    %v1062 = vpop.f32.mrf.mxu0
    %v1063 = vadd.f32 0.0, %v1062
    %1064 = vmatmul.bf16.gmra.mxu0 %v934
    %v1065 = vpop.f32.mrf.mxu0
    %v1066 = vadd.f32 0.0, %v1065
    %v1067 = vpop.f32.mrf.mxu0
    %v1068 = vadd.f32 0.0, %v1067
    %1069 = vmatmul.bf16.gmra.mxu0 %v937
    %v1070 = vpop.f32.mrf.mxu0
    %v1071 = vadd.f32 0.0, %v1070
    %v1072 = vpop.f32.mrf.mxu0
    %v1073 = vadd.f32 0.0, %v1072
    %1074 = vdwg.mxu0
    %v1075 = vadd.f32 %v357, %v956
    %v1076 = vadd.f32 %v359, %v958
    %v1077 = vadd.f32 %v362, %v961
    %v1078 = vadd.f32 %v364, %v963
    %v1079 = vadd.f32 %v367, %v966
    %v1080 = vadd.f32 %v369, %v968
    %v1081 = vadd.f32 %v372, %v971
    %v1082 = vadd.f32 %v374, %v973
    %v1083 = vadd.f32 %v377, %v976
    %v1084 = vadd.f32 %v379, %v978
    %v1085 = vadd.f32 %v382, %v981
    %v1086 = vadd.f32 %v384, %v983
    %v1087 = vadd.f32 %v387, %v986
    %v1088 = vadd.f32 %v389, %v988
    %v1089 = vadd.f32 %v392, %v991
    %v1090 = vadd.f32 %v394, %v993
    %v1091 = vadd.f32 %v397, %v996
    %v1092 = vadd.f32 %v399, %v998
    %v1093 = vadd.f32 %v402, %v1001
    %v1094 = vadd.f32 %v404, %v1003
    %v1095 = vadd.f32 %v407, %v1006
    %v1096 = vadd.f32 %v409, %v1008
    %v1097 = vadd.f32 %v412, %v1011
    %v1098 = vadd.f32 %v414, %v1013
    %v1099 = vadd.f32 %v417, %v1016
    %v1100 = vadd.f32 %v419, %v1018
    %v1101 = vadd.f32 %v422, %v1021
    %v1102 = vadd.f32 %v424, %v1023
    %v1103 = vadd.f32 %v427, %v1026
    %v1104 = vadd.f32 %v429, %v1028
    %v1105 = vadd.f32 %v432, %v1031
    %v1106 = vadd.f32 %v434, %v1033
    %v1107 = vadd.f32 %v437, %v1036
    %v1108 = vadd.f32 %v439, %v1038
    %v1109 = vadd.f32 %v442, %v1041
    %v1110 = vadd.f32 %v444, %v1043
    %v1111 = vadd.f32 %v447, %v1046
    %v1112 = vadd.f32 %v449, %v1048
    %v1113 = vadd.f32 %v452, %v1051
    %v1114 = vadd.f32 %v454, %v1053
    %v1115 = vadd.f32 %v457, %v1056
    %v1116 = vadd.f32 %v459, %v1058
    %v1117 = vadd.f32 %v462, %v1061
    %v1118 = vadd.f32 %v464, %v1063
    %v1119 = vadd.f32 %v467, %v1066
    %v1120 = vadd.f32 %v469, %v1068
    %v1121 = vadd.f32 %v472, %v1071
    %v1122 = vadd.f32 %v474, %v1073
    %v1123 = vmax.f32 %v1075, 0.0
    %v1124 = vmax.f32 %v1076, 0.0
    %v1125 = vmax.f32 %v1077, 0.0
    %v1126 = vmax.f32 %v1078, 0.0
    %v1127 = vmax.f32 %v1079, 0.0
    %v1128 = vmax.f32 %v1080, 0.0
    %v1129 = vmax.f32 %v1081, 0.0
    %v1130 = vmax.f32 %v1082, 0.0
    %v1131 = vmax.f32 %v1083, 0.0
    %v1132 = vmax.f32 %v1084, 0.0
    %v1133 = vmax.f32 %v1085, 0.0
    %v1134 = vmax.f32 %v1086, 0.0
    %v1135 = vmax.f32 %v1087, 0.0
    %v1136 = vmax.f32 %v1088, 0.0
    %v1137 = vmax.f32 %v1089, 0.0
    %v1138 = vmax.f32 %v1090, 0.0
    %v1139 = vmax.f32 %v1091, 0.0
    %v1140 = vmax.f32 %v1092, 0.0
    %v1141 = vmax.f32 %v1093, 0.0
    %v1142 = vmax.f32 %v1094, 0.0
    %v1143 = vmax.f32 %v1095, 0.0
    %v1144 = vmax.f32 %v1096, 0.0
    %v1145 = vmax.f32 %v1097, 0.0
    %v1146 = vmax.f32 %v1098, 0.0
    %v1147 = vmax.f32 %v1099, 0.0
    %v1148 = vmax.f32 %v1100, 0.0
    %v1149 = vmax.f32 %v1101, 0.0
    %v1150 = vmax.f32 %v1102, 0.0
    %v1151 = vmax.f32 %v1103, 0.0
    %v1152 = vmax.f32 %v1104, 0.0
    %v1153 = vmax.f32 %v1105, 0.0
    %v1154 = vmax.f32 %v1106, 0.0
    %v1155 = vmax.f32 %v1107, 0.0
    %v1156 = vmax.f32 %v1108, 0.0
    %v1157 = vmax.f32 %v1109, 0.0
    %v1158 = vmax.f32 %v1110, 0.0
    %v1159 = vmax.f32 %v1111, 0.0
    %v1160 = vmax.f32 %v1112, 0.0
    %v1161 = vmax.f32 %v1113, 0.0
    %v1162 = vmax.f32 %v1114, 0.0
    %v1163 = vmax.f32 %v1115, 0.0
    %v1164 = vmax.f32 %v1116, 0.0
    %v1165 = vmax.f32 %v1117, 0.0
    %v1166 = vmax.f32 %v1118, 0.0
    %v1167 = vmax.f32 %v1119, 0.0
    %v1168 = vmax.f32 %v1120, 0.0
    %v1169 = vmax.f32 %v1121, 0.0
    %v1170 = vmax.f32 %v1122, 0.0
    %v1171 = vpack.c.bf16 %v1124, %v1123
    %v1172 = vpack.c.bf16 %v1126, %v1125
    %v1173 = vpack.c.bf16 %v1128, %v1127
    %v1174 = vpack.c.bf16 %v1130, %v1129
    %v1175 = vpack.c.bf16 %v1132, %v1131
    %v1176 = vpack.c.bf16 %v1134, %v1133
    %v1177 = vpack.c.bf16 %v1136, %v1135
    %v1178 = vpack.c.bf16 %v1138, %v1137
    %v1179 = vpack.c.bf16 %v1140, %v1139
    %v1180 = vpack.c.bf16 %v1142, %v1141
    %v1181 = vpack.c.bf16 %v1144, %v1143
    %v1182 = vpack.c.bf16 %v1146, %v1145
    %v1183 = vpack.c.bf16 %v1148, %v1147
    %v1184 = vpack.c.bf16 %v1150, %v1149
    %v1185 = vpack.c.bf16 %v1152, %v1151
    %v1186 = vpack.c.bf16 %v1154, %v1153
    %v1187 = vpack.c.bf16 %v1156, %v1155
    %v1188 = vpack.c.bf16 %v1158, %v1157
    %v1189 = vpack.c.bf16 %v1160, %v1159
    %v1190 = vpack.c.bf16 %v1162, %v1161
    %v1191 = vpack.c.bf16 %v1164, %v1163
    %v1192 = vpack.c.bf16 %v1166, %v1165
    %v1193 = vpack.c.bf16 %v1168, %v1167
    %v1194 = vpack.c.bf16 %v1170, %v1169
    %v1195 = vld [vmem:[%s6] sm:$0xff]
    %v1196 = vld [vmem:[%s6 + $0x8] sm:$0xff]
    %v1197 = vld [vmem:[%s6 + $0x10] sm:$0xff]
    %v1198 = vld [vmem:[%s6 + $0x18] sm:$0xff]
    %v1199 = vld [vmem:[%s6 + $0x20] sm:$0xff]
    %v1200 = vld [vmem:[%s6 + $0x28] sm:$0xff]
    %v1201 = vld [vmem:[%s6 + $0x30] sm:$0xff]
    %v1202 = vld [vmem:[%s6 + $0x38] sm:$0xff]
    %v1203 = vld [vmem:[%s6 + $0x40] sm:$0xff]
    %v1204 = vld [vmem:[%s6 + $0x48] sm:$0xff]
    %v1205 = vld [vmem:[%s6 + $0x50] sm:$0xff]
    %v1206 = vld [vmem:[%s6 + $0x58] sm:$0xff]
    %v1207 = vld [vmem:[%s6 + $0x60] sm:$0xff]
    %v1208 = vld [vmem:[%s6 + $0x68] sm:$0xff]
    %v1209 = vld [vmem:[%s6 + $0x70] sm:$0xff]
    %v1210 = vld [vmem:[%s6 + $0x78] sm:$0xff]
    %v1211 = vld [vmem:[%s6 + $0x80] sm:$0xff]
    %v1212 = vld [vmem:[%s6 + $0x88] sm:$0xff]
    %v1213 = vld [vmem:[%s6 + $0x90] sm:$0xff]
    %v1214 = vld [vmem:[%s6 + $0x98] sm:$0xff]
    %v1215 = vld [vmem:[%s7] sm:$0x3]
    %v1217 = vperm.slane %v1215, 0
    %v1218 = vperm.slane %v1215, 1
    %v1241 = vunpack.c.l.b16 %v1195
    %v1242 = vunpack.c.h.b16 %v1195
    %v1243 = vunpack.c.l.b16 %v1196
    %v1244 = vunpack.c.h.b16 %v1196
    %v1245 = vunpack.c.l.b16 %v1197
    %v1246 = vunpack.c.h.b16 %v1197
    %v1247 = vunpack.c.l.b16 %v1198
    %v1248 = vunpack.c.h.b16 %v1198
    %v1249 = vunpack.c.l.b16 %v1199
    %v1250 = vunpack.c.h.b16 %v1199
    %v1251 = vunpack.c.l.b16 %v1200
    %v1252 = vunpack.c.h.b16 %v1200
    %v1253 = vunpack.c.l.b16 %v1201
    %v1254 = vunpack.c.h.b16 %v1201
    %v1255 = vunpack.c.l.b16 %v1202
    %v1256 = vunpack.c.h.b16 %v1202
    %v1257 = vunpack.c.l.b16 %v1203
    %v1258 = vunpack.c.h.b16 %v1203
    %v1259 = vunpack.c.l.b16 %v1204
    %v1260 = vunpack.c.h.b16 %v1204
    %v1261 = vunpack.c.l.b16 %v1205
    %v1262 = vunpack.c.h.b16 %v1205
    %v1263 = vunpack.c.l.b16 %v1206
    %v1264 = vunpack.c.h.b16 %v1206
    %v1265 = vunpack.c.l.b16 %v1207
    %v1266 = vunpack.c.h.b16 %v1207
    %v1267 = vunpack.c.l.b16 %v1208
    %v1268 = vunpack.c.h.b16 %v1208
    %v1269 = vunpack.c.l.b16 %v1209
    %v1270 = vunpack.c.h.b16 %v1209
    %v1271 = vunpack.c.l.b16 %v1210
    %v1272 = vunpack.c.h.b16 %v1210
    %v1273 = vunpack.c.l.b16 %v1211
    %v1274 = vunpack.c.h.b16 %v1211
    %v1275 = vunpack.c.l.b16 %v1212
    %v1276 = vunpack.c.h.b16 %v1212
    %v1277 = vunpack.c.l.b16 %v1213
    %v1278 = vunpack.c.h.b16 %v1213
    %v1279 = vunpack.c.l.b16 %v1214
    %v1280 = vunpack.c.h.b16 %v1214
    %v1281 = vpack.c.b16 %v1243, %v1241
    %v1282 = vpack.c.b16 %v1244, %v1242
    %v1283 = vpack.c.b16 %v1247, %v1245
    %v1284 = vpack.c.b16 %v1248, %v1246
    %v1285 = vpack.c.b16 %v1251, %v1249
    %v1286 = vpack.c.b16 %v1252, %v1250
    %v1287 = vpack.c.b16 %v1255, %v1253
    %v1288 = vpack.c.b16 %v1256, %v1254
    %v1289 = vpack.c.b16 %v1259, %v1257
    %v1290 = vpack.c.b16 %v1260, %v1258
    %v1291 = vpack.c.b16 %v1263, %v1261
    %v1292 = vpack.c.b16 %v1264, %v1262
    %v1293 = vpack.c.b16 %v1267, %v1265
    %v1294 = vpack.c.b16 %v1268, %v1266
    %v1295 = vpack.c.b16 %v1271, %v1269
    %v1296 = vpack.c.b16 %v1272, %v1270
    %v1297 = vpack.c.b16 %v1275, %v1273
    %v1298 = vpack.c.b16 %v1276, %v1274
    %v1299 = vpack.c.b16 %v1279, %v1277
    %v1300 = vpack.c.b16 %v1280, %v1278
    %v1322 = vsel %vm145, %v1171, 0
    %v1325 = vsel %vm145, %v1172, 0
    %v1328 = vsel %vm145, %v1173, 0
    %v1331 = vsel %vm145, %v1174, 0
    %v1334 = vsel %vm145, %v1175, 0
    %v1337 = vsel %vm145, %v1176, 0
    %v1340 = vsel %vm145, %v1177, 0
    %v1343 = vsel %vm145, %v1178, 0
    %v1346 = vsel %vm145, %v1179, 0
    %v1349 = vsel %vm145, %v1180, 0
    %v1352 = vsel %vm145, %v1181, 0
    %v1355 = vsel %vm145, %v1182, 0
    %v1358 = vsel %vm145, %v1183, 0
    %v1361 = vsel %vm145, %v1184, 0
    %v1364 = vsel %vm145, %v1185, 0
    %v1367 = vsel %vm145, %v1186, 0
    %v1370 = vsel %vm145, %v1187, 0
    %v1373 = vsel %vm145, %v1188, 0
    %v1376 = vsel %vm145, %v1189, 0
    %v1379 = vsel %vm145, %v1190, 0
    %v1382 = vsel %vm145, %v1191, 0
    %v1385 = vsel %vm145, %v1192, 0
    %v1388 = vsel %vm145, %v1193, 0
    %v1391 = vsel %vm145, %v1194, 0
    %1393 = vmatpush.bf16.msra.mxu0 %v1295
    %1394 = vmatpush.bf16.msra.mxu0 %v1293
    %1395 = vmatpush.bf16.msra.mxu0 %v1291
    %1396 = vmatpush.bf16.msra.mxu0 %v1289
    %1397 = vmatpush.bf16.msra.mxu0 %v1287
    %1398 = vmatpush.bf16.msra.mxu0 %v1285
    %1399 = vmatpush.bf16.msra.mxu0 %v1283
    %1400 = vmatpush.bf16.msra.mxu0 %v1281
    %1401 = vmatmul.bf16.gmra.mxu0 %v524
    %v1402 = vpop.f32.mrf.mxu0
    %v1403 = vadd.f32 %v1217, %v1402
    %v1404 = vpop.f32.mrf.mxu0
    %v1405 = vadd.f32 %v1217, %v1404
    %1406 = vmatmul.bf16.gmra.mxu0 %v525
    %v1407 = vpop.f32.mrf.mxu0
    %v1408 = vadd.f32 %v1217, %v1407
    %v1409 = vpop.f32.mrf.mxu0
    %v1410 = vadd.f32 %v1217, %v1409
    %1411 = vmatmul.bf16.gmra.mxu0 %v526
    %v1412 = vpop.f32.mrf.mxu0
    %v1413 = vadd.f32 %v1217, %v1412
    %v1414 = vpop.f32.mrf.mxu0
    %v1415 = vadd.f32 %v1217, %v1414
    %1416 = vmatmul.bf16.gmra.mxu0 %v527
    %v1417 = vpop.f32.mrf.mxu0
    %v1418 = vadd.f32 %v1217, %v1417
    %v1419 = vpop.f32.mrf.mxu0
    %v1420 = vadd.f32 %v1217, %v1419
    %1421 = vmatmul.bf16.gmra.mxu0 %v528
    %v1422 = vpop.f32.mrf.mxu0
    %v1423 = vadd.f32 %v1217, %v1422
    %v1424 = vpop.f32.mrf.mxu0
    %v1425 = vadd.f32 %v1217, %v1424
    %1426 = vmatmul.bf16.gmra.mxu0 %v529
    %v1427 = vpop.f32.mrf.mxu0
    %v1428 = vadd.f32 %v1217, %v1427
    %v1429 = vpop.f32.mrf.mxu0
    %v1430 = vadd.f32 %v1217, %v1429
    %1431 = vmatmul.bf16.gmra.mxu0 %v530
    %v1432 = vpop.f32.mrf.mxu0
    %v1433 = vadd.f32 %v1217, %v1432
    %v1434 = vpop.f32.mrf.mxu0
    %v1435 = vadd.f32 %v1217, %v1434
    %1436 = vmatmul.bf16.gmra.mxu0 %v531
    %v1437 = vpop.f32.mrf.mxu0
    %v1438 = vadd.f32 %v1217, %v1437
    %v1439 = vpop.f32.mrf.mxu0
    %v1440 = vadd.f32 %v1217, %v1439
    %1441 = vmatmul.bf16.gmra.mxu0 %v532
    %v1442 = vpop.f32.mrf.mxu0
    %v1443 = vadd.f32 %v1217, %v1442
    %v1444 = vpop.f32.mrf.mxu0
    %v1445 = vadd.f32 %v1217, %v1444
    %1446 = vmatmul.bf16.gmra.mxu0 %v533
    %v1447 = vpop.f32.mrf.mxu0
    %v1448 = vadd.f32 %v1217, %v1447
    %v1449 = vpop.f32.mrf.mxu0
    %v1450 = vadd.f32 %v1217, %v1449
    %1451 = vmatmul.bf16.gmra.mxu0 %v534
    %v1452 = vpop.f32.mrf.mxu0
    %v1453 = vadd.f32 %v1217, %v1452
    %v1454 = vpop.f32.mrf.mxu0
    %v1455 = vadd.f32 %v1217, %v1454
    %1456 = vmatmul.bf16.gmra.mxu0 %v535
    %v1457 = vpop.f32.mrf.mxu0
    %v1458 = vadd.f32 %v1217, %v1457
    %v1459 = vpop.f32.mrf.mxu0
    %v1460 = vadd.f32 %v1217, %v1459
    %1461 = vmatmul.bf16.gmra.mxu0 %v536
    %v1462 = vpop.f32.mrf.mxu0
    %v1463 = vadd.f32 %v1217, %v1462
    %v1464 = vpop.f32.mrf.mxu0
    %v1465 = vadd.f32 %v1217, %v1464
    %1466 = vmatmul.bf16.gmra.mxu0 %v537
    %v1467 = vpop.f32.mrf.mxu0
    %v1468 = vadd.f32 %v1217, %v1467
    %v1469 = vpop.f32.mrf.mxu0
    %v1470 = vadd.f32 %v1217, %v1469
    %1471 = vmatmul.bf16.gmra.mxu0 %v538
    %v1472 = vpop.f32.mrf.mxu0
    %v1473 = vadd.f32 %v1217, %v1472
    %v1474 = vpop.f32.mrf.mxu0
    %v1475 = vadd.f32 %v1217, %v1474
    %1476 = vmatmul.bf16.gmra.mxu0 %v539
    %v1477 = vpop.f32.mrf.mxu0
    %v1478 = vadd.f32 %v1217, %v1477
    %v1479 = vpop.f32.mrf.mxu0
    %v1480 = vadd.f32 %v1217, %v1479
    %1481 = vmatmul.bf16.gmra.mxu0 %v540
    %v1482 = vpop.f32.mrf.mxu0
    %v1483 = vadd.f32 %v1217, %v1482
    %v1484 = vpop.f32.mrf.mxu0
    %v1485 = vadd.f32 %v1217, %v1484
    %1486 = vmatmul.bf16.gmra.mxu0 %v541
    %v1487 = vpop.f32.mrf.mxu0
    %v1488 = vadd.f32 %v1217, %v1487
    %v1489 = vpop.f32.mrf.mxu0
    %v1490 = vadd.f32 %v1217, %v1489
    %1491 = vmatmul.bf16.gmra.mxu0 %v542
    %v1492 = vpop.f32.mrf.mxu0
    %v1493 = vadd.f32 %v1217, %v1492
    %v1494 = vpop.f32.mrf.mxu0
    %v1495 = vadd.f32 %v1217, %v1494
    %1496 = vmatmul.bf16.gmra.mxu0 %v543
    %v1497 = vpop.f32.mrf.mxu0
    %v1498 = vadd.f32 %v1217, %v1497
    %v1499 = vpop.f32.mrf.mxu0
    %v1500 = vadd.f32 %v1217, %v1499
    %1501 = vmatmul.bf16.gmra.mxu0 %v544
    %v1502 = vpop.f32.mrf.mxu0
    %v1503 = vadd.f32 %v1217, %v1502
    %v1504 = vpop.f32.mrf.mxu0
    %v1505 = vadd.f32 %v1217, %v1504
    %1506 = vmatmul.bf16.gmra.mxu0 %v545
    %v1507 = vpop.f32.mrf.mxu0
    %v1508 = vadd.f32 %v1217, %v1507
    %v1509 = vpop.f32.mrf.mxu0
    %v1510 = vadd.f32 %v1217, %v1509
    %1511 = vmatmul.bf16.gmra.mxu0 %v546
    %v1512 = vpop.f32.mrf.mxu0
    %v1513 = vadd.f32 %v1217, %v1512
    %v1514 = vpop.f32.mrf.mxu0
    %v1515 = vadd.f32 %v1217, %v1514
    %1516 = vmatmul.bf16.gmra.mxu0 %v547
    %v1517 = vpop.f32.mrf.mxu0
    %v1518 = vadd.f32 %v1217, %v1517
    %v1519 = vpop.f32.mrf.mxu0
    %v1520 = vadd.f32 %v1217, %v1519
    %1521 = vdwg.mxu0
    %1522 = vmatpush.bf16.msra.mxu0 0
    %1523 = vmatpush.bf16.msra.mxu0 0
    %1524 = vmatpush.bf16.msra.mxu0 0
    %1525 = vmatpush.bf16.msra.mxu0 0
    %1526 = vmatpush.bf16.msra.mxu0 0
    %1527 = vmatpush.bf16.msra.mxu0 0
    %1528 = vmatpush.bf16.msra.mxu0 %v1299
    %1529 = vmatpush.bf16.msra.mxu0 %v1297
    %1530 = vmatmul.bf16.gmra.mxu0 %v1322
    %v1531 = vpop.f32.mrf.mxu0
    %v1532 = vadd.f32 %v1403, %v1531
    %v1533 = vpop.f32.mrf.mxu0
    %v1534 = vadd.f32 %v1405, %v1533
    %1535 = vmatmul.bf16.gmra.mxu0 %v1325
    %v1536 = vpop.f32.mrf.mxu0
    %v1537 = vadd.f32 %v1408, %v1536
    %v1538 = vpop.f32.mrf.mxu0
    %v1539 = vadd.f32 %v1410, %v1538
    %1540 = vmatmul.bf16.gmra.mxu0 %v1328
    %v1541 = vpop.f32.mrf.mxu0
    %v1542 = vadd.f32 %v1413, %v1541
    %v1543 = vpop.f32.mrf.mxu0
    %v1544 = vadd.f32 %v1415, %v1543
    %1545 = vmatmul.bf16.gmra.mxu0 %v1331
    %v1546 = vpop.f32.mrf.mxu0
    %v1547 = vadd.f32 %v1418, %v1546
    %v1548 = vpop.f32.mrf.mxu0
    %v1549 = vadd.f32 %v1420, %v1548
    %1550 = vmatmul.bf16.gmra.mxu0 %v1334
    %v1551 = vpop.f32.mrf.mxu0
    %v1552 = vadd.f32 %v1423, %v1551
    %v1553 = vpop.f32.mrf.mxu0
    %v1554 = vadd.f32 %v1425, %v1553
    %1555 = vmatmul.bf16.gmra.mxu0 %v1337
    %v1556 = vpop.f32.mrf.mxu0
    %v1557 = vadd.f32 %v1428, %v1556
    %v1558 = vpop.f32.mrf.mxu0
    %v1559 = vadd.f32 %v1430, %v1558
    %1560 = vmatmul.bf16.gmra.mxu0 %v1340
    %v1561 = vpop.f32.mrf.mxu0
    %v1562 = vadd.f32 %v1433, %v1561
    %v1563 = vpop.f32.mrf.mxu0
    %v1564 = vadd.f32 %v1435, %v1563
    %1565 = vmatmul.bf16.gmra.mxu0 %v1343
    %v1566 = vpop.f32.mrf.mxu0
    %v1567 = vadd.f32 %v1438, %v1566
    %v1568 = vpop.f32.mrf.mxu0
    %v1569 = vadd.f32 %v1440, %v1568
    %1570 = vmatmul.bf16.gmra.mxu0 %v1346
    %v1571 = vpop.f32.mrf.mxu0
    %v1572 = vadd.f32 %v1443, %v1571
    %v1573 = vpop.f32.mrf.mxu0
    %v1574 = vadd.f32 %v1445, %v1573
    %1575 = vmatmul.bf16.gmra.mxu0 %v1349
    %v1576 = vpop.f32.mrf.mxu0
    %v1577 = vadd.f32 %v1448, %v1576
    %v1578 = vpop.f32.mrf.mxu0
    %v1579 = vadd.f32 %v1450, %v1578
    %1580 = vmatmul.bf16.gmra.mxu0 %v1352
    %v1581 = vpop.f32.mrf.mxu0
    %v1582 = vadd.f32 %v1453, %v1581
    %v1583 = vpop.f32.mrf.mxu0
    %v1584 = vadd.f32 %v1455, %v1583
    %1585 = vmatmul.bf16.gmra.mxu0 %v1355
    %v1586 = vpop.f32.mrf.mxu0
    %v1587 = vadd.f32 %v1458, %v1586
    %v1588 = vpop.f32.mrf.mxu0
    %v1589 = vadd.f32 %v1460, %v1588
    %1590 = vmatmul.bf16.gmra.mxu0 %v1358
    %v1591 = vpop.f32.mrf.mxu0
    %v1592 = vadd.f32 %v1463, %v1591
    %v1593 = vpop.f32.mrf.mxu0
    %v1594 = vadd.f32 %v1465, %v1593
    %1595 = vmatmul.bf16.gmra.mxu0 %v1361
    %v1596 = vpop.f32.mrf.mxu0
    %v1597 = vadd.f32 %v1468, %v1596
    %v1598 = vpop.f32.mrf.mxu0
    %v1599 = vadd.f32 %v1470, %v1598
    %1600 = vmatmul.bf16.gmra.mxu0 %v1364
    %v1601 = vpop.f32.mrf.mxu0
    %v1602 = vadd.f32 %v1473, %v1601
    %v1603 = vpop.f32.mrf.mxu0
    %v1604 = vadd.f32 %v1475, %v1603
    %1605 = vmatmul.bf16.gmra.mxu0 %v1367
    %v1606 = vpop.f32.mrf.mxu0
    %v1607 = vadd.f32 %v1478, %v1606
    %v1608 = vpop.f32.mrf.mxu0
    %v1609 = vadd.f32 %v1480, %v1608
    %1610 = vmatmul.bf16.gmra.mxu0 %v1370
    %v1611 = vpop.f32.mrf.mxu0
    %v1612 = vadd.f32 %v1483, %v1611
    %v1613 = vpop.f32.mrf.mxu0
    %v1614 = vadd.f32 %v1485, %v1613
    %1615 = vmatmul.bf16.gmra.mxu0 %v1373
    %v1616 = vpop.f32.mrf.mxu0
    %v1617 = vadd.f32 %v1488, %v1616
    %v1618 = vpop.f32.mrf.mxu0
    %v1619 = vadd.f32 %v1490, %v1618
    %1620 = vmatmul.bf16.gmra.mxu0 %v1376
    %v1621 = vpop.f32.mrf.mxu0
    %v1622 = vadd.f32 %v1493, %v1621
    %v1623 = vpop.f32.mrf.mxu0
    %v1624 = vadd.f32 %v1495, %v1623
    %1625 = vmatmul.bf16.gmra.mxu0 %v1379
    %v1626 = vpop.f32.mrf.mxu0
    %v1627 = vadd.f32 %v1498, %v1626
    %v1628 = vpop.f32.mrf.mxu0
    %v1629 = vadd.f32 %v1500, %v1628
    %1630 = vmatmul.bf16.gmra.mxu0 %v1382
    %v1631 = vpop.f32.mrf.mxu0
    %v1632 = vadd.f32 %v1503, %v1631
    %v1633 = vpop.f32.mrf.mxu0
    %v1634 = vadd.f32 %v1505, %v1633
    %1635 = vmatmul.bf16.gmra.mxu0 %v1385
    %v1636 = vpop.f32.mrf.mxu0
    %v1637 = vadd.f32 %v1508, %v1636
    %v1638 = vpop.f32.mrf.mxu0
    %v1639 = vadd.f32 %v1510, %v1638
    %1640 = vmatmul.bf16.gmra.mxu0 %v1388
    %v1641 = vpop.f32.mrf.mxu0
    %v1642 = vadd.f32 %v1513, %v1641
    %v1643 = vpop.f32.mrf.mxu0
    %v1644 = vadd.f32 %v1515, %v1643
    %1645 = vmatmul.bf16.gmra.mxu0 %v1391
    %v1646 = vpop.f32.mrf.mxu0
    %v1647 = vadd.f32 %v1518, %v1646
    %v1648 = vpop.f32.mrf.mxu0
    %v1649 = vadd.f32 %v1520, %v1648
    %1650 = vdwg.mxu0
    %1651 = vmatpush.bf16.msra.mxu0 %v1296
    %1652 = vmatpush.bf16.msra.mxu0 %v1294
    %1653 = vmatpush.bf16.msra.mxu0 %v1292
    %1654 = vmatpush.bf16.msra.mxu0 %v1290
    %1655 = vmatpush.bf16.msra.mxu0 %v1288
    %1656 = vmatpush.bf16.msra.mxu0 %v1286
    %1657 = vmatpush.bf16.msra.mxu0 %v1284
    %1658 = vmatpush.bf16.msra.mxu0 %v1282
    %1659 = vmatmul.bf16.gmra.mxu0 %v524
    %v1660 = vpop.f32.mrf.mxu0
    %v1661 = vadd.f32 %v1218, %v1660
    %v1662 = vpop.f32.mrf.mxu0
    %v1663 = vadd.f32 %v1218, %v1662
    %1664 = vmatmul.bf16.gmra.mxu0 %v525
    %v1665 = vpop.f32.mrf.mxu0
    %v1666 = vadd.f32 %v1218, %v1665
    %v1667 = vpop.f32.mrf.mxu0
    %v1668 = vadd.f32 %v1218, %v1667
    %1669 = vmatmul.bf16.gmra.mxu0 %v526
    %v1670 = vpop.f32.mrf.mxu0
    %v1671 = vadd.f32 %v1218, %v1670
    %v1672 = vpop.f32.mrf.mxu0
    %v1673 = vadd.f32 %v1218, %v1672
    %1674 = vmatmul.bf16.gmra.mxu0 %v527
    %v1675 = vpop.f32.mrf.mxu0
    %v1676 = vadd.f32 %v1218, %v1675
    %v1677 = vpop.f32.mrf.mxu0
    %v1678 = vadd.f32 %v1218, %v1677
    %1679 = vmatmul.bf16.gmra.mxu0 %v528
    %v1680 = vpop.f32.mrf.mxu0
    %v1681 = vadd.f32 %v1218, %v1680
    %v1682 = vpop.f32.mrf.mxu0
    %v1683 = vadd.f32 %v1218, %v1682
    %1684 = vmatmul.bf16.gmra.mxu0 %v529
    %v1685 = vpop.f32.mrf.mxu0
    %v1686 = vadd.f32 %v1218, %v1685
    %v1687 = vpop.f32.mrf.mxu0
    %v1688 = vadd.f32 %v1218, %v1687
    %1689 = vmatmul.bf16.gmra.mxu0 %v530
    %v1690 = vpop.f32.mrf.mxu0
    %v1691 = vadd.f32 %v1218, %v1690
    %v1692 = vpop.f32.mrf.mxu0
    %v1693 = vadd.f32 %v1218, %v1692
    %1694 = vmatmul.bf16.gmra.mxu0 %v531
    %v1695 = vpop.f32.mrf.mxu0
    %v1696 = vadd.f32 %v1218, %v1695
    %v1697 = vpop.f32.mrf.mxu0
    %v1698 = vadd.f32 %v1218, %v1697
    %1699 = vmatmul.bf16.gmra.mxu0 %v532
    %v1700 = vpop.f32.mrf.mxu0
    %v1701 = vadd.f32 %v1218, %v1700
    %v1702 = vpop.f32.mrf.mxu0
    %v1703 = vadd.f32 %v1218, %v1702
    %1704 = vmatmul.bf16.gmra.mxu0 %v533
    %v1705 = vpop.f32.mrf.mxu0
    %v1706 = vadd.f32 %v1218, %v1705
    %v1707 = vpop.f32.mrf.mxu0
    %v1708 = vadd.f32 %v1218, %v1707
    %1709 = vmatmul.bf16.gmra.mxu0 %v534
    %v1710 = vpop.f32.mrf.mxu0
    %v1711 = vadd.f32 %v1218, %v1710
    %v1712 = vpop.f32.mrf.mxu0
    %v1713 = vadd.f32 %v1218, %v1712
    %1714 = vmatmul.bf16.gmra.mxu0 %v535
    %v1715 = vpop.f32.mrf.mxu0
    %v1716 = vadd.f32 %v1218, %v1715
    %v1717 = vpop.f32.mrf.mxu0
    %v1718 = vadd.f32 %v1218, %v1717
    %1719 = vmatmul.bf16.gmra.mxu0 %v536
    %v1720 = vpop.f32.mrf.mxu0
    %v1721 = vadd.f32 %v1218, %v1720
    %v1722 = vpop.f32.mrf.mxu0
    %v1723 = vadd.f32 %v1218, %v1722
    %1724 = vmatmul.bf16.gmra.mxu0 %v537
    %v1725 = vpop.f32.mrf.mxu0
    %v1726 = vadd.f32 %v1218, %v1725
    %v1727 = vpop.f32.mrf.mxu0
    %v1728 = vadd.f32 %v1218, %v1727
    %1729 = vmatmul.bf16.gmra.mxu0 %v538
    %v1730 = vpop.f32.mrf.mxu0
    %v1731 = vadd.f32 %v1218, %v1730
    %v1732 = vpop.f32.mrf.mxu0
    %v1733 = vadd.f32 %v1218, %v1732
    %1734 = vmatmul.bf16.gmra.mxu0 %v539
    %v1735 = vpop.f32.mrf.mxu0
    %v1736 = vadd.f32 %v1218, %v1735
    %v1737 = vpop.f32.mrf.mxu0
    %v1738 = vadd.f32 %v1218, %v1737
    %1739 = vmatmul.bf16.gmra.mxu0 %v540
    %v1740 = vpop.f32.mrf.mxu0
    %v1741 = vadd.f32 %v1218, %v1740
    %v1742 = vpop.f32.mrf.mxu0
    %v1743 = vadd.f32 %v1218, %v1742
    %1744 = vmatmul.bf16.gmra.mxu0 %v541
    %v1745 = vpop.f32.mrf.mxu0
    %v1746 = vadd.f32 %v1218, %v1745
    %v1747 = vpop.f32.mrf.mxu0
    %v1748 = vadd.f32 %v1218, %v1747
    %1749 = vmatmul.bf16.gmra.mxu0 %v542
    %v1750 = vpop.f32.mrf.mxu0
    %v1751 = vadd.f32 %v1218, %v1750
    %v1752 = vpop.f32.mrf.mxu0
    %v1753 = vadd.f32 %v1218, %v1752
    %1754 = vmatmul.bf16.gmra.mxu0 %v543
    %v1755 = vpop.f32.mrf.mxu0
    %v1756 = vadd.f32 %v1218, %v1755
    %v1757 = vpop.f32.mrf.mxu0
    %v1758 = vadd.f32 %v1218, %v1757
    %1759 = vmatmul.bf16.gmra.mxu0 %v544
    %v1760 = vpop.f32.mrf.mxu0
    %v1761 = vadd.f32 %v1218, %v1760
    %v1762 = vpop.f32.mrf.mxu0
    %v1763 = vadd.f32 %v1218, %v1762
    %1764 = vmatmul.bf16.gmra.mxu0 %v545
    %v1765 = vpop.f32.mrf.mxu0
    %v1766 = vadd.f32 %v1218, %v1765
    %v1767 = vpop.f32.mrf.mxu0
    %v1768 = vadd.f32 %v1218, %v1767
    %1769 = vmatmul.bf16.gmra.mxu0 %v546
    %v1770 = vpop.f32.mrf.mxu0
    %v1771 = vadd.f32 %v1218, %v1770
    %v1772 = vpop.f32.mrf.mxu0
    %v1773 = vadd.f32 %v1218, %v1772
    %1774 = vmatmul.bf16.gmra.mxu0 %v547
    %v1775 = vpop.f32.mrf.mxu0
    %v1776 = vadd.f32 %v1218, %v1775
    %v1777 = vpop.f32.mrf.mxu0
    %v1778 = vadd.f32 %v1218, %v1777
    %1779 = vdwg.mxu0
    %1780 = vmatpush.bf16.msra.mxu0 0
    %1781 = vmatpush.bf16.msra.mxu0 0
    %1782 = vmatpush.bf16.msra.mxu0 0
    %1783 = vmatpush.bf16.msra.mxu0 0
    %1784 = vmatpush.bf16.msra.mxu0 0
    %1785 = vmatpush.bf16.msra.mxu0 0
    %1786 = vmatpush.bf16.msra.mxu0 %v1300
    %1787 = vmatpush.bf16.msra.mxu0 %v1298
    %1788 = vmatmul.bf16.gmra.mxu0 %v1322
    %v1789 = vpop.f32.mrf.mxu0
    %v1790 = vadd.f32 %v1661, %v1789
    %v1791 = vpop.f32.mrf.mxu0
    %v1792 = vadd.f32 %v1663, %v1791
    %1793 = vmatmul.bf16.gmra.mxu0 %v1325
    %v1794 = vpop.f32.mrf.mxu0
    %v1795 = vadd.f32 %v1666, %v1794
    %v1796 = vpop.f32.mrf.mxu0
    %v1797 = vadd.f32 %v1668, %v1796
    %1798 = vmatmul.bf16.gmra.mxu0 %v1328
    %v1799 = vpop.f32.mrf.mxu0
    %v1800 = vadd.f32 %v1671, %v1799
    %v1801 = vpop.f32.mrf.mxu0
    %v1802 = vadd.f32 %v1673, %v1801
    %1803 = vmatmul.bf16.gmra.mxu0 %v1331
    %v1804 = vpop.f32.mrf.mxu0
    %v1805 = vadd.f32 %v1676, %v1804
    %v1806 = vpop.f32.mrf.mxu0
    %v1807 = vadd.f32 %v1678, %v1806
    %1808 = vmatmul.bf16.gmra.mxu0 %v1334
    %v1809 = vpop.f32.mrf.mxu0
    %v1810 = vadd.f32 %v1681, %v1809
    %v1811 = vpop.f32.mrf.mxu0
    %v1812 = vadd.f32 %v1683, %v1811
    %1813 = vmatmul.bf16.gmra.mxu0 %v1337
    %v1814 = vpop.f32.mrf.mxu0
    %v1815 = vadd.f32 %v1686, %v1814
    %v1816 = vpop.f32.mrf.mxu0
    %v1817 = vadd.f32 %v1688, %v1816
    %1818 = vmatmul.bf16.gmra.mxu0 %v1340
    %v1819 = vpop.f32.mrf.mxu0
    %v1820 = vadd.f32 %v1691, %v1819
    %v1821 = vpop.f32.mrf.mxu0
    %v1822 = vadd.f32 %v1693, %v1821
    %1823 = vmatmul.bf16.gmra.mxu0 %v1343
    %v1824 = vpop.f32.mrf.mxu0
    %v1825 = vadd.f32 %v1696, %v1824
    %v1826 = vpop.f32.mrf.mxu0
    %v1827 = vadd.f32 %v1698, %v1826
    %1828 = vmatmul.bf16.gmra.mxu0 %v1346
    %v1829 = vpop.f32.mrf.mxu0
    %v1830 = vadd.f32 %v1701, %v1829
    %v1831 = vpop.f32.mrf.mxu0
    %v1832 = vadd.f32 %v1703, %v1831
    %1833 = vmatmul.bf16.gmra.mxu0 %v1349
    %v1834 = vpop.f32.mrf.mxu0
    %v1835 = vadd.f32 %v1706, %v1834
    %v1836 = vpop.f32.mrf.mxu0
    %v1837 = vadd.f32 %v1708, %v1836
    %1838 = vmatmul.bf16.gmra.mxu0 %v1352
    %v1839 = vpop.f32.mrf.mxu0
    %v1840 = vadd.f32 %v1711, %v1839
    %v1841 = vpop.f32.mrf.mxu0
    %v1842 = vadd.f32 %v1713, %v1841
    %1843 = vmatmul.bf16.gmra.mxu0 %v1355
    %v1844 = vpop.f32.mrf.mxu0
    %v1845 = vadd.f32 %v1716, %v1844
    %v1846 = vpop.f32.mrf.mxu0
    %v1847 = vadd.f32 %v1718, %v1846
    %1848 = vmatmul.bf16.gmra.mxu0 %v1358
    %v1849 = vpop.f32.mrf.mxu0
    %v1850 = vadd.f32 %v1721, %v1849
    %v1851 = vpop.f32.mrf.mxu0
    %v1852 = vadd.f32 %v1723, %v1851
    %1853 = vmatmul.bf16.gmra.mxu0 %v1361
    %v1854 = vpop.f32.mrf.mxu0
    %v1855 = vadd.f32 %v1726, %v1854
    %v1856 = vpop.f32.mrf.mxu0
    %v1857 = vadd.f32 %v1728, %v1856
    %1858 = vmatmul.bf16.gmra.mxu0 %v1364
    %v1859 = vpop.f32.mrf.mxu0
    %v1860 = vadd.f32 %v1731, %v1859
    %v1861 = vpop.f32.mrf.mxu0
    %v1862 = vadd.f32 %v1733, %v1861
    %1863 = vmatmul.bf16.gmra.mxu0 %v1367
    %v1864 = vpop.f32.mrf.mxu0
    %v1865 = vadd.f32 %v1736, %v1864
    %v1866 = vpop.f32.mrf.mxu0
    %v1867 = vadd.f32 %v1738, %v1866
    %1868 = vmatmul.bf16.gmra.mxu0 %v1370
    %v1869 = vpop.f32.mrf.mxu0
    %v1870 = vadd.f32 %v1741, %v1869
    %v1871 = vpop.f32.mrf.mxu0
    %v1872 = vadd.f32 %v1743, %v1871
    %1873 = vmatmul.bf16.gmra.mxu0 %v1373
    %v1874 = vpop.f32.mrf.mxu0
    %v1875 = vadd.f32 %v1746, %v1874
    %v1876 = vpop.f32.mrf.mxu0
    %v1877 = vadd.f32 %v1748, %v1876
    %1878 = vmatmul.bf16.gmra.mxu0 %v1376
    %v1879 = vpop.f32.mrf.mxu0
    %v1880 = vadd.f32 %v1751, %v1879
    %v1881 = vpop.f32.mrf.mxu0
    %v1882 = vadd.f32 %v1753, %v1881
    %1883 = vmatmul.bf16.gmra.mxu0 %v1379
    %v1884 = vpop.f32.mrf.mxu0
    %v1885 = vadd.f32 %v1756, %v1884
    %v1886 = vpop.f32.mrf.mxu0
    %v1887 = vadd.f32 %v1758, %v1886
    %1888 = vmatmul.bf16.gmra.mxu0 %v1382
    %v1889 = vpop.f32.mrf.mxu0
    %v1890 = vadd.f32 %v1761, %v1889
    %v1891 = vpop.f32.mrf.mxu0
    %v1892 = vadd.f32 %v1763, %v1891
    %1893 = vmatmul.bf16.gmra.mxu0 %v1385
    %v1894 = vpop.f32.mrf.mxu0
    %v1895 = vadd.f32 %v1766, %v1894
    %v1896 = vpop.f32.mrf.mxu0
    %v1897 = vadd.f32 %v1768, %v1896
    %1898 = vmatmul.bf16.gmra.mxu0 %v1388
    %v1899 = vpop.f32.mrf.mxu0
    %v1900 = vadd.f32 %v1771, %v1899
    %v1901 = vpop.f32.mrf.mxu0
    %v1902 = vadd.f32 %v1773, %v1901
    %1903 = vmatmul.bf16.gmra.mxu0 %v1391
    %v1904 = vpop.f32.mrf.mxu0
    %v1905 = vadd.f32 %v1776, %v1904
    %v1906 = vpop.f32.mrf.mxu0
    %v1907 = vadd.f32 %v1778, %v1906
    %1908 = vdwg.mxu0
    %v1909 = vmax.f32 %v1532, 0.0
    %v1910 = vmax.f32 %v1790, 0.0
    %v1911 = vmax.f32 %v1534, 0.0
    %v1912 = vmax.f32 %v1792, 0.0
    %v1913 = vmax.f32 %v1537, 0.0
    %v1914 = vmax.f32 %v1795, 0.0
    %v1915 = vmax.f32 %v1539, 0.0
    %v1916 = vmax.f32 %v1797, 0.0
    %v1917 = vmax.f32 %v1542, 0.0
    %v1918 = vmax.f32 %v1800, 0.0
    %v1919 = vmax.f32 %v1544, 0.0
    %v1920 = vmax.f32 %v1802, 0.0
    %v1921 = vmax.f32 %v1547, 0.0
    %v1922 = vmax.f32 %v1805, 0.0
    %v1923 = vmax.f32 %v1549, 0.0
    %v1924 = vmax.f32 %v1807, 0.0
    %v1925 = vmax.f32 %v1552, 0.0
    %v1926 = vmax.f32 %v1810, 0.0
    %v1927 = vmax.f32 %v1554, 0.0
    %v1928 = vmax.f32 %v1812, 0.0
    %v1929 = vmax.f32 %v1557, 0.0
    %v1930 = vmax.f32 %v1815, 0.0
    %v1931 = vmax.f32 %v1559, 0.0
    %v1932 = vmax.f32 %v1817, 0.0
    %v1933 = vmax.f32 %v1562, 0.0
    %v1934 = vmax.f32 %v1820, 0.0
    %v1935 = vmax.f32 %v1564, 0.0
    %v1936 = vmax.f32 %v1822, 0.0
    %v1937 = vmax.f32 %v1567, 0.0
    %v1938 = vmax.f32 %v1825, 0.0
    %v1939 = vmax.f32 %v1569, 0.0
    %v1940 = vmax.f32 %v1827, 0.0
    %v1941 = vmax.f32 %v1572, 0.0
    %v1942 = vmax.f32 %v1830, 0.0
    %v1943 = vmax.f32 %v1574, 0.0
    %v1944 = vmax.f32 %v1832, 0.0
    %v1945 = vmax.f32 %v1577, 0.0
    %v1946 = vmax.f32 %v1835, 0.0
    %v1947 = vmax.f32 %v1579, 0.0
    %v1948 = vmax.f32 %v1837, 0.0
    %v1949 = vmax.f32 %v1582, 0.0
    %v1950 = vmax.f32 %v1840, 0.0
    %v1951 = vmax.f32 %v1584, 0.0
    %v1952 = vmax.f32 %v1842, 0.0
    %v1953 = vmax.f32 %v1587, 0.0
    %v1954 = vmax.f32 %v1845, 0.0
    %v1955 = vmax.f32 %v1589, 0.0
    %v1956 = vmax.f32 %v1847, 0.0
    %v1957 = vmax.f32 %v1592, 0.0
    %v1958 = vmax.f32 %v1850, 0.0
    %v1959 = vmax.f32 %v1594, 0.0
    %v1960 = vmax.f32 %v1852, 0.0
    %v1961 = vmax.f32 %v1597, 0.0
    %v1962 = vmax.f32 %v1855, 0.0
    %v1963 = vmax.f32 %v1599, 0.0
    %v1964 = vmax.f32 %v1857, 0.0
    %v1965 = vmax.f32 %v1602, 0.0
    %v1966 = vmax.f32 %v1860, 0.0
    %v1967 = vmax.f32 %v1604, 0.0
    %v1968 = vmax.f32 %v1862, 0.0
    %v1969 = vmax.f32 %v1607, 0.0
    %v1970 = vmax.f32 %v1865, 0.0
    %v1971 = vmax.f32 %v1609, 0.0
    %v1972 = vmax.f32 %v1867, 0.0
    %v1973 = vmax.f32 %v1612, 0.0
    %v1974 = vmax.f32 %v1870, 0.0
    %v1975 = vmax.f32 %v1614, 0.0
    %v1976 = vmax.f32 %v1872, 0.0
    %v1977 = vmax.f32 %v1617, 0.0
    %v1978 = vmax.f32 %v1875, 0.0
    %v1979 = vmax.f32 %v1619, 0.0
    %v1980 = vmax.f32 %v1877, 0.0
    %v1981 = vmax.f32 %v1622, 0.0
    %v1982 = vmax.f32 %v1880, 0.0
    %v1983 = vmax.f32 %v1624, 0.0
    %v1984 = vmax.f32 %v1882, 0.0
    %v1985 = vmax.f32 %v1627, 0.0
    %v1986 = vmax.f32 %v1885, 0.0
    %v1987 = vmax.f32 %v1629, 0.0
    %v1988 = vmax.f32 %v1887, 0.0
    %v1989 = vmax.f32 %v1632, 0.0
    %v1990 = vmax.f32 %v1890, 0.0
    %v1991 = vmax.f32 %v1634, 0.0
    %v1992 = vmax.f32 %v1892, 0.0
    %v1993 = vmax.f32 %v1637, 0.0
    %v1994 = vmax.f32 %v1895, 0.0
    %v1995 = vmax.f32 %v1639, 0.0
    %v1996 = vmax.f32 %v1897, 0.0
    %v1997 = vmax.f32 %v1642, 0.0
    %v1998 = vmax.f32 %v1900, 0.0
    %v1999 = vmax.f32 %v1644, 0.0
    %v2000 = vmax.f32 %v1902, 0.0
    %v2001 = vmax.f32 %v1647, 0.0
    %v2002 = vmax.f32 %v1905, 0.0
    %v2003 = vmax.f32 %v1649, 0.0
    %v2004 = vmax.f32 %v1907, 0.0
    %v2005 = vpack.c.bf16 %v1911, %v1909
    %v2006 = vpack.c.bf16 %v1912, %v1910
    %v2007 = vpack.c.bf16 %v1915, %v1913
    %v2008 = vpack.c.bf16 %v1916, %v1914
    %v2009 = vpack.c.bf16 %v1919, %v1917
    %v2010 = vpack.c.bf16 %v1920, %v1918
    %v2011 = vpack.c.bf16 %v1923, %v1921
    %v2012 = vpack.c.bf16 %v1924, %v1922
    %v2013 = vpack.c.bf16 %v1927, %v1925
    %v2014 = vpack.c.bf16 %v1928, %v1926
    %v2015 = vpack.c.bf16 %v1931, %v1929
    %v2016 = vpack.c.bf16 %v1932, %v1930
    %v2017 = vpack.c.bf16 %v1935, %v1933
    %v2018 = vpack.c.bf16 %v1936, %v1934
    %v2019 = vpack.c.bf16 %v1939, %v1937
    %v2020 = vpack.c.bf16 %v1940, %v1938
    %v2021 = vpack.c.bf16 %v1943, %v1941
    %v2022 = vpack.c.bf16 %v1944, %v1942
    %v2023 = vpack.c.bf16 %v1947, %v1945
    %v2024 = vpack.c.bf16 %v1948, %v1946
    %v2025 = vpack.c.bf16 %v1951, %v1949
    %v2026 = vpack.c.bf16 %v1952, %v1950
    %v2027 = vpack.c.bf16 %v1955, %v1953
    %v2028 = vpack.c.bf16 %v1956, %v1954
    %v2029 = vpack.c.bf16 %v1959, %v1957
    %v2030 = vpack.c.bf16 %v1960, %v1958
    %v2031 = vpack.c.bf16 %v1963, %v1961
    %v2032 = vpack.c.bf16 %v1964, %v1962
    %v2033 = vpack.c.bf16 %v1967, %v1965
    %v2034 = vpack.c.bf16 %v1968, %v1966
    %v2035 = vpack.c.bf16 %v1971, %v1969
    %v2036 = vpack.c.bf16 %v1972, %v1970
    %v2037 = vpack.c.bf16 %v1975, %v1973
    %v2038 = vpack.c.bf16 %v1976, %v1974
    %v2039 = vpack.c.bf16 %v1979, %v1977
    %v2040 = vpack.c.bf16 %v1980, %v1978
    %v2041 = vpack.c.bf16 %v1983, %v1981
    %v2042 = vpack.c.bf16 %v1984, %v1982
    %v2043 = vpack.c.bf16 %v1987, %v1985
    %v2044 = vpack.c.bf16 %v1988, %v1986
    %v2045 = vpack.c.bf16 %v1991, %v1989
    %v2046 = vpack.c.bf16 %v1992, %v1990
    %v2047 = vpack.c.bf16 %v1995, %v1993
    %v2048 = vpack.c.bf16 %v1996, %v1994
    %v2049 = vpack.c.bf16 %v1999, %v1997
    %v2050 = vpack.c.bf16 %v2000, %v1998
    %v2051 = vpack.c.bf16 %v2003, %v2001
    %v2052 = vpack.c.bf16 %v2004, %v2002
    %v2053 = vld [vmem:[%s8] sm:$0xff]
    %v2054 = vld [vmem:[%s8 + $0x8] sm:$0xff]
    %v2055 = vld [vmem:[%s8 + $0x10] sm:$0xff]
    %v2056 = vld [vmem:[%s8 + $0x18] sm:$0xff]
    %v2057 = vld [vmem:[%s8 + $0x20] sm:$0xff]
    %v2058 = vld [vmem:[%s8 + $0x28] sm:$0xff]
    %v2059 = vld [vmem:[%s8 + $0x30] sm:$0xff]
    %v2060 = vld [vmem:[%s8 + $0x38] sm:$0xff]
    %v2061 = vld [vmem:[%s8 + $0x40] sm:$0xff]
    %v2062 = vld [vmem:[%s8 + $0x48] sm:$0xff]
    %v2063 = vld [vmem:[%s8 + $0x50] sm:$0xff]
    %v2064 = vld [vmem:[%s8 + $0x58] sm:$0xff]
    %v2065 = vld [vmem:[%s8 + $0x60] sm:$0xff]
    %v2066 = vld [vmem:[%s8 + $0x68] sm:$0xff]
    %v2067 = vld [vmem:[%s8 + $0x70] sm:$0xff]
    %v2068 = vld [vmem:[%s8 + $0x78] sm:$0xff]
    %v2069 = vld [vmem:[%s8 + $0x80] sm:$0xff]
    %v2070 = vld [vmem:[%s8 + $0x88] sm:$0xff]
    %v2071 = vld [vmem:[%s8 + $0x90] sm:$0xff]
    %v2072 = vld [vmem:[%s8 + $0x98] sm:$0xff]
    %v2073 = vld [vmem:[%s9] sm:$0x3]
    %v2075 = vperm.slane %v2073, 0
    %v2076 = vperm.slane %v2073, 1
    %v2099 = vunpack.c.l.b16 %v2053
    %v2100 = vunpack.c.h.b16 %v2053
    %v2101 = vunpack.c.l.b16 %v2054
    %v2102 = vunpack.c.h.b16 %v2054
    %v2103 = vunpack.c.l.b16 %v2055
    %v2104 = vunpack.c.h.b16 %v2055
    %v2105 = vunpack.c.l.b16 %v2056
    %v2106 = vunpack.c.h.b16 %v2056
    %v2107 = vunpack.c.l.b16 %v2057
    %v2108 = vunpack.c.h.b16 %v2057
    %v2109 = vunpack.c.l.b16 %v2058
    %v2110 = vunpack.c.h.b16 %v2058
    %v2111 = vunpack.c.l.b16 %v2059
    %v2112 = vunpack.c.h.b16 %v2059
    %v2113 = vunpack.c.l.b16 %v2060
    %v2114 = vunpack.c.h.b16 %v2060
    %v2115 = vunpack.c.l.b16 %v2061
    %v2116 = vunpack.c.h.b16 %v2061
    %v2117 = vunpack.c.l.b16 %v2062
    %v2118 = vunpack.c.h.b16 %v2062
    %v2119 = vunpack.c.l.b16 %v2063
    %v2120 = vunpack.c.h.b16 %v2063
    %v2121 = vunpack.c.l.b16 %v2064
    %v2122 = vunpack.c.h.b16 %v2064
    %v2123 = vunpack.c.l.b16 %v2065
    %v2124 = vunpack.c.h.b16 %v2065
    %v2125 = vunpack.c.l.b16 %v2066
    %v2126 = vunpack.c.h.b16 %v2066
    %v2127 = vunpack.c.l.b16 %v2067
    %v2128 = vunpack.c.h.b16 %v2067
    %v2129 = vunpack.c.l.b16 %v2068
    %v2130 = vunpack.c.h.b16 %v2068
    %v2131 = vunpack.c.l.b16 %v2069
    %v2132 = vunpack.c.h.b16 %v2069
    %v2133 = vunpack.c.l.b16 %v2070
    %v2134 = vunpack.c.h.b16 %v2070
    %v2135 = vunpack.c.l.b16 %v2071
    %v2136 = vunpack.c.h.b16 %v2071
    %v2137 = vunpack.c.l.b16 %v2072
    %v2138 = vunpack.c.h.b16 %v2072
    %v2139 = vpack.c.b16 %v2101, %v2099
    %v2140 = vpack.c.b16 %v2102, %v2100
    %v2141 = vpack.c.b16 %v2105, %v2103
    %v2142 = vpack.c.b16 %v2106, %v2104
    %v2143 = vpack.c.b16 %v2109, %v2107
    %v2144 = vpack.c.b16 %v2110, %v2108
    %v2145 = vpack.c.b16 %v2113, %v2111
    %v2146 = vpack.c.b16 %v2114, %v2112
    %v2147 = vpack.c.b16 %v2117, %v2115
    %v2148 = vpack.c.b16 %v2118, %v2116
    %v2149 = vpack.c.b16 %v2121, %v2119
    %v2150 = vpack.c.b16 %v2122, %v2120
    %v2151 = vpack.c.b16 %v2125, %v2123
    %v2152 = vpack.c.b16 %v2126, %v2124
    %v2153 = vpack.c.b16 %v2129, %v2127
    %v2154 = vpack.c.b16 %v2130, %v2128
    %v2155 = vpack.c.b16 %v2133, %v2131
    %v2156 = vpack.c.b16 %v2134, %v2132
    %v2157 = vpack.c.b16 %v2137, %v2135
    %v2158 = vpack.c.b16 %v2138, %v2136
    %v2180 = vsel %vm145, %v2006, 0
    %v2183 = vsel %vm145, %v2008, 0
    %v2186 = vsel %vm145, %v2010, 0
    %v2189 = vsel %vm145, %v2012, 0
    %v2192 = vsel %vm145, %v2014, 0
    %v2195 = vsel %vm145, %v2016, 0
    %v2198 = vsel %vm145, %v2018, 0
    %v2201 = vsel %vm145, %v2020, 0
    %v2204 = vsel %vm145, %v2022, 0
    %v2207 = vsel %vm145, %v2024, 0
    %v2210 = vsel %vm145, %v2026, 0
    %v2213 = vsel %vm145, %v2028, 0
    %v2216 = vsel %vm145, %v2030, 0
    %v2219 = vsel %vm145, %v2032, 0
    %v2222 = vsel %vm145, %v2034, 0
    %v2225 = vsel %vm145, %v2036, 0
    %v2228 = vsel %vm145, %v2038, 0
    %v2231 = vsel %vm145, %v2040, 0
    %v2234 = vsel %vm145, %v2042, 0
    %v2237 = vsel %vm145, %v2044, 0
    %v2240 = vsel %vm145, %v2046, 0
    %v2243 = vsel %vm145, %v2048, 0
    %v2246 = vsel %vm145, %v2050, 0
    %v2249 = vsel %vm145, %v2052, 0
    %2251 = vmatpush.bf16.msra.mxu0 %v2153
    %2252 = vmatpush.bf16.msra.mxu0 %v2151
    %2253 = vmatpush.bf16.msra.mxu0 %v2149
    %2254 = vmatpush.bf16.msra.mxu0 %v2147
    %2255 = vmatpush.bf16.msra.mxu0 %v2145
    %2256 = vmatpush.bf16.msra.mxu0 %v2143
    %2257 = vmatpush.bf16.msra.mxu0 %v2141
    %2258 = vmatpush.bf16.msra.mxu0 %v2139
    %2259 = vmatmul.bf16.gmra.mxu0 %v2005
    %v2260 = vpop.f32.mrf.mxu0
    %v2261 = vadd.f32 %v2075, %v2260
    %v2262 = vpop.f32.mrf.mxu0
    %v2263 = vadd.f32 %v2075, %v2262
    %2264 = vmatmul.bf16.gmra.mxu0 %v2007
    %v2265 = vpop.f32.mrf.mxu0
    %v2266 = vadd.f32 %v2075, %v2265
    %v2267 = vpop.f32.mrf.mxu0
    %v2268 = vadd.f32 %v2075, %v2267
    %2269 = vmatmul.bf16.gmra.mxu0 %v2009
    %v2270 = vpop.f32.mrf.mxu0
    %v2271 = vadd.f32 %v2075, %v2270
    %v2272 = vpop.f32.mrf.mxu0
    %v2273 = vadd.f32 %v2075, %v2272
    %2274 = vmatmul.bf16.gmra.mxu0 %v2011
    %v2275 = vpop.f32.mrf.mxu0
    %v2276 = vadd.f32 %v2075, %v2275
    %v2277 = vpop.f32.mrf.mxu0
    %v2278 = vadd.f32 %v2075, %v2277
    %2279 = vmatmul.bf16.gmra.mxu0 %v2013
    %v2280 = vpop.f32.mrf.mxu0
    %v2281 = vadd.f32 %v2075, %v2280
    %v2282 = vpop.f32.mrf.mxu0
    %v2283 = vadd.f32 %v2075, %v2282
    %2284 = vmatmul.bf16.gmra.mxu0 %v2015
    %v2285 = vpop.f32.mrf.mxu0
    %v2286 = vadd.f32 %v2075, %v2285
    %v2287 = vpop.f32.mrf.mxu0
    %v2288 = vadd.f32 %v2075, %v2287
    %2289 = vmatmul.bf16.gmra.mxu0 %v2017
    %v2290 = vpop.f32.mrf.mxu0
    %v2291 = vadd.f32 %v2075, %v2290
    %v2292 = vpop.f32.mrf.mxu0
    %v2293 = vadd.f32 %v2075, %v2292
    %2294 = vmatmul.bf16.gmra.mxu0 %v2019
    %v2295 = vpop.f32.mrf.mxu0
    %v2296 = vadd.f32 %v2075, %v2295
    %v2297 = vpop.f32.mrf.mxu0
    %v2298 = vadd.f32 %v2075, %v2297
    %2299 = vmatmul.bf16.gmra.mxu0 %v2021
    %v2300 = vpop.f32.mrf.mxu0
    %v2301 = vadd.f32 %v2075, %v2300
    %v2302 = vpop.f32.mrf.mxu0
    %v2303 = vadd.f32 %v2075, %v2302
    %2304 = vmatmul.bf16.gmra.mxu0 %v2023
    %v2305 = vpop.f32.mrf.mxu0
    %v2306 = vadd.f32 %v2075, %v2305
    %v2307 = vpop.f32.mrf.mxu0
    %v2308 = vadd.f32 %v2075, %v2307
    %2309 = vmatmul.bf16.gmra.mxu0 %v2025
    %v2310 = vpop.f32.mrf.mxu0
    %v2311 = vadd.f32 %v2075, %v2310
    %v2312 = vpop.f32.mrf.mxu0
    %v2313 = vadd.f32 %v2075, %v2312
    %2314 = vmatmul.bf16.gmra.mxu0 %v2027
    %v2315 = vpop.f32.mrf.mxu0
    %v2316 = vadd.f32 %v2075, %v2315
    %v2317 = vpop.f32.mrf.mxu0
    %v2318 = vadd.f32 %v2075, %v2317
    %2319 = vmatmul.bf16.gmra.mxu0 %v2029
    %v2320 = vpop.f32.mrf.mxu0
    %v2321 = vadd.f32 %v2075, %v2320
    %v2322 = vpop.f32.mrf.mxu0
    %v2323 = vadd.f32 %v2075, %v2322
    %2324 = vmatmul.bf16.gmra.mxu0 %v2031
    %v2325 = vpop.f32.mrf.mxu0
    %v2326 = vadd.f32 %v2075, %v2325
    %v2327 = vpop.f32.mrf.mxu0
    %v2328 = vadd.f32 %v2075, %v2327
    %2329 = vmatmul.bf16.gmra.mxu0 %v2033
    %v2330 = vpop.f32.mrf.mxu0
    %v2331 = vadd.f32 %v2075, %v2330
    %v2332 = vpop.f32.mrf.mxu0
    %v2333 = vadd.f32 %v2075, %v2332
    %2334 = vmatmul.bf16.gmra.mxu0 %v2035
    %v2335 = vpop.f32.mrf.mxu0
    %v2336 = vadd.f32 %v2075, %v2335
    %v2337 = vpop.f32.mrf.mxu0
    %v2338 = vadd.f32 %v2075, %v2337
    %2339 = vmatmul.bf16.gmra.mxu0 %v2037
    %v2340 = vpop.f32.mrf.mxu0
    %v2341 = vadd.f32 %v2075, %v2340
    %v2342 = vpop.f32.mrf.mxu0
    %v2343 = vadd.f32 %v2075, %v2342
    %2344 = vmatmul.bf16.gmra.mxu0 %v2039
    %v2345 = vpop.f32.mrf.mxu0
    %v2346 = vadd.f32 %v2075, %v2345
    %v2347 = vpop.f32.mrf.mxu0
    %v2348 = vadd.f32 %v2075, %v2347
    %2349 = vmatmul.bf16.gmra.mxu0 %v2041
    %v2350 = vpop.f32.mrf.mxu0
    %v2351 = vadd.f32 %v2075, %v2350
    %v2352 = vpop.f32.mrf.mxu0
    %v2353 = vadd.f32 %v2075, %v2352
    %2354 = vmatmul.bf16.gmra.mxu0 %v2043
    %v2355 = vpop.f32.mrf.mxu0
    %v2356 = vadd.f32 %v2075, %v2355
    %v2357 = vpop.f32.mrf.mxu0
    %v2358 = vadd.f32 %v2075, %v2357
    %2359 = vmatmul.bf16.gmra.mxu0 %v2045
    %v2360 = vpop.f32.mrf.mxu0
    %v2361 = vadd.f32 %v2075, %v2360
    %v2362 = vpop.f32.mrf.mxu0
    %v2363 = vadd.f32 %v2075, %v2362
    %2364 = vmatmul.bf16.gmra.mxu0 %v2047
    %v2365 = vpop.f32.mrf.mxu0
    %v2366 = vadd.f32 %v2075, %v2365
    %v2367 = vpop.f32.mrf.mxu0
    %v2368 = vadd.f32 %v2075, %v2367
    %2369 = vmatmul.bf16.gmra.mxu0 %v2049
    %v2370 = vpop.f32.mrf.mxu0
    %v2371 = vadd.f32 %v2075, %v2370
    %v2372 = vpop.f32.mrf.mxu0
    %v2373 = vadd.f32 %v2075, %v2372
    %2374 = vmatmul.bf16.gmra.mxu0 %v2051
    %v2375 = vpop.f32.mrf.mxu0
    %v2376 = vadd.f32 %v2075, %v2375
    %v2377 = vpop.f32.mrf.mxu0
    %v2378 = vadd.f32 %v2075, %v2377
    %2379 = vdwg.mxu0
    %2380 = vmatpush.bf16.msra.mxu0 0
    %2381 = vmatpush.bf16.msra.mxu0 0
    %2382 = vmatpush.bf16.msra.mxu0 0
    %2383 = vmatpush.bf16.msra.mxu0 0
    %2384 = vmatpush.bf16.msra.mxu0 0
    %2385 = vmatpush.bf16.msra.mxu0 0
    %2386 = vmatpush.bf16.msra.mxu0 %v2157
    %2387 = vmatpush.bf16.msra.mxu0 %v2155
    %2388 = vmatmul.bf16.gmra.mxu0 %v2180
    %v2389 = vpop.f32.mrf.mxu0
    %v2390 = vadd.f32 %v2261, %v2389
    %v2391 = vpop.f32.mrf.mxu0
    %v2392 = vadd.f32 %v2263, %v2391
    %2393 = vmatmul.bf16.gmra.mxu0 %v2183
    %v2394 = vpop.f32.mrf.mxu0
    %v2395 = vadd.f32 %v2266, %v2394
    %v2396 = vpop.f32.mrf.mxu0
    %v2397 = vadd.f32 %v2268, %v2396
    %2398 = vmatmul.bf16.gmra.mxu0 %v2186
    %v2399 = vpop.f32.mrf.mxu0
    %v2400 = vadd.f32 %v2271, %v2399
    %v2401 = vpop.f32.mrf.mxu0
    %v2402 = vadd.f32 %v2273, %v2401
    %2403 = vmatmul.bf16.gmra.mxu0 %v2189
    %v2404 = vpop.f32.mrf.mxu0
    %v2405 = vadd.f32 %v2276, %v2404
    %v2406 = vpop.f32.mrf.mxu0
    %v2407 = vadd.f32 %v2278, %v2406
    %2408 = vmatmul.bf16.gmra.mxu0 %v2192
    %v2409 = vpop.f32.mrf.mxu0
    %v2410 = vadd.f32 %v2281, %v2409
    %v2411 = vpop.f32.mrf.mxu0
    %v2412 = vadd.f32 %v2283, %v2411
    %2413 = vmatmul.bf16.gmra.mxu0 %v2195
    %v2414 = vpop.f32.mrf.mxu0
    %v2415 = vadd.f32 %v2286, %v2414
    %v2416 = vpop.f32.mrf.mxu0
    %v2417 = vadd.f32 %v2288, %v2416
    %2418 = vmatmul.bf16.gmra.mxu0 %v2198
    %v2419 = vpop.f32.mrf.mxu0
    %v2420 = vadd.f32 %v2291, %v2419
    %v2421 = vpop.f32.mrf.mxu0
    %v2422 = vadd.f32 %v2293, %v2421
    %2423 = vmatmul.bf16.gmra.mxu0 %v2201
    %v2424 = vpop.f32.mrf.mxu0
    %v2425 = vadd.f32 %v2296, %v2424
    %v2426 = vpop.f32.mrf.mxu0
    %v2427 = vadd.f32 %v2298, %v2426
    %2428 = vmatmul.bf16.gmra.mxu0 %v2204
    %v2429 = vpop.f32.mrf.mxu0
    %v2430 = vadd.f32 %v2301, %v2429
    %v2431 = vpop.f32.mrf.mxu0
    %v2432 = vadd.f32 %v2303, %v2431
    %2433 = vmatmul.bf16.gmra.mxu0 %v2207
    %v2434 = vpop.f32.mrf.mxu0
    %v2435 = vadd.f32 %v2306, %v2434
    %v2436 = vpop.f32.mrf.mxu0
    %v2437 = vadd.f32 %v2308, %v2436
    %2438 = vmatmul.bf16.gmra.mxu0 %v2210
    %v2439 = vpop.f32.mrf.mxu0
    %v2440 = vadd.f32 %v2311, %v2439
    %v2441 = vpop.f32.mrf.mxu0
    %v2442 = vadd.f32 %v2313, %v2441
    %2443 = vmatmul.bf16.gmra.mxu0 %v2213
    %v2444 = vpop.f32.mrf.mxu0
    %v2445 = vadd.f32 %v2316, %v2444
    %v2446 = vpop.f32.mrf.mxu0
    %v2447 = vadd.f32 %v2318, %v2446
    %2448 = vmatmul.bf16.gmra.mxu0 %v2216
    %v2449 = vpop.f32.mrf.mxu0
    %v2450 = vadd.f32 %v2321, %v2449
    %v2451 = vpop.f32.mrf.mxu0
    %v2452 = vadd.f32 %v2323, %v2451
    %2453 = vmatmul.bf16.gmra.mxu0 %v2219
    %v2454 = vpop.f32.mrf.mxu0
    %v2455 = vadd.f32 %v2326, %v2454
    %v2456 = vpop.f32.mrf.mxu0
    %v2457 = vadd.f32 %v2328, %v2456
    %2458 = vmatmul.bf16.gmra.mxu0 %v2222
    %v2459 = vpop.f32.mrf.mxu0
    %v2460 = vadd.f32 %v2331, %v2459
    %v2461 = vpop.f32.mrf.mxu0
    %v2462 = vadd.f32 %v2333, %v2461
    %2463 = vmatmul.bf16.gmra.mxu0 %v2225
    %v2464 = vpop.f32.mrf.mxu0
    %v2465 = vadd.f32 %v2336, %v2464
    %v2466 = vpop.f32.mrf.mxu0
    %v2467 = vadd.f32 %v2338, %v2466
    %2468 = vmatmul.bf16.gmra.mxu0 %v2228
    %v2469 = vpop.f32.mrf.mxu0
    %v2470 = vadd.f32 %v2341, %v2469
    %v2471 = vpop.f32.mrf.mxu0
    %v2472 = vadd.f32 %v2343, %v2471
    %2473 = vmatmul.bf16.gmra.mxu0 %v2231
    %v2474 = vpop.f32.mrf.mxu0
    %v2475 = vadd.f32 %v2346, %v2474
    %v2476 = vpop.f32.mrf.mxu0
    %v2477 = vadd.f32 %v2348, %v2476
    %2478 = vmatmul.bf16.gmra.mxu0 %v2234
    %v2479 = vpop.f32.mrf.mxu0
    %v2480 = vadd.f32 %v2351, %v2479
    %v2481 = vpop.f32.mrf.mxu0
    %v2482 = vadd.f32 %v2353, %v2481
    %2483 = vmatmul.bf16.gmra.mxu0 %v2237
    %v2484 = vpop.f32.mrf.mxu0
    %v2485 = vadd.f32 %v2356, %v2484
    %v2486 = vpop.f32.mrf.mxu0
    %v2487 = vadd.f32 %v2358, %v2486
    %2488 = vmatmul.bf16.gmra.mxu0 %v2240
    %v2489 = vpop.f32.mrf.mxu0
    %v2490 = vadd.f32 %v2361, %v2489
    %v2491 = vpop.f32.mrf.mxu0
    %v2492 = vadd.f32 %v2363, %v2491
    %2493 = vmatmul.bf16.gmra.mxu0 %v2243
    %v2494 = vpop.f32.mrf.mxu0
    %v2495 = vadd.f32 %v2366, %v2494
    %v2496 = vpop.f32.mrf.mxu0
    %v2497 = vadd.f32 %v2368, %v2496
    %2498 = vmatmul.bf16.gmra.mxu0 %v2246
    %v2499 = vpop.f32.mrf.mxu0
    %v2500 = vadd.f32 %v2371, %v2499
    %v2501 = vpop.f32.mrf.mxu0
    %v2502 = vadd.f32 %v2373, %v2501
    %2503 = vmatmul.bf16.gmra.mxu0 %v2249
    %v2504 = vpop.f32.mrf.mxu0
    %v2505 = vadd.f32 %v2376, %v2504
    %v2506 = vpop.f32.mrf.mxu0
    %v2507 = vadd.f32 %v2378, %v2506
    %2508 = vdwg.mxu0
    %2509 = vmatpush.bf16.msra.mxu0 %v2154
    %2510 = vmatpush.bf16.msra.mxu0 %v2152
    %2511 = vmatpush.bf16.msra.mxu0 %v2150
    %2512 = vmatpush.bf16.msra.mxu0 %v2148
    %2513 = vmatpush.bf16.msra.mxu0 %v2146
    %2514 = vmatpush.bf16.msra.mxu0 %v2144
    %2515 = vmatpush.bf16.msra.mxu0 %v2142
    %2516 = vmatpush.bf16.msra.mxu0 %v2140
    %2517 = vmatmul.bf16.gmra.mxu0 %v2005
    %v2518 = vpop.f32.mrf.mxu0
    %v2519 = vadd.f32 %v2076, %v2518
    %v2520 = vpop.f32.mrf.mxu0
    %v2521 = vadd.f32 %v2076, %v2520
    %2522 = vmatmul.bf16.gmra.mxu0 %v2007
    %v2523 = vpop.f32.mrf.mxu0
    %v2524 = vadd.f32 %v2076, %v2523
    %v2525 = vpop.f32.mrf.mxu0
    %v2526 = vadd.f32 %v2076, %v2525
    %2527 = vmatmul.bf16.gmra.mxu0 %v2009
    %v2528 = vpop.f32.mrf.mxu0
    %v2529 = vadd.f32 %v2076, %v2528
    %v2530 = vpop.f32.mrf.mxu0
    %v2531 = vadd.f32 %v2076, %v2530
    %2532 = vmatmul.bf16.gmra.mxu0 %v2011
    %v2533 = vpop.f32.mrf.mxu0
    %v2534 = vadd.f32 %v2076, %v2533
    %v2535 = vpop.f32.mrf.mxu0
    %v2536 = vadd.f32 %v2076, %v2535
    %2537 = vmatmul.bf16.gmra.mxu0 %v2013
    %v2538 = vpop.f32.mrf.mxu0
    %v2539 = vadd.f32 %v2076, %v2538
    %v2540 = vpop.f32.mrf.mxu0
    %v2541 = vadd.f32 %v2076, %v2540
    %2542 = vmatmul.bf16.gmra.mxu0 %v2015
    %v2543 = vpop.f32.mrf.mxu0
    %v2544 = vadd.f32 %v2076, %v2543
    %v2545 = vpop.f32.mrf.mxu0
    %v2546 = vadd.f32 %v2076, %v2545
    %2547 = vmatmul.bf16.gmra.mxu0 %v2017
    %v2548 = vpop.f32.mrf.mxu0
    %v2549 = vadd.f32 %v2076, %v2548
    %v2550 = vpop.f32.mrf.mxu0
    %v2551 = vadd.f32 %v2076, %v2550
    %2552 = vmatmul.bf16.gmra.mxu0 %v2019
    %v2553 = vpop.f32.mrf.mxu0
    %v2554 = vadd.f32 %v2076, %v2553
    %v2555 = vpop.f32.mrf.mxu0
    %v2556 = vadd.f32 %v2076, %v2555
    %2557 = vmatmul.bf16.gmra.mxu0 %v2021
    %v2558 = vpop.f32.mrf.mxu0
    %v2559 = vadd.f32 %v2076, %v2558
    %v2560 = vpop.f32.mrf.mxu0
    %v2561 = vadd.f32 %v2076, %v2560
    %2562 = vmatmul.bf16.gmra.mxu0 %v2023
    %v2563 = vpop.f32.mrf.mxu0
    %v2564 = vadd.f32 %v2076, %v2563
    %v2565 = vpop.f32.mrf.mxu0
    %v2566 = vadd.f32 %v2076, %v2565
    %2567 = vmatmul.bf16.gmra.mxu0 %v2025
    %v2568 = vpop.f32.mrf.mxu0
    %v2569 = vadd.f32 %v2076, %v2568
    %v2570 = vpop.f32.mrf.mxu0
    %v2571 = vadd.f32 %v2076, %v2570
    %2572 = vmatmul.bf16.gmra.mxu0 %v2027
    %v2573 = vpop.f32.mrf.mxu0
    %v2574 = vadd.f32 %v2076, %v2573
    %v2575 = vpop.f32.mrf.mxu0
    %v2576 = vadd.f32 %v2076, %v2575
    %2577 = vmatmul.bf16.gmra.mxu0 %v2029
    %v2578 = vpop.f32.mrf.mxu0
    %v2579 = vadd.f32 %v2076, %v2578
    %v2580 = vpop.f32.mrf.mxu0
    %v2581 = vadd.f32 %v2076, %v2580
    %2582 = vmatmul.bf16.gmra.mxu0 %v2031
    %v2583 = vpop.f32.mrf.mxu0
    %v2584 = vadd.f32 %v2076, %v2583
    %v2585 = vpop.f32.mrf.mxu0
    %v2586 = vadd.f32 %v2076, %v2585
    %2587 = vmatmul.bf16.gmra.mxu0 %v2033
    %v2588 = vpop.f32.mrf.mxu0
    %v2589 = vadd.f32 %v2076, %v2588
    %v2590 = vpop.f32.mrf.mxu0
    %v2591 = vadd.f32 %v2076, %v2590
    %2592 = vmatmul.bf16.gmra.mxu0 %v2035
    %v2593 = vpop.f32.mrf.mxu0
    %v2594 = vadd.f32 %v2076, %v2593
    %v2595 = vpop.f32.mrf.mxu0
    %v2596 = vadd.f32 %v2076, %v2595
    %2597 = vmatmul.bf16.gmra.mxu0 %v2037
    %v2598 = vpop.f32.mrf.mxu0
    %v2599 = vadd.f32 %v2076, %v2598
    %v2600 = vpop.f32.mrf.mxu0
    %v2601 = vadd.f32 %v2076, %v2600
    %2602 = vmatmul.bf16.gmra.mxu0 %v2039
    %v2603 = vpop.f32.mrf.mxu0
    %v2604 = vadd.f32 %v2076, %v2603
    %v2605 = vpop.f32.mrf.mxu0
    %v2606 = vadd.f32 %v2076, %v2605
    %2607 = vmatmul.bf16.gmra.mxu0 %v2041
    %v2608 = vpop.f32.mrf.mxu0
    %v2609 = vadd.f32 %v2076, %v2608
    %v2610 = vpop.f32.mrf.mxu0
    %v2611 = vadd.f32 %v2076, %v2610
    %2612 = vmatmul.bf16.gmra.mxu0 %v2043
    %v2613 = vpop.f32.mrf.mxu0
    %v2614 = vadd.f32 %v2076, %v2613
    %v2615 = vpop.f32.mrf.mxu0
    %v2616 = vadd.f32 %v2076, %v2615
    %2617 = vmatmul.bf16.gmra.mxu0 %v2045
    %v2618 = vpop.f32.mrf.mxu0
    %v2619 = vadd.f32 %v2076, %v2618
    %v2620 = vpop.f32.mrf.mxu0
    %v2621 = vadd.f32 %v2076, %v2620
    %2622 = vmatmul.bf16.gmra.mxu0 %v2047
    %v2623 = vpop.f32.mrf.mxu0
    %v2624 = vadd.f32 %v2076, %v2623
    %v2625 = vpop.f32.mrf.mxu0
    %v2626 = vadd.f32 %v2076, %v2625
    %2627 = vmatmul.bf16.gmra.mxu0 %v2049
    %v2628 = vpop.f32.mrf.mxu0
    %v2629 = vadd.f32 %v2076, %v2628
    %v2630 = vpop.f32.mrf.mxu0
    %v2631 = vadd.f32 %v2076, %v2630
    %2632 = vmatmul.bf16.gmra.mxu0 %v2051
    %v2633 = vpop.f32.mrf.mxu0
    %v2634 = vadd.f32 %v2076, %v2633
    %v2635 = vpop.f32.mrf.mxu0
    %v2636 = vadd.f32 %v2076, %v2635
    %2637 = vdwg.mxu0
    %2638 = vmatpush.bf16.msra.mxu0 0
    %2639 = vmatpush.bf16.msra.mxu0 0
    %2640 = vmatpush.bf16.msra.mxu0 0
    %2641 = vmatpush.bf16.msra.mxu0 0
    %2642 = vmatpush.bf16.msra.mxu0 0
    %2643 = vmatpush.bf16.msra.mxu0 0
    %2644 = vmatpush.bf16.msra.mxu0 %v2158
    %2645 = vmatpush.bf16.msra.mxu0 %v2156
    %2646 = vmatmul.bf16.gmra.mxu0 %v2180
    %v2647 = vpop.f32.mrf.mxu0
    %v2648 = vadd.f32 %v2519, %v2647
    %v2649 = vpop.f32.mrf.mxu0
    %v2650 = vadd.f32 %v2521, %v2649
    %2651 = vmatmul.bf16.gmra.mxu0 %v2183
    %v2652 = vpop.f32.mrf.mxu0
    %v2653 = vadd.f32 %v2524, %v2652
    %v2654 = vpop.f32.mrf.mxu0
    %v2655 = vadd.f32 %v2526, %v2654
    %2656 = vmatmul.bf16.gmra.mxu0 %v2186
    %v2657 = vpop.f32.mrf.mxu0
    %v2658 = vadd.f32 %v2529, %v2657
    %v2659 = vpop.f32.mrf.mxu0
    %v2660 = vadd.f32 %v2531, %v2659
    %2661 = vmatmul.bf16.gmra.mxu0 %v2189
    %v2662 = vpop.f32.mrf.mxu0
    %v2663 = vadd.f32 %v2534, %v2662
    %v2664 = vpop.f32.mrf.mxu0
    %v2665 = vadd.f32 %v2536, %v2664
    %2666 = vmatmul.bf16.gmra.mxu0 %v2192
    %v2667 = vpop.f32.mrf.mxu0
    %v2668 = vadd.f32 %v2539, %v2667
    %v2669 = vpop.f32.mrf.mxu0
    %v2670 = vadd.f32 %v2541, %v2669
    %2671 = vmatmul.bf16.gmra.mxu0 %v2195
    %v2672 = vpop.f32.mrf.mxu0
    %v2673 = vadd.f32 %v2544, %v2672
    %v2674 = vpop.f32.mrf.mxu0
    %v2675 = vadd.f32 %v2546, %v2674
    %2676 = vmatmul.bf16.gmra.mxu0 %v2198
    %v2677 = vpop.f32.mrf.mxu0
    %v2678 = vadd.f32 %v2549, %v2677
    %v2679 = vpop.f32.mrf.mxu0
    %v2680 = vadd.f32 %v2551, %v2679
    %2681 = vmatmul.bf16.gmra.mxu0 %v2201
    %v2682 = vpop.f32.mrf.mxu0
    %v2683 = vadd.f32 %v2554, %v2682
    %v2684 = vpop.f32.mrf.mxu0
    %v2685 = vadd.f32 %v2556, %v2684
    %2686 = vmatmul.bf16.gmra.mxu0 %v2204
    %v2687 = vpop.f32.mrf.mxu0
    %v2688 = vadd.f32 %v2559, %v2687
    %v2689 = vpop.f32.mrf.mxu0
    %v2690 = vadd.f32 %v2561, %v2689
    %2691 = vmatmul.bf16.gmra.mxu0 %v2207
    %v2692 = vpop.f32.mrf.mxu0
    %v2693 = vadd.f32 %v2564, %v2692
    %v2694 = vpop.f32.mrf.mxu0
    %v2695 = vadd.f32 %v2566, %v2694
    %2696 = vmatmul.bf16.gmra.mxu0 %v2210
    %v2697 = vpop.f32.mrf.mxu0
    %v2698 = vadd.f32 %v2569, %v2697
    %v2699 = vpop.f32.mrf.mxu0
    %v2700 = vadd.f32 %v2571, %v2699
    %2701 = vmatmul.bf16.gmra.mxu0 %v2213
    %v2702 = vpop.f32.mrf.mxu0
    %v2703 = vadd.f32 %v2574, %v2702
    %v2704 = vpop.f32.mrf.mxu0
    %v2705 = vadd.f32 %v2576, %v2704
    %2706 = vmatmul.bf16.gmra.mxu0 %v2216
    %v2707 = vpop.f32.mrf.mxu0
    %v2708 = vadd.f32 %v2579, %v2707
    %v2709 = vpop.f32.mrf.mxu0
    %v2710 = vadd.f32 %v2581, %v2709
    %2711 = vmatmul.bf16.gmra.mxu0 %v2219
    %v2712 = vpop.f32.mrf.mxu0
    %v2713 = vadd.f32 %v2584, %v2712
    %v2714 = vpop.f32.mrf.mxu0
    %v2715 = vadd.f32 %v2586, %v2714
    %2716 = vmatmul.bf16.gmra.mxu0 %v2222
    %v2717 = vpop.f32.mrf.mxu0
    %v2718 = vadd.f32 %v2589, %v2717
    %v2719 = vpop.f32.mrf.mxu0
    %v2720 = vadd.f32 %v2591, %v2719
    %2721 = vmatmul.bf16.gmra.mxu0 %v2225
    %v2722 = vpop.f32.mrf.mxu0
    %v2723 = vadd.f32 %v2594, %v2722
    %v2724 = vpop.f32.mrf.mxu0
    %v2725 = vadd.f32 %v2596, %v2724
    %2726 = vmatmul.bf16.gmra.mxu0 %v2228
    %v2727 = vpop.f32.mrf.mxu0
    %v2728 = vadd.f32 %v2599, %v2727
    %v2729 = vpop.f32.mrf.mxu0
    %v2730 = vadd.f32 %v2601, %v2729
    %2731 = vmatmul.bf16.gmra.mxu0 %v2231
    %v2732 = vpop.f32.mrf.mxu0
    %v2733 = vadd.f32 %v2604, %v2732
    %v2734 = vpop.f32.mrf.mxu0
    %v2735 = vadd.f32 %v2606, %v2734
    %2736 = vmatmul.bf16.gmra.mxu0 %v2234
    %v2737 = vpop.f32.mrf.mxu0
    %v2738 = vadd.f32 %v2609, %v2737
    %v2739 = vpop.f32.mrf.mxu0
    %v2740 = vadd.f32 %v2611, %v2739
    %2741 = vmatmul.bf16.gmra.mxu0 %v2237
    %v2742 = vpop.f32.mrf.mxu0
    %v2743 = vadd.f32 %v2614, %v2742
    %v2744 = vpop.f32.mrf.mxu0
    %v2745 = vadd.f32 %v2616, %v2744
    %2746 = vmatmul.bf16.gmra.mxu0 %v2240
    %v2747 = vpop.f32.mrf.mxu0
    %v2748 = vadd.f32 %v2619, %v2747
    %v2749 = vpop.f32.mrf.mxu0
    %v2750 = vadd.f32 %v2621, %v2749
    %2751 = vmatmul.bf16.gmra.mxu0 %v2243
    %v2752 = vpop.f32.mrf.mxu0
    %v2753 = vadd.f32 %v2624, %v2752
    %v2754 = vpop.f32.mrf.mxu0
    %v2755 = vadd.f32 %v2626, %v2754
    %2756 = vmatmul.bf16.gmra.mxu0 %v2246
    %v2757 = vpop.f32.mrf.mxu0
    %v2758 = vadd.f32 %v2629, %v2757
    %v2759 = vpop.f32.mrf.mxu0
    %v2760 = vadd.f32 %v2631, %v2759
    %2761 = vmatmul.bf16.gmra.mxu0 %v2249
    %v2762 = vpop.f32.mrf.mxu0
    %v2763 = vadd.f32 %v2634, %v2762
    %v2764 = vpop.f32.mrf.mxu0
    %v2765 = vadd.f32 %v2636, %v2764
    %2766 = vdwg.mxu0
    %v2767 = vmax.f32 %v2390, 0.0
    %v2768 = vmax.f32 %v2648, 0.0
    %v2769 = vmax.f32 %v2392, 0.0
    %v2770 = vmax.f32 %v2650, 0.0
    %v2771 = vmax.f32 %v2395, 0.0
    %v2772 = vmax.f32 %v2653, 0.0
    %v2773 = vmax.f32 %v2397, 0.0
    %v2774 = vmax.f32 %v2655, 0.0
    %v2775 = vmax.f32 %v2400, 0.0
    %v2776 = vmax.f32 %v2658, 0.0
    %v2777 = vmax.f32 %v2402, 0.0
    %v2778 = vmax.f32 %v2660, 0.0
    %v2779 = vmax.f32 %v2405, 0.0
    %v2780 = vmax.f32 %v2663, 0.0
    %v2781 = vmax.f32 %v2407, 0.0
    %v2782 = vmax.f32 %v2665, 0.0
    %v2783 = vmax.f32 %v2410, 0.0
    %v2784 = vmax.f32 %v2668, 0.0
    %v2785 = vmax.f32 %v2412, 0.0
    %v2786 = vmax.f32 %v2670, 0.0
    %v2787 = vmax.f32 %v2415, 0.0
    %v2788 = vmax.f32 %v2673, 0.0
    %v2789 = vmax.f32 %v2417, 0.0
    %v2790 = vmax.f32 %v2675, 0.0
    %v2791 = vmax.f32 %v2420, 0.0
    %v2792 = vmax.f32 %v2678, 0.0
    %v2793 = vmax.f32 %v2422, 0.0
    %v2794 = vmax.f32 %v2680, 0.0
    %v2795 = vmax.f32 %v2425, 0.0
    %v2796 = vmax.f32 %v2683, 0.0
    %v2797 = vmax.f32 %v2427, 0.0
    %v2798 = vmax.f32 %v2685, 0.0
    %v2799 = vmax.f32 %v2430, 0.0
    %v2800 = vmax.f32 %v2688, 0.0
    %v2801 = vmax.f32 %v2432, 0.0
    %v2802 = vmax.f32 %v2690, 0.0
    %v2803 = vmax.f32 %v2435, 0.0
    %v2804 = vmax.f32 %v2693, 0.0
    %v2805 = vmax.f32 %v2437, 0.0
    %v2806 = vmax.f32 %v2695, 0.0
    %v2807 = vmax.f32 %v2440, 0.0
    %v2808 = vmax.f32 %v2698, 0.0
    %v2809 = vmax.f32 %v2442, 0.0
    %v2810 = vmax.f32 %v2700, 0.0
    %v2811 = vmax.f32 %v2445, 0.0
    %v2812 = vmax.f32 %v2703, 0.0
    %v2813 = vmax.f32 %v2447, 0.0
    %v2814 = vmax.f32 %v2705, 0.0
    %v2815 = vmax.f32 %v2450, 0.0
    %v2816 = vmax.f32 %v2708, 0.0
    %v2817 = vmax.f32 %v2452, 0.0
    %v2818 = vmax.f32 %v2710, 0.0
    %v2819 = vmax.f32 %v2455, 0.0
    %v2820 = vmax.f32 %v2713, 0.0
    %v2821 = vmax.f32 %v2457, 0.0
    %v2822 = vmax.f32 %v2715, 0.0
    %v2823 = vmax.f32 %v2460, 0.0
    %v2824 = vmax.f32 %v2718, 0.0
    %v2825 = vmax.f32 %v2462, 0.0
    %v2826 = vmax.f32 %v2720, 0.0
    %v2827 = vmax.f32 %v2465, 0.0
    %v2828 = vmax.f32 %v2723, 0.0
    %v2829 = vmax.f32 %v2467, 0.0
    %v2830 = vmax.f32 %v2725, 0.0
    %v2831 = vmax.f32 %v2470, 0.0
    %v2832 = vmax.f32 %v2728, 0.0
    %v2833 = vmax.f32 %v2472, 0.0
    %v2834 = vmax.f32 %v2730, 0.0
    %v2835 = vmax.f32 %v2475, 0.0
    %v2836 = vmax.f32 %v2733, 0.0
    %v2837 = vmax.f32 %v2477, 0.0
    %v2838 = vmax.f32 %v2735, 0.0
    %v2839 = vmax.f32 %v2480, 0.0
    %v2840 = vmax.f32 %v2738, 0.0
    %v2841 = vmax.f32 %v2482, 0.0
    %v2842 = vmax.f32 %v2740, 0.0
    %v2843 = vmax.f32 %v2485, 0.0
    %v2844 = vmax.f32 %v2743, 0.0
    %v2845 = vmax.f32 %v2487, 0.0
    %v2846 = vmax.f32 %v2745, 0.0
    %v2847 = vmax.f32 %v2490, 0.0
    %v2848 = vmax.f32 %v2748, 0.0
    %v2849 = vmax.f32 %v2492, 0.0
    %v2850 = vmax.f32 %v2750, 0.0
    %v2851 = vmax.f32 %v2495, 0.0
    %v2852 = vmax.f32 %v2753, 0.0
    %v2853 = vmax.f32 %v2497, 0.0
    %v2854 = vmax.f32 %v2755, 0.0
    %v2855 = vmax.f32 %v2500, 0.0
    %v2856 = vmax.f32 %v2758, 0.0
    %v2857 = vmax.f32 %v2502, 0.0
    %v2858 = vmax.f32 %v2760, 0.0
    %v2859 = vmax.f32 %v2505, 0.0
    %v2860 = vmax.f32 %v2763, 0.0
    %v2861 = vmax.f32 %v2507, 0.0
    %v2862 = vmax.f32 %v2765, 0.0
    %v2863 = vpack.c.bf16 %v2769, %v2767
    %v2864 = vpack.c.bf16 %v2770, %v2768
    %v2865 = vpack.c.bf16 %v2773, %v2771
    %v2866 = vpack.c.bf16 %v2774, %v2772
    %v2867 = vpack.c.bf16 %v2777, %v2775
    %v2868 = vpack.c.bf16 %v2778, %v2776
    %v2869 = vpack.c.bf16 %v2781, %v2779
    %v2870 = vpack.c.bf16 %v2782, %v2780
    %v2871 = vpack.c.bf16 %v2785, %v2783
    %v2872 = vpack.c.bf16 %v2786, %v2784
    %v2873 = vpack.c.bf16 %v2789, %v2787
    %v2874 = vpack.c.bf16 %v2790, %v2788
    %v2875 = vpack.c.bf16 %v2793, %v2791
    %v2876 = vpack.c.bf16 %v2794, %v2792
    %v2877 = vpack.c.bf16 %v2797, %v2795
    %v2878 = vpack.c.bf16 %v2798, %v2796
    %v2879 = vpack.c.bf16 %v2801, %v2799
    %v2880 = vpack.c.bf16 %v2802, %v2800
    %v2881 = vpack.c.bf16 %v2805, %v2803
    %v2882 = vpack.c.bf16 %v2806, %v2804
    %v2883 = vpack.c.bf16 %v2809, %v2807
    %v2884 = vpack.c.bf16 %v2810, %v2808
    %v2885 = vpack.c.bf16 %v2813, %v2811
    %v2886 = vpack.c.bf16 %v2814, %v2812
    %v2887 = vpack.c.bf16 %v2817, %v2815
    %v2888 = vpack.c.bf16 %v2818, %v2816
    %v2889 = vpack.c.bf16 %v2821, %v2819
    %v2890 = vpack.c.bf16 %v2822, %v2820
    %v2891 = vpack.c.bf16 %v2825, %v2823
    %v2892 = vpack.c.bf16 %v2826, %v2824
    %v2893 = vpack.c.bf16 %v2829, %v2827
    %v2894 = vpack.c.bf16 %v2830, %v2828
    %v2895 = vpack.c.bf16 %v2833, %v2831
    %v2896 = vpack.c.bf16 %v2834, %v2832
    %v2897 = vpack.c.bf16 %v2837, %v2835
    %v2898 = vpack.c.bf16 %v2838, %v2836
    %v2899 = vpack.c.bf16 %v2841, %v2839
    %v2900 = vpack.c.bf16 %v2842, %v2840
    %v2901 = vpack.c.bf16 %v2845, %v2843
    %v2902 = vpack.c.bf16 %v2846, %v2844
    %v2903 = vpack.c.bf16 %v2849, %v2847
    %v2904 = vpack.c.bf16 %v2850, %v2848
    %v2905 = vpack.c.bf16 %v2853, %v2851
    %v2906 = vpack.c.bf16 %v2854, %v2852
    %v2907 = vpack.c.bf16 %v2857, %v2855
    %v2908 = vpack.c.bf16 %v2858, %v2856
    %v2909 = vpack.c.bf16 %v2861, %v2859
    %v2910 = vpack.c.bf16 %v2862, %v2860
    %v2911 = vld [vmem:[%s10] sm:$0xf]
    %v2912 = vld [vmem:[%s10 + $0x4] sm:$0xf]
    %v2913 = vld [vmem:[%s10 + $0x8] sm:$0xf]
    %v2914 = vld [vmem:[%s10 + $0xc] sm:$0xf]
    %v2915 = vld [vmem:[%s10 + $0x10] sm:$0xf]
    %v2916 = vld [vmem:[%s10 + $0x14] sm:$0xf]
    %v2917 = vld [vmem:[%s10 + $0x18] sm:$0xf]
    %v2918 = vld [vmem:[%s10 + $0x1c] sm:$0xf]
    %v2919 = vld [vmem:[%s10 + $0x20] sm:$0xf]
    %v2920 = vld [vmem:[%s10 + $0x24] sm:$0xf]
    %v2921 = vld [vmem:[%s10 + $0x28] sm:$0xf]
    %v2922 = vld [vmem:[%s10 + $0x2c] sm:$0xf]
    %v2923 = vld [vmem:[%s10 + $0x30] sm:$0xf]
    %v2924 = vld [vmem:[%s10 + $0x34] sm:$0xf]
    %v2925 = vld [vmem:[%s10 + $0x38] sm:$0xf]
    %v2926 = vld [vmem:[%s10 + $0x3c] sm:$0xf]
    %v2927 = vld [vmem:[%s10 + $0x40] sm:$0xf]
    %v2928 = vld [vmem:[%s10 + $0x44] sm:$0xf]
    %v2929 = vld [vmem:[%s10 + $0x48] sm:$0xf]
    %v2930 = vld [vmem:[%s10 + $0x4c] sm:$0xf]
    %v2931 = vld [vmem:[%s11] sm:$0x1]
    %v2933 = vperm.slane %v2931, 0
    %v2955 = vunpack.c.l.b16 %v2911
    %v2956 = vunpack.c.l.b16 %v2912
    %v2957 = vunpack.c.l.b16 %v2913
    %v2958 = vunpack.c.l.b16 %v2914
    %v2959 = vunpack.c.l.b16 %v2915
    %v2960 = vunpack.c.l.b16 %v2916
    %v2961 = vunpack.c.l.b16 %v2917
    %v2962 = vunpack.c.l.b16 %v2918
    %v2963 = vunpack.c.l.b16 %v2919
    %v2964 = vunpack.c.l.b16 %v2920
    %v2965 = vunpack.c.l.b16 %v2921
    %v2966 = vunpack.c.l.b16 %v2922
    %v2967 = vunpack.c.l.b16 %v2923
    %v2968 = vunpack.c.l.b16 %v2924
    %v2969 = vunpack.c.l.b16 %v2925
    %v2970 = vunpack.c.l.b16 %v2926
    %v2971 = vunpack.c.l.b16 %v2927
    %v2972 = vunpack.c.l.b16 %v2928
    %v2973 = vunpack.c.l.b16 %v2929
    %v2974 = vunpack.c.l.b16 %v2930
    %v2975 = vpack.c.b16 %v2956, %v2955
    %v2976 = vpack.c.b16 %v2958, %v2957
    %v2977 = vpack.c.b16 %v2960, %v2959
    %v2978 = vpack.c.b16 %v2962, %v2961
    %v2979 = vpack.c.b16 %v2964, %v2963
    %v2980 = vpack.c.b16 %v2966, %v2965
    %v2981 = vpack.c.b16 %v2968, %v2967
    %v2982 = vpack.c.b16 %v2970, %v2969
    %v2983 = vpack.c.b16 %v2972, %v2971
    %v2984 = vpack.c.b16 %v2974, %v2973
    %v2996 = vsel %vm145, %v2864, 0
    %v2999 = vsel %vm145, %v2866, 0
    %v3002 = vsel %vm145, %v2868, 0
    %v3005 = vsel %vm145, %v2870, 0
    %v3008 = vsel %vm145, %v2872, 0
    %v3011 = vsel %vm145, %v2874, 0
    %v3014 = vsel %vm145, %v2876, 0
    %v3017 = vsel %vm145, %v2878, 0
    %v3020 = vsel %vm145, %v2880, 0
    %v3023 = vsel %vm145, %v2882, 0
    %v3026 = vsel %vm145, %v2884, 0
    %v3029 = vsel %vm145, %v2886, 0
    %v3032 = vsel %vm145, %v2888, 0
    %v3035 = vsel %vm145, %v2890, 0
    %v3038 = vsel %vm145, %v2892, 0
    %v3041 = vsel %vm145, %v2894, 0
    %v3044 = vsel %vm145, %v2896, 0
    %v3047 = vsel %vm145, %v2898, 0
    %v3050 = vsel %vm145, %v2900, 0
    %v3053 = vsel %vm145, %v2902, 0
    %v3056 = vsel %vm145, %v2904, 0
    %v3059 = vsel %vm145, %v2906, 0
    %v3062 = vsel %vm145, %v2908, 0
    %v3065 = vsel %vm145, %v2910, 0
    %3067 = vmatpush.bf16.msra.mxu0 %v2982
    %3068 = vmatpush.bf16.msra.mxu0 %v2981
    %3069 = vmatpush.bf16.msra.mxu0 %v2980
    %3070 = vmatpush.bf16.msra.mxu0 %v2979
    %3071 = vmatpush.bf16.msra.mxu0 %v2978
    %3072 = vmatpush.bf16.msra.mxu0 %v2977
    %3073 = vmatpush.bf16.msra.mxu0 %v2976
    %3074 = vmatpush.bf16.msra.mxu0 %v2975
    %3075 = vmatmul.bf16.gmra.mxu0 %v2863
    %v3076 = vpop.f32.mrf.mxu0
    %v3077 = vadd.f32 %v2933, %v3076
    %v3078 = vpop.f32.mrf.mxu0
    %v3079 = vadd.f32 %v2933, %v3078
    %3080 = vmatmul.bf16.gmra.mxu0 %v2865
    %v3081 = vpop.f32.mrf.mxu0
    %v3082 = vadd.f32 %v2933, %v3081
    %v3083 = vpop.f32.mrf.mxu0
    %v3084 = vadd.f32 %v2933, %v3083
    %3085 = vmatmul.bf16.gmra.mxu0 %v2867
    %v3086 = vpop.f32.mrf.mxu0
    %v3087 = vadd.f32 %v2933, %v3086
    %v3088 = vpop.f32.mrf.mxu0
    %v3089 = vadd.f32 %v2933, %v3088
    %3090 = vmatmul.bf16.gmra.mxu0 %v2869
    %v3091 = vpop.f32.mrf.mxu0
    %v3092 = vadd.f32 %v2933, %v3091
    %v3093 = vpop.f32.mrf.mxu0
    %v3094 = vadd.f32 %v2933, %v3093
    %3095 = vmatmul.bf16.gmra.mxu0 %v2871
    %v3096 = vpop.f32.mrf.mxu0
    %v3097 = vadd.f32 %v2933, %v3096
    %v3098 = vpop.f32.mrf.mxu0
    %v3099 = vadd.f32 %v2933, %v3098
    %3100 = vmatmul.bf16.gmra.mxu0 %v2873
    %v3101 = vpop.f32.mrf.mxu0
    %v3102 = vadd.f32 %v2933, %v3101
    %v3103 = vpop.f32.mrf.mxu0
    %v3104 = vadd.f32 %v2933, %v3103
    %3105 = vmatmul.bf16.gmra.mxu0 %v2875
    %v3106 = vpop.f32.mrf.mxu0
    %v3107 = vadd.f32 %v2933, %v3106
    %v3108 = vpop.f32.mrf.mxu0
    %v3109 = vadd.f32 %v2933, %v3108
    %3110 = vmatmul.bf16.gmra.mxu0 %v2877
    %v3111 = vpop.f32.mrf.mxu0
    %v3112 = vadd.f32 %v2933, %v3111
    %v3113 = vpop.f32.mrf.mxu0
    %v3114 = vadd.f32 %v2933, %v3113
    %3115 = vmatmul.bf16.gmra.mxu0 %v2879
    %v3116 = vpop.f32.mrf.mxu0
    %v3117 = vadd.f32 %v2933, %v3116
    %v3118 = vpop.f32.mrf.mxu0
    %v3119 = vadd.f32 %v2933, %v3118
    %3120 = vmatmul.bf16.gmra.mxu0 %v2881
    %v3121 = vpop.f32.mrf.mxu0
    %v3122 = vadd.f32 %v2933, %v3121
    %v3123 = vpop.f32.mrf.mxu0
    %v3124 = vadd.f32 %v2933, %v3123
    %3125 = vmatmul.bf16.gmra.mxu0 %v2883
    %v3126 = vpop.f32.mrf.mxu0
    %v3127 = vadd.f32 %v2933, %v3126
    %v3128 = vpop.f32.mrf.mxu0
    %v3129 = vadd.f32 %v2933, %v3128
    %3130 = vmatmul.bf16.gmra.mxu0 %v2885
    %v3131 = vpop.f32.mrf.mxu0
    %v3132 = vadd.f32 %v2933, %v3131
    %v3133 = vpop.f32.mrf.mxu0
    %v3134 = vadd.f32 %v2933, %v3133
    %3135 = vmatmul.bf16.gmra.mxu0 %v2887
    %v3136 = vpop.f32.mrf.mxu0
    %v3137 = vadd.f32 %v2933, %v3136
    %v3138 = vpop.f32.mrf.mxu0
    %v3139 = vadd.f32 %v2933, %v3138
    %3140 = vmatmul.bf16.gmra.mxu0 %v2889
    %v3141 = vpop.f32.mrf.mxu0
    %v3142 = vadd.f32 %v2933, %v3141
    %v3143 = vpop.f32.mrf.mxu0
    %v3144 = vadd.f32 %v2933, %v3143
    %3145 = vmatmul.bf16.gmra.mxu0 %v2891
    %v3146 = vpop.f32.mrf.mxu0
    %v3147 = vadd.f32 %v2933, %v3146
    %v3148 = vpop.f32.mrf.mxu0
    %v3149 = vadd.f32 %v2933, %v3148
    %3150 = vmatmul.bf16.gmra.mxu0 %v2893
    %v3151 = vpop.f32.mrf.mxu0
    %v3152 = vadd.f32 %v2933, %v3151
    %v3153 = vpop.f32.mrf.mxu0
    %v3154 = vadd.f32 %v2933, %v3153
    %3155 = vmatmul.bf16.gmra.mxu0 %v2895
    %v3156 = vpop.f32.mrf.mxu0
    %v3157 = vadd.f32 %v2933, %v3156
    %v3158 = vpop.f32.mrf.mxu0
    %v3159 = vadd.f32 %v2933, %v3158
    %3160 = vmatmul.bf16.gmra.mxu0 %v2897
    %v3161 = vpop.f32.mrf.mxu0
    %v3162 = vadd.f32 %v2933, %v3161
    %v3163 = vpop.f32.mrf.mxu0
    %v3164 = vadd.f32 %v2933, %v3163
    %3165 = vmatmul.bf16.gmra.mxu0 %v2899
    %v3166 = vpop.f32.mrf.mxu0
    %v3167 = vadd.f32 %v2933, %v3166
    %v3168 = vpop.f32.mrf.mxu0
    %v3169 = vadd.f32 %v2933, %v3168
    %3170 = vmatmul.bf16.gmra.mxu0 %v2901
    %v3171 = vpop.f32.mrf.mxu0
    %v3172 = vadd.f32 %v2933, %v3171
    %v3173 = vpop.f32.mrf.mxu0
    %v3174 = vadd.f32 %v2933, %v3173
    %3175 = vmatmul.bf16.gmra.mxu0 %v2903
    %v3176 = vpop.f32.mrf.mxu0
    %v3177 = vadd.f32 %v2933, %v3176
    %v3178 = vpop.f32.mrf.mxu0
    %v3179 = vadd.f32 %v2933, %v3178
    %3180 = vmatmul.bf16.gmra.mxu0 %v2905
    %v3181 = vpop.f32.mrf.mxu0
    %v3182 = vadd.f32 %v2933, %v3181
    %v3183 = vpop.f32.mrf.mxu0
    %v3184 = vadd.f32 %v2933, %v3183
    %3185 = vmatmul.bf16.gmra.mxu0 %v2907
    %v3186 = vpop.f32.mrf.mxu0
    %v3187 = vadd.f32 %v2933, %v3186
    %v3188 = vpop.f32.mrf.mxu0
    %v3189 = vadd.f32 %v2933, %v3188
    %3190 = vmatmul.bf16.gmra.mxu0 %v2909
    %v3191 = vpop.f32.mrf.mxu0
    %v3192 = vadd.f32 %v2933, %v3191
    %v3193 = vpop.f32.mrf.mxu0
    %v3194 = vadd.f32 %v2933, %v3193
    %3195 = vdwg.mxu0
    %3196 = vmatpush.bf16.msra.mxu0 0
    %3197 = vmatpush.bf16.msra.mxu0 0
    %3198 = vmatpush.bf16.msra.mxu0 0
    %3199 = vmatpush.bf16.msra.mxu0 0
    %3200 = vmatpush.bf16.msra.mxu0 0
    %3201 = vmatpush.bf16.msra.mxu0 0
    %3202 = vmatpush.bf16.msra.mxu0 %v2984
    %3203 = vmatpush.bf16.msra.mxu0 %v2983
    %3204 = vmatmul.bf16.gmra.mxu0 %v2996
    %v3205 = vpop.f32.mrf.mxu0
    %v3206 = vadd.f32 %v3077, %v3205
    %v3207 = vpop.f32.mrf.mxu0
    %v3208 = vadd.f32 %v3079, %v3207
    %3209 = vmatmul.bf16.gmra.mxu0 %v2999
    %v3210 = vpop.f32.mrf.mxu0
    %v3211 = vadd.f32 %v3082, %v3210
    %v3212 = vpop.f32.mrf.mxu0
    %v3213 = vadd.f32 %v3084, %v3212
    %3214 = vmatmul.bf16.gmra.mxu0 %v3002
    %v3215 = vpop.f32.mrf.mxu0
    %v3216 = vadd.f32 %v3087, %v3215
    %v3217 = vpop.f32.mrf.mxu0
    %v3218 = vadd.f32 %v3089, %v3217
    %3219 = vmatmul.bf16.gmra.mxu0 %v3005
    %v3220 = vpop.f32.mrf.mxu0
    %v3221 = vadd.f32 %v3092, %v3220
    %v3222 = vpop.f32.mrf.mxu0
    %v3223 = vadd.f32 %v3094, %v3222
    %3224 = vmatmul.bf16.gmra.mxu0 %v3008
    %v3225 = vpop.f32.mrf.mxu0
    %v3226 = vadd.f32 %v3097, %v3225
    %v3227 = vpop.f32.mrf.mxu0
    %v3228 = vadd.f32 %v3099, %v3227
    %3229 = vmatmul.bf16.gmra.mxu0 %v3011
    %v3230 = vpop.f32.mrf.mxu0
    %v3231 = vadd.f32 %v3102, %v3230
    %v3232 = vpop.f32.mrf.mxu0
    %v3233 = vadd.f32 %v3104, %v3232
    %3234 = vmatmul.bf16.gmra.mxu0 %v3014
    %v3235 = vpop.f32.mrf.mxu0
    %v3236 = vadd.f32 %v3107, %v3235
    %v3237 = vpop.f32.mrf.mxu0
    %v3238 = vadd.f32 %v3109, %v3237
    %3239 = vmatmul.bf16.gmra.mxu0 %v3017
    %v3240 = vpop.f32.mrf.mxu0
    %v3241 = vadd.f32 %v3112, %v3240
    %v3242 = vpop.f32.mrf.mxu0
    %v3243 = vadd.f32 %v3114, %v3242
    %3244 = vmatmul.bf16.gmra.mxu0 %v3020
    %v3245 = vpop.f32.mrf.mxu0
    %v3246 = vadd.f32 %v3117, %v3245
    %v3247 = vpop.f32.mrf.mxu0
    %v3248 = vadd.f32 %v3119, %v3247
    %3249 = vmatmul.bf16.gmra.mxu0 %v3023
    %v3250 = vpop.f32.mrf.mxu0
    %v3251 = vadd.f32 %v3122, %v3250
    %v3252 = vpop.f32.mrf.mxu0
    %v3253 = vadd.f32 %v3124, %v3252
    %3254 = vmatmul.bf16.gmra.mxu0 %v3026
    %v3255 = vpop.f32.mrf.mxu0
    %v3256 = vadd.f32 %v3127, %v3255
    %v3257 = vpop.f32.mrf.mxu0
    %v3258 = vadd.f32 %v3129, %v3257
    %3259 = vmatmul.bf16.gmra.mxu0 %v3029
    %v3260 = vpop.f32.mrf.mxu0
    %v3261 = vadd.f32 %v3132, %v3260
    %v3262 = vpop.f32.mrf.mxu0
    %v3263 = vadd.f32 %v3134, %v3262
    %3264 = vmatmul.bf16.gmra.mxu0 %v3032
    %v3265 = vpop.f32.mrf.mxu0
    %v3266 = vadd.f32 %v3137, %v3265
    %v3267 = vpop.f32.mrf.mxu0
    %v3268 = vadd.f32 %v3139, %v3267
    %3269 = vmatmul.bf16.gmra.mxu0 %v3035
    %v3270 = vpop.f32.mrf.mxu0
    %v3271 = vadd.f32 %v3142, %v3270
    %v3272 = vpop.f32.mrf.mxu0
    %v3273 = vadd.f32 %v3144, %v3272
    %3274 = vmatmul.bf16.gmra.mxu0 %v3038
    %v3275 = vpop.f32.mrf.mxu0
    %v3276 = vadd.f32 %v3147, %v3275
    %v3277 = vpop.f32.mrf.mxu0
    %v3278 = vadd.f32 %v3149, %v3277
    %3279 = vmatmul.bf16.gmra.mxu0 %v3041
    %v3280 = vpop.f32.mrf.mxu0
    %v3281 = vadd.f32 %v3152, %v3280
    %v3282 = vpop.f32.mrf.mxu0
    %v3283 = vadd.f32 %v3154, %v3282
    %3284 = vmatmul.bf16.gmra.mxu0 %v3044
    %v3285 = vpop.f32.mrf.mxu0
    %v3286 = vadd.f32 %v3157, %v3285
    %v3287 = vpop.f32.mrf.mxu0
    %v3288 = vadd.f32 %v3159, %v3287
    %3289 = vmatmul.bf16.gmra.mxu0 %v3047
    %v3290 = vpop.f32.mrf.mxu0
    %v3291 = vadd.f32 %v3162, %v3290
    %v3292 = vpop.f32.mrf.mxu0
    %v3293 = vadd.f32 %v3164, %v3292
    %3294 = vmatmul.bf16.gmra.mxu0 %v3050
    %v3295 = vpop.f32.mrf.mxu0
    %v3296 = vadd.f32 %v3167, %v3295
    %v3297 = vpop.f32.mrf.mxu0
    %v3298 = vadd.f32 %v3169, %v3297
    %3299 = vmatmul.bf16.gmra.mxu0 %v3053
    %v3300 = vpop.f32.mrf.mxu0
    %v3301 = vadd.f32 %v3172, %v3300
    %v3302 = vpop.f32.mrf.mxu0
    %v3303 = vadd.f32 %v3174, %v3302
    %3304 = vmatmul.bf16.gmra.mxu0 %v3056
    %v3305 = vpop.f32.mrf.mxu0
    %v3306 = vadd.f32 %v3177, %v3305
    %v3307 = vpop.f32.mrf.mxu0
    %v3308 = vadd.f32 %v3179, %v3307
    %3309 = vmatmul.bf16.gmra.mxu0 %v3059
    %v3310 = vpop.f32.mrf.mxu0
    %v3311 = vadd.f32 %v3182, %v3310
    %v3312 = vpop.f32.mrf.mxu0
    %v3313 = vadd.f32 %v3184, %v3312
    %3314 = vmatmul.bf16.gmra.mxu0 %v3062
    %v3315 = vpop.f32.mrf.mxu0
    %v3316 = vadd.f32 %v3187, %v3315
    %v3317 = vpop.f32.mrf.mxu0
    %v3318 = vadd.f32 %v3189, %v3317
    %3319 = vmatmul.bf16.gmra.mxu0 %v3065
    %v3320 = vpop.f32.mrf.mxu0
    %v3321 = vadd.f32 %v3192, %v3320
    %v3322 = vpop.f32.mrf.mxu0
    %v3323 = vadd.f32 %v3194, %v3322
    %3324 = vdwg.mxu0
    %3325 = vst [vmem:[#allocation2] sm:$0xff] %v3206
    %3326 = vst [vmem:[#allocation2 + $0x8] sm:$0xff] %v3208
    %3327 = vst [vmem:[#allocation2 + $0x10] sm:$0xff] %v3211
    %3328 = vst [vmem:[#allocation2 + $0x18] sm:$0xff] %v3213
    %3329 = vst [vmem:[#allocation2 + $0x20] sm:$0xff] %v3216
    %3330 = vst [vmem:[#allocation2 + $0x28] sm:$0xff] %v3218
    %3331 = vst [vmem:[#allocation2 + $0x30] sm:$0xff] %v3221
    %3332 = vst [vmem:[#allocation2 + $0x38] sm:$0xff] %v3223
    %3333 = vst [vmem:[#allocation2 + $0x40] sm:$0xff] %v3226
    %3334 = vst [vmem:[#allocation2 + $0x48] sm:$0xff] %v3228
    %3335 = vst [vmem:[#allocation2 + $0x50] sm:$0xff] %v3231
    %3336 = vst [vmem:[#allocation2 + $0x58] sm:$0xff] %v3233
    %3337 = vst [vmem:[#allocation2 + $0x60] sm:$0xff] %v3236
    %3338 = vst [vmem:[#allocation2 + $0x68] sm:$0xff] %v3238
    %3339 = vst [vmem:[#allocation2 + $0x70] sm:$0xff] %v3241
    %3340 = vst [vmem:[#allocation2 + $0x78] sm:$0xff] %v3243
    %3341 = vst [vmem:[#allocation2 + $0x80] sm:$0xff] %v3246
    %3342 = vst [vmem:[#allocation2 + $0x88] sm:$0xff] %v3248
    %3343 = vst [vmem:[#allocation2 + $0x90] sm:$0xff] %v3251
    %3344 = vst [vmem:[#allocation2 + $0x98] sm:$0xff] %v3253
    %3345 = vst [vmem:[#allocation2 + $0xa0] sm:$0xff] %v3256
    %3346 = vst [vmem:[#allocation2 + $0xa8] sm:$0xff] %v3258
    %3347 = vst [vmem:[#allocation2 + $0xb0] sm:$0xff] %v3261
    %3348 = vst [vmem:[#allocation2 + $0xb8] sm:$0xff] %v3263
    %3349 = vst [vmem:[#allocation2 + $0xc0] sm:$0xff] %v3266
    %3350 = vst [vmem:[#allocation2 + $0xc8] sm:$0xff] %v3268
    %3351 = vst [vmem:[#allocation2 + $0xd0] sm:$0xff] %v3271
    %3352 = vst [vmem:[#allocation2 + $0xd8] sm:$0xff] %v3273
    %3353 = vst [vmem:[#allocation2 + $0xe0] sm:$0xff] %v3276
    %3354 = vst [vmem:[#allocation2 + $0xe8] sm:$0xff] %v3278
    %3355 = vst [vmem:[#allocation2 + $0xf0] sm:$0xff] %v3281
    %3356 = vst [vmem:[#allocation2 + $0xf8] sm:$0xff] %v3283
    %3357 = vst [vmem:[#allocation2 + $0x100] sm:$0xff] %v3286
    %3358 = vst [vmem:[#allocation2 + $0x108] sm:$0xff] %v3288
    %3359 = vst [vmem:[#allocation2 + $0x110] sm:$0xff] %v3291
    %3360 = vst [vmem:[#allocation2 + $0x118] sm:$0xff] %v3293
    %3361 = vst [vmem:[#allocation2 + $0x120] sm:$0xff] %v3296
    %3362 = vst [vmem:[#allocation2 + $0x128] sm:$0xff] %v3298
    %3363 = vst [vmem:[#allocation2 + $0x130] sm:$0xff] %v3301
    %3364 = vst [vmem:[#allocation2 + $0x138] sm:$0xff] %v3303
    %3365 = vst [vmem:[#allocation2 + $0x140] sm:$0xff] %v3306
    %3366 = vst [vmem:[#allocation2 + $0x148] sm:$0xff] %v3308
    %3367 = vst [vmem:[#allocation2 + $0x150] sm:$0xff] %v3311
    %3368 = vst [vmem:[#allocation2 + $0x158] sm:$0xff] %v3313
    %3369 = vst [vmem:[#allocation2 + $0x160] sm:$0xff] %v3316
    %3370 = vst [vmem:[#allocation2 + $0x168] sm:$0xff] %v3318
    %3371 = vst [vmem:[#allocation2 + $0x170] sm:$0xff] %v3321
    %3372 = vst [vmem:[#allocation2 + $0x178] sm:$0xff] %v3323
    // Predicated region
    $region50: #{tpu_custom_call.1} parent=1 // pred_check
      _
    $region51: #{tpu_custom_call.1} parent=1 // pred_check_branch
      %3374 = sbr.rel (0) target = $region53
    $region52: #{tpu_custom_call.1} parent=1 // pred_region
      %3376 = vsyncadd [#allocation3], 0
      %s3377 = sshll.u32 [#allocation2], 4
      %s3378 = int_to_ptr.vmem [resolvable:$true] %s3377
      %s3379 = sshll.u32 %s12, 4
      %s3380 = int_to_ptr.hbm [resolvable:$true] %s3379
      %3385 = dma.vmem_to_hbm [thread:$0]  %s3378, 6144, %s3380, [#allocation3], 128, 128, 8
    $region53: #{tpu_custom_call.1} parent=1 // pred_fallthru
      _
    // Predicated region
    $region54: #{tpu_custom_call.1} parent=1 // pred_check
      _
    $region55: #{tpu_custom_call.1} parent=1 // pred_check_branch
      %3387 = sbr.rel (0) target = $region57
    $region56: #{tpu_custom_call.1} parent=1 // pred_region
      %3389 = dma.done [#allocation3], 6144
    $region57: #{tpu_custom_call.1} parent=1 // pred_fallthru
      _
    %3390 = vsyncpa [#allocation3], 1

</llo_original>
